<compile_context>
chip_gen: v7x
topology: tpu7x:2x2x1
jax: 0.10.0
libtpu: 0.0.40
codegen_flags: <defaults>
</compile_context>

<pallas_src>
import functools

import jax
import jax.numpy as jnp
from jax import lax
from jax.experimental import pallas as pl
from jax.experimental.pallas import tpu as pltpu

BN_EPS = 1e-5
LANE = 128          # channel padding / N-tile (lane-dense outputs)
TK = 128            # K tile
TM_MAX = 512        # max M tile (rows)
VMEM_LIMIT = 32 * 1024 * 1024


def _round_up(x, m):
    return (x + m - 1) // m * m


# ------------------------- Phase 1: matmul + stats -------------------------

def _matmul_stats_kernel(x_ref, w_ref, y_ref, sum_ref, sq_ref, acc_ref):
    # grid = (j: Cout tiles, i: M tiles, k: K tiles), k innermost.
    i = pl.program_id(1)
    k = pl.program_id(2)
    nk = pl.num_programs(2)

    @pl.when(k == 0)
    def _():
        acc_ref[...] = jnp.zeros_like(acc_ref)

    @pl.when(jnp.logical_and(i == 0, k == 0))
    def _():
        sum_ref[...] = jnp.zeros_like(sum_ref)
        sq_ref[...] = jnp.zeros_like(sq_ref)

    acc_ref[...] += jnp.dot(x_ref[...], w_ref[...],
                            preferred_element_type=jnp.float32)

    @pl.when(k == nk - 1)
    def _():
        y = acc_ref[...]
        y_ref[...] = y
        # Per-tile partial column sums; accumulated across the M grid axis
        # into the resident (1, tn) output blocks.
        sum_ref[...] += jnp.sum(y, axis=0, keepdims=True)
        sq_ref[...] += jnp.sum(y * y, axis=0, keepdims=True)


def matmul_with_stats(x, w, *, tm, tn=LANE, tk=TK):
    """x: (M, K) bf16, w: (K, N) bf16 -> (y f32 (M,N), col_sum (1,N), col_sq (1,N))."""
    M, K = x.shape
    Kw, N = w.shape
    assert K == Kw and M % tm == 0 and N % tn == 0 and K % tk == 0
    grid = (N // tn, M // tm, K // tk)
    return pl.pallas_call(
        _matmul_stats_kernel,
        out_shape=(jax.ShapeDtypeStruct((M, N), jnp.float32),
                   jax.ShapeDtypeStruct((1, N), jnp.float32),
                   jax.ShapeDtypeStruct((1, N), jnp.float32)),
        grid_spec=pltpu.PrefetchScalarGridSpec(
            num_scalar_prefetch=0,
            grid=grid,
            in_specs=[pl.BlockSpec((tm, tk), lambda j, i, k: (i, k)),
                      pl.BlockSpec((tk, tn), lambda j, i, k: (k, j))],
            out_specs=[pl.BlockSpec((tm, tn), lambda j, i, k: (i, j)),
                       pl.BlockSpec((1, tn), lambda j, i, k: (0, j)),
                       pl.BlockSpec((1, tn), lambda j, i, k: (0, j))],
            scratch_shapes=[pltpu.VMEM((tm, tn), jnp.float32)]),
        compiler_params=pltpu.CompilerParams(
            dimension_semantics=("parallel", "arbitrary", "arbitrary"),
            vmem_limit_bytes=VMEM_LIMIT),
    )(x, w)


# -------------------- Phase 2: scale/bias (+res) + ReLU ---------------------

def _apply_bn_relu_kernel(y_ref, s_ref, b_ref, o_ref):
    out = y_ref[...] * s_ref[...] + b_ref[...]
    o_ref[...] = jnp.maximum(out, 0.0).astype(o_ref.dtype)


def _apply_bn_add_relu_kernel(y_ref, s_ref, b_ref, r_ref, o_ref):
    out = y_ref[...] * s_ref[...] + b_ref[...] + r_ref[...]
    o_ref[...] = jnp.maximum(out, 0.0).astype(o_ref.dtype)


def apply_bn_relu(y, scale, bias, residual=None, *, out_dtype, tm, tn=LANE):
    M, N = y.shape
    grid = (N // tn, M // tm)   # j outermost so scale/bias blocks stay resident
    row_spec = pl.BlockSpec((tm, tn), lambda j, i: (i, j))
    ch_spec = pl.BlockSpec((1, tn), lambda j, i: (0, j))
    if residual is None:
        kernel = _apply_bn_relu_kernel
        in_specs = [row_spec, ch_spec, ch_spec]
        args = (y, scale.reshape(1, N), bias.reshape(1, N))
    else:
        kernel = _apply_bn_add_relu_kernel
        in_specs = [row_spec, ch_spec, ch_spec, row_spec]
        args = (y, scale.reshape(1, N), bias.reshape(1, N), residual)
    return pl.pallas_call(
        kernel,
        out_shape=jax.ShapeDtypeStruct((M, N), out_dtype),
        grid_spec=pltpu.PrefetchScalarGridSpec(
            num_scalar_prefetch=0,
            grid=grid,
            in_specs=in_specs,
            out_specs=row_spec),
        compiler_params=pltpu.CompilerParams(
            dimension_semantics=("parallel", "parallel"),
            vmem_limit_bytes=VMEM_LIMIT),
    )(*args)


# ------------------------------- JAX glue -----------------------------------

def _fold_bn(col_sum, col_sq, gamma, beta, m_real):
    """One-sweep training-mode BN: fold mean/var/gamma/beta into scale & bias."""
    mean = col_sum[0] / m_real
    var = jnp.maximum(col_sq[0] / m_real - mean * mean, 0.0)   # biased variance
    scale = gamma * lax.rsqrt(var + BN_EPS)
    bias = beta - mean * scale
    return scale, bias


def _im2col_3x3(x_nhwc):
    """3x3, padding=1, stride=1 im2col (bf16). Channel order (ky, kx, c)."""
    N, H, W, C = x_nhwc.shape
    xp = jnp.pad(x_nhwc, ((0, 0), (1, 1), (1, 1), (0, 0)))
    patches = [xp[:, ky:ky + H, kx:kx + W, :] for ky in range(3) for kx in range(3)]
    return jnp.concatenate(patches, axis=-1)   # (N, H, W, 9*C)


def _zero_pad_rows(a, m_real, m_pad):
    if m_pad == m_real:
        return a
    return jnp.pad(a[:m_real], ((0, m_pad - m_real), (0, 0)))


def _pad2(a, rows, cols):
    return jnp.pad(a, ((0, rows - a.shape[0]), (0, cols - a.shape[1])))


def init_bottleneck_params(key, inplanes, planes):
    k1, k2, k3 = jax.random.split(key, 3)
    expansion = 4
    p = {}
    # PyTorch conv weight layout: (Cout, Cin, kH, kW)
    p["conv1_w"] = 0.1 * jax.random.normal(k1, (planes, inplanes, 1, 1), jnp.float32)
    p["conv2_w"] = 0.1 * jax.random.normal(k2, (planes, planes, 3, 3), jnp.float32)
    p["conv3_w"] = 0.1 * jax.random.normal(k3, (planes * expansion, planes, 1, 1), jnp.float32)
    p["bn1_g"] = jnp.ones((planes,), jnp.float32)
    p["bn1_b"] = jnp.zeros((planes,), jnp.float32)
    p["bn2_g"] = jnp.ones((planes,), jnp.float32)
    p["bn2_b"] = jnp.zeros((planes,), jnp.float32)
    p["bn3_g"] = jnp.ones((planes * expansion,), jnp.float32)
    p["bn3_b"] = jnp.zeros((planes * expansion,), jnp.float32)
    return p


def bottleneck_forward(params, x_nchw, stride=1):
    """Bottleneck forward (downsample=None). x: (N, inplanes, H, W) f32."""
    if stride != 1:
        raise NotImplementedError(
            "TODO(synk): stride>1 / downsample branch not implemented")
    N, Cin, H, W = x_nchw.shape
    planes = params["conv1_w"].shape[0]
    cout3 = params["conv3_w"].shape[0]
    assert Cin == cout3, "identity residual requires inplanes == planes*4"

    x_nhwc = jnp.transpose(x_nchw, (0, 2, 3, 1)).astype(jnp.float32)
    M = N * H * W
    tm = min(TM_MAX, _round_up(M, 8))
    M_pad = _round_up(M, tm)

    cin_p = _round_up(Cin, LANE)
    pln_p = _round_up(planes, LANE)
    c3_p = _round_up(cout3, LANE)

    def pad_vec(v, n):
        return jnp.pad(v, (0, n - v.shape[0]))

    # --- conv1 (1x1) + bn1 + relu ---
    x2d = x_nhwc.reshape(M, Cin)
    x2d_p = _pad2(x2d, M_pad, cin_p).astype(jnp.bfloat16)
    w1 = params["conv1_w"][:, :, 0, 0].T                       # (Cin, planes)
    w1_p = _pad2(w1, cin_p, pln_p).astype(jnp.bfloat16)
    y1, s1, q1 = matmul_with_stats(x2d_p, w1_p, tm=tm)
    sc1, bi1 = _fold_bn(s1, q1, pad_vec(params["bn1_g"], pln_p),
                        pad_vec(params["bn1_b"], pln_p), M)
    out1 = apply_bn_relu(y1, sc1, bi1, out_dtype=jnp.bfloat16, tm=tm)

    # --- conv2 (3x3, pad=1, stride=1) + bn2 + relu ---
    out1_nhwc = out1[:M].reshape(N, H, W, pln_p)
    cols = _im2col_3x3(out1_nhwc)                               # (N, H, W, 9*pln_p) bf16
    cols_p = _zero_pad_rows(cols.reshape(M, 9 * pln_p), M, M_pad)
    w2 = jnp.transpose(params["conv2_w"], (2, 3, 1, 0))         # (3, 3, cin, cout)
    w2_p = jnp.pad(w2, ((0, 0), (0, 0),
                        (0, pln_p - planes), (0, pln_p - planes)))
    w2_p = w2_p.reshape(9 * pln_p, pln_p).astype(jnp.bfloat16)
    y2, s2, q2 = matmul_with_stats(cols_p, w2_p, tm=tm)
    sc2, bi2 = _fold_bn(s2, q2, pad_vec(params["bn2_g"], pln_p),
                        pad_vec(params["bn2_b"], pln_p), M)
    out2 = apply_bn_relu(y2, sc2, bi2, out_dtype=jnp.bfloat16, tm=tm)
    out2 = _zero_pad_rows(out2, M, M_pad)   # keep padded rows exactly zero

    # --- conv3 (1x1) + bn3 + residual add + relu ---
    w3 = params["conv3_w"][:, :, 0, 0].T                        # (planes, planes*4)
    w3_p = _pad2(w3, pln_p, c3_p).astype(jnp.bfloat16)
    y3, s3, q3 = matmul_with_stats(out2, w3_p, tm=tm)
    sc3, bi3 = _fold_bn(s3, q3, pad_vec(params["bn3_g"], c3_p),
                        pad_vec(params["bn3_b"], c3_p), M)
    res_p = _pad2(x2d, M_pad, c3_p)                             # f32 identity residual
    out3 = apply_bn_relu(y3, sc3, bi3, residual=res_p,
                         out_dtype=jnp.float32, tm=tm)

    out_nhwc = out3[:M, :cout3].reshape(N, H, W, cout3)
    return jnp.transpose(out_nhwc, (0, 3, 1, 2))                # NHWC -> NCHW


# ----------------------- Pure-JAX reference (f32) ---------------------------

def _reference_forward(params, x_nchw):
    def conv(x, w, stride=1, pad=0):
        return lax.conv_general_dilated(
            x, w, (stride, stride), [(pad, pad), (pad, pad)],
            dimension_numbers=("NCHW", "OIHW", "NCHW"))

    def bn(x, g, b):
        mean = jnp.mean(x, axis=(0, 2, 3), keepdims=True)
        var = jnp.mean((x - mean) ** 2, axis=(0, 2, 3), keepdims=True)
        return ((x - mean) * lax.rsqrt(var + BN_EPS)
                * g.reshape(1, -1, 1, 1) + b.reshape(1, -1, 1, 1))

    out = jax.nn.relu(bn(conv(x_nchw, params["conv1_w"]),
                         params["bn1_g"], params["bn1_b"]))
    out = jax.nn.relu(bn(conv(out, params["conv2_w"], 1, 1),
                         params["bn2_g"], params["bn2_b"]))
    out = bn(conv(out, params["conv3_w"]), params["bn3_g"], params["bn3_b"])
    return jax.nn.relu(out + x_nchw)


if __name__ == "__main__":
    # inplanes must equal planes * expansion for the identity residual add.
    inplanes, planes, stride = 16, 4, 1
    N, H, W = 2, 16, 16

    key = jax.random.PRNGKey(0)
    kx, kp = jax.random.split(key)
    x = jax.random.normal(kx, (N, inplanes, H, W), jnp.float32)
    params = init_bottleneck_params(kp, inplanes, planes)

    fwd = jax.jit(functools.partial(bottleneck_forward, stride=stride))
    out = jax.block_until_ready(fwd(params, x))

    assert out.shape == (N, planes * 4, H, W)
    assert bool(jnp.all(out >= 0.0))          # final ReLU
    # Loose tolerance: bf16 matmul inputs vs f32 reference.
    ref = _reference_forward(params, x)
    max_err = float(jnp.max(jnp.abs(out - ref)))
    assert max_err < 0.3, f"max abs error {max_err}"
    print("KERNEL_OK")
</pallas_src>

<mosaic_0001>
module attributes {stable_mosaic.version = 11 : i64} {
  func.func @_matmul_stats_kernel(%arg0: i32, %arg1: i32, %arg2: i32, %arg3: memref<512x128xbf16, #tpu.memory_space<vmem>>, %arg4: memref<128x128xbf16, #tpu.memory_space<vmem>>, %arg5: memref<512x128xf32, #tpu.memory_space<vmem>>, %arg6: memref<1x128xf32, #tpu.memory_space<vmem>>, %arg7: memref<1x128xf32, #tpu.memory_space<vmem>>, %arg8: memref<512x128xf32, #tpu.memory_space<vmem>>) attributes {dimension_semantics = [#tpu.dimension_semantics<parallel>, #tpu.dimension_semantics<arbitrary>, #tpu.dimension_semantics<arbitrary>], iteration_bounds = array<i64: 1, 1, 1>, scalar_prefetch = 0 : i64, scratch_operands = 1 : i64, tpu.core_type = #tpu.core_type<tc>, window_params = [{transform_indices = @transform_0, window_bounds = array<i64: 512, 128>}, {transform_indices = @transform_1, window_bounds = array<i64: 128, 128>}, {transform_indices = @transform_2, window_bounds = array<i64: 512, 128>}, {transform_indices = @transform_3, window_bounds = array<i64: 1, 128>}, {transform_indices = @transform_4, window_bounds = array<i64: 1, 128>}]} {
    %c0_i32 = arith.constant 0 : i32
    %0 = arith.cmpi eq, %arg2, %c0_i32 : i32
    %1 = arith.extui %0 : i1 to i32
    %c0_i32_0 = arith.constant 0 : i32
    %2 = arith.cmpi ne, %1, %c0_i32_0 : i32
    scf.if %2 {
      %cst_13 = arith.constant 0.000000e+00 : f32
      %17 = vector.broadcast %cst_13 : f32 to vector<512x128xf32>
      %c0_14 = arith.constant 0 : index
      %c0_15 = arith.constant 0 : index
      %18 = vector.load %arg8[%c0_14, %c0_15] : memref<512x128xf32, #tpu.memory_space<vmem>>, vector<512x128xf32>
      tpu.vector_store %arg8[%c0_14, %c0_15], %17 {strides = array<i32>} : memref<512x128xf32, #tpu.memory_space<vmem>>, vector<512x128xf32>,
    } else {
    }
    %c0_i32_1 = arith.constant 0 : i32
    %3 = arith.cmpi eq, %arg1, %c0_i32_1 : i32
    %c0_i32_2 = arith.constant 0 : i32
    %4 = arith.cmpi eq, %arg2, %c0_i32_2 : i32
    %5 = arith.andi %3, %4 : i1
    %6 = arith.extui %5 : i1 to i32
    %c0_i32_3 = arith.constant 0 : i32
    %7 = arith.cmpi ne, %6, %c0_i32_3 : i32
    scf.if %7 {
      %cst_13 = arith.constant 0.000000e+00 : f32
      %17 = vector.broadcast %cst_13 : f32 to vector<1x128xf32>
      %c0_14 = arith.constant 0 : index
      %c0_15 = arith.constant 0 : index
      %18 = vector.load %arg6[%c0_14, %c0_15] : memref<1x128xf32, #tpu.memory_space<vmem>>, vector<1x128xf32>
      tpu.vector_store %arg6[%c0_14, %c0_15], %17 {strides = array<i32>} : memref<1x128xf32, #tpu.memory_space<vmem>>, vector<1x128xf32>,
      %cst_16 = arith.constant 0.000000e+00 : f32
      %19 = vector.broadcast %cst_16 : f32 to vector<1x128xf32>
      %c0_17 = arith.constant 0 : index
      %c0_18 = arith.constant 0 : index
      %20 = vector.load %arg7[%c0_17, %c0_18] : memref<1x128xf32, #tpu.memory_space<vmem>>, vector<1x128xf32>
      tpu.vector_store %arg7[%c0_17, %c0_18], %19 {strides = array<i32>} : memref<1x128xf32, #tpu.memory_space<vmem>>, vector<1x128xf32>,
    } else {
    }
    %c0 = arith.constant 0 : index
    %c0_4 = arith.constant 0 : index
    %8 = vector.load %arg8[%c0, %c0_4] : memref<512x128xf32, #tpu.memory_space<vmem>>, vector<512x128xf32>
    %c0_5 = arith.constant 0 : index
    %c0_6 = arith.constant 0 : index
    %9 = vector.load %arg3[%c0_5, %c0_6] : memref<512x128xbf16, #tpu.memory_space<vmem>>, vector<512x128xbf16>
    %c0_7 = arith.constant 0 : index
    %c0_8 = arith.constant 0 : index
    %10 = vector.load %arg4[%c0_7, %c0_8] : memref<128x128xbf16, #tpu.memory_space<vmem>>, vector<128x128xbf16>
    %cst = arith.constant dense<0.000000e+00> : vector<512x128xf32>
    %11 = tpu.matmul %9, %10, %cst {dimension_numbers = #tpu.dot_dimension_numbers<[1], [0], [0], [1], [0, 0, 1, 1], [], []>} : vector<512x128xbf16>, vector<128x128xbf16>, vector<512x128xf32> -> vector<512x128xf32>
    %12 = arith.addf %8, %11 : vector<512x128xf32>
    %c0_9 = arith.constant 0 : index
    %c0_10 = arith.constant 0 : index
    %13 = vector.load %arg8[%c0_9, %c0_10] : memref<512x128xf32, #tpu.memory_space<vmem>>, vector<512x128xf32>
    tpu.vector_store %arg8[%c0_9, %c0_10], %12 {strides = array<i32>} : memref<512x128xf32, #tpu.memory_space<vmem>>, vector<512x128xf32>,
    %c0_i32_11 = arith.constant 0 : i32
    %14 = arith.cmpi eq, %arg2, %c0_i32_11 : i32
    %15 = arith.extui %14 : i1 to i32
    %c0_i32_12 = arith.constant 0 : i32
    %16 = arith.cmpi ne, %15, %c0_i32_12 : i32
    scf.if %16 {
      %c0_13 = arith.constant 0 : index
      %c0_14 = arith.constant 0 : index
      %17 = vector.load %arg8[%c0_13, %c0_14] : memref<512x128xf32, #tpu.memory_space<vmem>>, vector<512x128xf32>
      %c0_15 = arith.constant 0 : index
      %c0_16 = arith.constant 0 : index
      %18 = vector.load %arg5[%c0_15, %c0_16] : memref<512x128xf32, #tpu.memory_space<vmem>>, vector<512x128xf32>
      tpu.vector_store %arg5[%c0_15, %c0_16], %17 {strides = array<i32>} : memref<512x128xf32, #tpu.memory_space<vmem>>, vector<512x128xf32>,
      %c0_17 = arith.constant 0 : index
      %c0_18 = arith.constant 0 : index
      %19 = vector.load %arg6[%c0_17, %c0_18] : memref<1x128xf32, #tpu.memory_space<vmem>>, vector<1x128xf32>
      %cst_19 = arith.constant dense<0.000000e+00> : vector<128xf32>
      %20 = vector.multi_reduction <add>, %17, %cst_19 [0] : vector<512x128xf32> to vector<128xf32>
      %21 = vector.shape_cast %20 : vector<128xf32> to vector<1x128xf32>
      %22 = arith.addf %19, %21 : vector<1x128xf32>
      %c0_20 = arith.constant 0 : index
      %c0_21 = arith.constant 0 : index
      %23 = vector.load %arg6[%c0_20, %c0_21] : memref<1x128xf32, #tpu.memory_space<vmem>>, vector<1x128xf32>
      tpu.vector_store %arg6[%c0_20, %c0_21], %22 {strides = array<i32>} : memref<1x128xf32, #tpu.memory_space<vmem>>, vector<1x128xf32>,
      %c0_22 = arith.constant 0 : index
      %c0_23 = arith.constant 0 : index
      %24 = vector.load %arg7[%c0_22, %c0_23] : memref<1x128xf32, #tpu.memory_space<vmem>>, vector<1x128xf32>
      %25 = arith.mulf %17, %17 : vector<512x128xf32>
      %cst_24 = arith.constant dense<0.000000e+00> : vector<128xf32>
      %26 = vector.multi_reduction <add>, %25, %cst_24 [0] : vector<512x128xf32> to vector<128xf32>
      %27 = vector.shape_cast %26 : vector<128xf32> to vector<1x128xf32>
      %28 = arith.addf %24, %27 : vector<1x128xf32>
      %c0_25 = arith.constant 0 : index
      %c0_26 = arith.constant 0 : index
      %29 = vector.load %arg7[%c0_25, %c0_26] : memref<1x128xf32, #tpu.memory_space<vmem>>, vector<1x128xf32>
      tpu.vector_store %arg7[%c0_25, %c0_26], %28 {strides = array<i32>} : memref<1x128xf32, #tpu.memory_space<vmem>>, vector<1x128xf32>,
    } else {
    }
    return
  }
  func.func @transform_0(%arg0: i32, %arg1: i32, %arg2: i32) -> (i32, i32) {
    %c0_i32 = arith.constant 0 : i32
    return %arg1, %arg2 : i32, i32
  }
  func.func @transform_1(%arg0: i32, %arg1: i32, %arg2: i32) -> (i32, i32) {
    %c0_i32 = arith.constant 0 : i32
    return %arg2, %arg0 : i32, i32
  }
  func.func @transform_2(%arg0: i32, %arg1: i32, %arg2: i32) -> (i32, i32) {
    %c0_i32 = arith.constant 0 : i32
    return %arg1, %arg0 : i32, i32
  }
  func.func @transform_3(%arg0: i32, %arg1: i32, %arg2: i32) -> (i32, i32) {
    %c0_i32 = arith.constant 0 : i32
    %c0_i32_0 = arith.constant 0 : i32
    return %c0_i32, %arg0 : i32, i32
  }
  func.func @transform_4(%arg0: i32, %arg1: i32, %arg2: i32) -> (i32, i32) {
    %c0_i32 = arith.constant 0 : i32
    %c0_i32_0 = arith.constant 0 : i32
    return %c0_i32, %arg0 : i32, i32
  }
}

module attributes {stable_mosaic.version = 11 : i64} {
  func.func @_apply_bn_relu_kernel(%arg0: i32, %arg1: i32, %arg2: memref<512x128xf32, #tpu.memory_space<vmem>>, %arg3: memref<1x128xf32, #tpu.memory_space<vmem>>, %arg4: memref<1x128xf32, #tpu.memory_space<vmem>>, %arg5: memref<512x128xbf16, #tpu.memory_space<vmem>>) attributes {dimension_semantics = [#tpu.dimension_semantics<parallel>, #tpu.dimension_semantics<parallel>], iteration_bounds = array<i64: 1, 1>, scalar_prefetch = 0 : i64, scratch_operands = 0 : i64, tpu.core_type = #tpu.core_type<tc>, window_params = [{transform_indices = @transform_0, window_bounds = array<i64: 512, 128>}, {transform_indices = @transform_1, window_bounds = array<i64: 1, 128>}, {transform_indices = @transform_2, window_bounds = array<i64: 1, 128>}, {transform_indices = @transform_3, window_bounds = array<i64: 512, 128>}]} {
    %c0 = arith.constant 0 : index
    %c0_0 = arith.constant 0 : index
    %0 = vector.load %arg2[%c0, %c0_0] : memref<512x128xf32, #tpu.memory_space<vmem>>, vector<512x128xf32>
    %c0_1 = arith.constant 0 : index
    %c0_2 = arith.constant 0 : index
    %1 = vector.load %arg3[%c0_1, %c0_2] : memref<1x128xf32, #tpu.memory_space<vmem>>, vector<1x128xf32>
    %2 = vector.broadcast %1 : vector<1x128xf32> to vector<512x128xf32>
    %3 = arith.mulf %0, %2 : vector<512x128xf32>
    %c0_3 = arith.constant 0 : index
    %c0_4 = arith.constant 0 : index
    %4 = vector.load %arg4[%c0_3, %c0_4] : memref<1x128xf32, #tpu.memory_space<vmem>>, vector<1x128xf32>
    %5 = vector.broadcast %4 : vector<1x128xf32> to vector<512x128xf32>
    %6 = arith.addf %3, %5 : vector<512x128xf32>
    %cst = arith.constant 0.000000e+00 : f32
    %7 = vector.broadcast %cst : f32 to vector<512x128xf32>
    %8 = arith.maximumf %6, %7 : vector<512x128xf32>
    %9 = arith.truncf %8 : vector<512x128xf32> to vector<512x128xbf16>
    %c0_5 = arith.constant 0 : index
    %c0_6 = arith.constant 0 : index
    %10 = vector.load %arg5[%c0_5, %c0_6] : memref<512x128xbf16, #tpu.memory_space<vmem>>, vector<512x128xbf16>
    tpu.vector_store %arg5[%c0_5, %c0_6], %9 {strides = array<i32>} : memref<512x128xbf16, #tpu.memory_space<vmem>>, vector<512x128xbf16>,
    return
  }
  func.func @transform_0(%arg0: i32, %arg1: i32) -> (i32, i32) {
    %c0_i32 = arith.constant 0 : i32
    return %arg1, %arg0 : i32, i32
  }
  func.func @transform_1(%arg0: i32, %arg1: i32) -> (i32, i32) {
    %c0_i32 = arith.constant 0 : i32
    %c0_i32_0 = arith.constant 0 : i32
    return %c0_i32, %arg0 : i32, i32
  }
  func.func @transform_2(%arg0: i32, %arg1: i32) -> (i32, i32) {
    %c0_i32 = arith.constant 0 : i32
    %c0_i32_0 = arith.constant 0 : i32
    return %c0_i32, %arg0 : i32, i32
  }
  func.func @transform_3(%arg0: i32, %arg1: i32) -> (i32, i32) {
    %c0_i32 = arith.constant 0 : i32
    return %arg1, %arg0 : i32, i32
  }
}

module attributes {stable_mosaic.version = 11 : i64} {
  func.func @_matmul_stats_kernel(%arg0: i32, %arg1: i32, %arg2: i32, %arg3: memref<512x128xbf16, #tpu.memory_space<vmem>>, %arg4: memref<128x128xbf16, #tpu.memory_space<vmem>>, %arg5: memref<512x128xf32, #tpu.memory_space<vmem>>, %arg6: memref<1x128xf32, #tpu.memory_space<vmem>>, %arg7: memref<1x128xf32, #tpu.memory_space<vmem>>, %arg8: memref<512x128xf32, #tpu.memory_space<vmem>>) attributes {dimension_semantics = [#tpu.dimension_semantics<parallel>, #tpu.dimension_semantics<arbitrary>, #tpu.dimension_semantics<arbitrary>], iteration_bounds = array<i64: 1, 1, 9>, scalar_prefetch = 0 : i64, scratch_operands = 1 : i64, tpu.core_type = #tpu.core_type<tc>, window_params = [{transform_indices = @transform_0, window_bounds = array<i64: 512, 128>}, {transform_indices = @transform_1, window_bounds = array<i64: 128, 128>}, {transform_indices = @transform_2, window_bounds = array<i64: 512, 128>}, {transform_indices = @transform_3, window_bounds = array<i64: 1, 128>}, {transform_indices = @transform_4, window_bounds = array<i64: 1, 128>}]} {
    %c0_i32 = arith.constant 0 : i32
    %0 = arith.cmpi eq, %arg2, %c0_i32 : i32
    %1 = arith.extui %0 : i1 to i32
    %c0_i32_0 = arith.constant 0 : i32
    %2 = arith.cmpi ne, %1, %c0_i32_0 : i32
    scf.if %2 {
      %cst_12 = arith.constant 0.000000e+00 : f32
      %17 = vector.broadcast %cst_12 : f32 to vector<512x128xf32>
      %c0_13 = arith.constant 0 : index
      %c0_14 = arith.constant 0 : index
      %18 = vector.load %arg8[%c0_13, %c0_14] : memref<512x128xf32, #tpu.memory_space<vmem>>, vector<512x128xf32>
      tpu.vector_store %arg8[%c0_13, %c0_14], %17 {strides = array<i32>} : memref<512x128xf32, #tpu.memory_space<vmem>>, vector<512x128xf32>,
    } else {
    }
    %c0_i32_1 = arith.constant 0 : i32
    %3 = arith.cmpi eq, %arg1, %c0_i32_1 : i32
    %c0_i32_2 = arith.constant 0 : i32
    %4 = arith.cmpi eq, %arg2, %c0_i32_2 : i32
    %5 = arith.andi %3, %4 : i1
    %6 = arith.extui %5 : i1 to i32
    %c0_i32_3 = arith.constant 0 : i32
    %7 = arith.cmpi ne, %6, %c0_i32_3 : i32
    scf.if %7 {
      %cst_12 = arith.constant 0.000000e+00 : f32
      %17 = vector.broadcast %cst_12 : f32 to vector<1x128xf32>
      %c0_13 = arith.constant 0 : index
      %c0_14 = arith.constant 0 : index
      %18 = vector.load %arg6[%c0_13, %c0_14] : memref<1x128xf32, #tpu.memory_space<vmem>>, vector<1x128xf32>
      tpu.vector_store %arg6[%c0_13, %c0_14], %17 {strides = array<i32>} : memref<1x128xf32, #tpu.memory_space<vmem>>, vector<1x128xf32>,
      %cst_15 = arith.constant 0.000000e+00 : f32
      %19 = vector.broadcast %cst_15 : f32 to vector<1x128xf32>
      %c0_16 = arith.constant 0 : index
      %c0_17 = arith.constant 0 : index
      %20 = vector.load %arg7[%c0_16, %c0_17] : memref<1x128xf32, #tpu.memory_space<vmem>>, vector<1x128xf32>
      tpu.vector_store %arg7[%c0_16, %c0_17], %19 {strides = array<i32>} : memref<1x128xf32, #tpu.memory_space<vmem>>, vector<1x128xf32>,
    } else {
    }
    %c0 = arith.constant 0 : index
    %c0_4 = arith.constant 0 : index
    %8 = vector.load %arg8[%c0, %c0_4] : memref<512x128xf32, #tpu.memory_space<vmem>>, vector<512x128xf32>
    %c0_5 = arith.constant 0 : index
    %c0_6 = arith.constant 0 : index
    %9 = vector.load %arg3[%c0_5, %c0_6] : memref<512x128xbf16, #tpu.memory_space<vmem>>, vector<512x128xbf16>
    %c0_7 = arith.constant 0 : index
    %c0_8 = arith.constant 0 : index
    %10 = vector.load %arg4[%c0_7, %c0_8] : memref<128x128xbf16, #tpu.memory_space<vmem>>, vector<128x128xbf16>
    %cst = arith.constant dense<0.000000e+00> : vector<512x128xf32>
    %11 = tpu.matmul %9, %10, %cst {dimension_numbers = #tpu.dot_dimension_numbers<[1], [0], [0], [1], [0, 0, 1, 1], [], []>} : vector<512x128xbf16>, vector<128x128xbf16>, vector<512x128xf32> -> vector<512x128xf32>
    %12 = arith.addf %8, %11 : vector<512x128xf32>
    %c0_9 = arith.constant 0 : index
    %c0_10 = arith.constant 0 : index
    %13 = vector.load %arg8[%c0_9, %c0_10] : memref<512x128xf32, #tpu.memory_space<vmem>>, vector<512x128xf32>
    tpu.vector_store %arg8[%c0_9, %c0_10], %12 {strides = array<i32>} : memref<512x128xf32, #tpu.memory_space<vmem>>, vector<512x128xf32>,
    %c8_i32 = arith.constant 8 : i32
    %14 = arith.cmpi eq, %arg2, %c8_i32 : i32
    %15 = arith.extui %14 : i1 to i32
    %c0_i32_11 = arith.constant 0 : i32
    %16 = arith.cmpi ne, %15, %c0_i32_11 : i32
    scf.if %16 {
      %c0_12 = arith.constant 0 : index
      %c0_13 = arith.constant 0 : index
      %17 = vector.load %arg8[%c0_12, %c0_13] : memref<512x128xf32, #tpu.memory_space<vmem>>, vector<512x128xf32>
      %c0_14 = arith.constant 0 : index
      %c0_15 = arith.constant 0 : index
      %18 = vector.load %arg5[%c0_14, %c0_15] : memref<512x128xf32, #tpu.memory_space<vmem>>, vector<512x128xf32>
      tpu.vector_store %arg5[%c0_14, %c0_15], %17 {strides = array<i32>} : memref<512x128xf32, #tpu.memory_space<vmem>>, vector<512x128xf32>,
      %c0_16 = arith.constant 0 : index
      %c0_17 = arith.constant 0 : index
      %19 = vector.load %arg6[%c0_16, %c0_17] : memref<1x128xf32, #tpu.memory_space<vmem>>, vector<1x128xf32>
      %cst_18 = arith.constant dense<0.000000e+00> : vector<128xf32>
      %20 = vector.multi_reduction <add>, %17, %cst_18 [0] : vector<512x128xf32> to vector<128xf32>
      %21 = vector.shape_cast %20 : vector<128xf32> to vector<1x128xf32>
      %22 = arith.addf %19, %21 : vector<1x128xf32>
      %c0_19 = arith.constant 0 : index
      %c0_20 = arith.constant 0 : index
      %23 = vector.load %arg6[%c0_19, %c0_20] : memref<1x128xf32, #tpu.memory_space<vmem>>, vector<1x128xf32>
      tpu.vector_store %arg6[%c0_19, %c0_20], %22 {strides = array<i32>} : memref<1x128xf32, #tpu.memory_space<vmem>>, vector<1x128xf32>,
      %c0_21 = arith.constant 0 : index
      %c0_22 = arith.constant 0 : index
      %24 = vector.load %arg7[%c0_21, %c0_22] : memref<1x128xf32, #tpu.memory_space<vmem>>, vector<1x128xf32>
      %25 = arith.mulf %17, %17 : vector<512x128xf32>
      %cst_23 = arith.constant dense<0.000000e+00> : vector<128xf32>
      %26 = vector.multi_reduction <add>, %25, %cst_23 [0] : vector<512x128xf32> to vector<128xf32>
      %27 = vector.shape_cast %26 : vector<128xf32> to vector<1x128xf32>
      %28 = arith.addf %24, %27 : vector<1x128xf32>
      %c0_24 = arith.constant 0 : index
      %c0_25 = arith.constant 0 : index
      %29 = vector.load %arg7[%c0_24, %c0_25] : memref<1x128xf32, #tpu.memory_space<vmem>>, vector<1x128xf32>
      tpu.vector_store %arg7[%c0_24, %c0_25], %28 {strides = array<i32>} : memref<1x128xf32, #tpu.memory_space<vmem>>, vector<1x128xf32>,
    } else {
    }
    return
  }
  func.func @transform_0(%arg0: i32, %arg1: i32, %arg2: i32) -> (i32, i32) {
    %c0_i32 = arith.constant 0 : i32
    return %arg1, %arg2 : i32, i32
  }
  func.func @transform_1(%arg0: i32, %arg1: i32, %arg2: i32) -> (i32, i32) {
    %c0_i32 = arith.constant 0 : i32
    return %arg2, %arg0 : i32, i32
  }
  func.func @transform_2(%arg0: i32, %arg1: i32, %arg2: i32) -> (i32, i32) {
    %c0_i32 = arith.constant 0 : i32
    return %arg1, %arg0 : i32, i32
  }
  func.func @transform_3(%arg0: i32, %arg1: i32, %arg2: i32) -> (i32, i32) {
    %c0_i32 = arith.constant 0 : i32
    %c0_i32_0 = arith.constant 0 : i32
    return %c0_i32, %arg0 : i32, i32
  }
  func.func @transform_4(%arg0: i32, %arg1: i32, %arg2: i32) -> (i32, i32) {
    %c0_i32 = arith.constant 0 : i32
    %c0_i32_0 = arith.constant 0 : i32
    return %c0_i32, %arg0 : i32, i32
  }
}

module attributes {stable_mosaic.version = 11 : i64} {
  func.func @_apply_bn_add_relu_kernel(%arg0: i32, %arg1: i32, %arg2: memref<512x128xf32, #tpu.memory_space<vmem>>, %arg3: memref<1x128xf32, #tpu.memory_space<vmem>>, %arg4: memref<1x128xf32, #tpu.memory_space<vmem>>, %arg5: memref<512x128xf32, #tpu.memory_space<vmem>>, %arg6: memref<512x128xf32, #tpu.memory_space<vmem>>) attributes {dimension_semantics = [#tpu.dimension_semantics<parallel>, #tpu.dimension_semantics<parallel>], iteration_bounds = array<i64: 1, 1>, scalar_prefetch = 0 : i64, scratch_operands = 0 : i64, tpu.core_type = #tpu.core_type<tc>, window_params = [{transform_indices = @transform_0, window_bounds = array<i64: 512, 128>}, {transform_indices = @transform_1, window_bounds = array<i64: 1, 128>}, {transform_indices = @transform_2, window_bounds = array<i64: 1, 128>}, {transform_indices = @transform_3, window_bounds = array<i64: 512, 128>}, {transform_indices = @transform_4, window_bounds = array<i64: 512, 128>}]} {
    %c0 = arith.constant 0 : index
    %c0_0 = arith.constant 0 : index
    %0 = vector.load %arg2[%c0, %c0_0] : memref<512x128xf32, #tpu.memory_space<vmem>>, vector<512x128xf32>
    %c0_1 = arith.constant 0 : index
    %c0_2 = arith.constant 0 : index
    %1 = vector.load %arg3[%c0_1, %c0_2] : memref<1x128xf32, #tpu.memory_space<vmem>>, vector<1x128xf32>
    %2 = vector.broadcast %1 : vector<1x128xf32> to vector<512x128xf32>
    %3 = arith.mulf %0, %2 : vector<512x128xf32>
    %c0_3 = arith.constant 0 : index
    %c0_4 = arith.constant 0 : index
    %4 = vector.load %arg4[%c0_3, %c0_4] : memref<1x128xf32, #tpu.memory_space<vmem>>, vector<1x128xf32>
    %5 = vector.broadcast %4 : vector<1x128xf32> to vector<512x128xf32>
    %6 = arith.addf %3, %5 : vector<512x128xf32>
    %c0_5 = arith.constant 0 : index
    %c0_6 = arith.constant 0 : index
    %7 = vector.load %arg5[%c0_5, %c0_6] : memref<512x128xf32, #tpu.memory_space<vmem>>, vector<512x128xf32>
    %8 = arith.addf %6, %7 : vector<512x128xf32>
    %cst = arith.constant 0.000000e+00 : f32
    %9 = vector.broadcast %cst : f32 to vector<512x128xf32>
    %10 = arith.maximumf %8, %9 : vector<512x128xf32>
    %c0_7 = arith.constant 0 : index
    %c0_8 = arith.constant 0 : index
    %11 = vector.load %arg6[%c0_7, %c0_8] : memref<512x128xf32, #tpu.memory_space<vmem>>, vector<512x128xf32>
    tpu.vector_store %arg6[%c0_7, %c0_8], %10 {strides = array<i32>} : memref<512x128xf32, #tpu.memory_space<vmem>>, vector<512x128xf32>,
    return
  }
  func.func @transform_0(%arg0: i32, %arg1: i32) -> (i32, i32) {
    %c0_i32 = arith.constant 0 : i32
    return %arg1, %arg0 : i32, i32
  }
  func.func @transform_1(%arg0: i32, %arg1: i32) -> (i32, i32) {
    %c0_i32 = arith.constant 0 : i32
    %c0_i32_0 = arith.constant 0 : i32
    return %c0_i32, %arg0 : i32, i32
  }
  func.func @transform_2(%arg0: i32, %arg1: i32) -> (i32, i32) {
    %c0_i32 = arith.constant 0 : i32
    %c0_i32_0 = arith.constant 0 : i32
    return %c0_i32, %arg0 : i32, i32
  }
  func.func @transform_3(%arg0: i32, %arg1: i32) -> (i32, i32) {
    %c0_i32 = arith.constant 0 : i32
    return %arg1, %arg0 : i32, i32
  }
  func.func @transform_4(%arg0: i32, %arg1: i32) -> (i32, i32) {
    %c0_i32 = arith.constant 0 : i32
    return %arg1, %arg0 : i32, i32
  }
}

</mosaic_0001>

<llo_original>
// kernel: bottleneck_forward.6
$region0: #{bottleneck_forward.6}
  #allocation0 [shape = 'u32[]', space=smem, size = 0x4, offset = 0x4, fixed_abs, tag = 'smem constant byte address 0x4 - core index']
  #allocation1 [shape = 'u32[144,128]{1,0:T(1,128)}', space=vmem, size = 0x12000, scoped, tag = 'internal scratch']
  #allocation2 [shape = 'f32[512,128]{1,0:T(8,128)}', space=vmem, size = 0x40000, scoped, tag = 'scratch operand']
  %s0 = inlined_call_operand.vmem [shape: bf16[512,128], index: 0, kind: input, shape index: {}]
  %s1 = inlined_call_operand.vmem [shape: bf16[128,128], index: 1, kind: input, shape index: {}]
  %s2 = inlined_call_operand.vmem [shape: f32[512,128], index: 2, kind: output, shape index: {0}]
  %s3 = inlined_call_operand.vmem [shape: f32[1,128], index: 3, kind: output, shape index: {1}]
  %s4 = inlined_call_operand.vmem [shape: f32[1,128], index: 4, kind: output, shape index: {2}]
  %5 = xla_tuple %s2, %s3, %s4
  %s6 = sld [smem:[#allocation0]]
  $region46: #{bottleneck_forward.6} parent=0
    _
  %s8 = ssub.s32 1, %s6
  %s9 = scalar_select 0, %s8, %s6
  // Predicated region
  $region2: #{bottleneck_forward.6} parent=0 // pred_check
    _
  $region3: #{bottleneck_forward.6} parent=0 // pred_check_branch
    %11 = sbr.rel (0) target = $region5
  $region4: #{bottleneck_forward.6} parent=0 // pred_region
    _
  $region5: #{bottleneck_forward.6} parent=0 // pred_fallthru
    _
  // Predicated region
  $region6: #{bottleneck_forward.6} parent=0 // pred_check
    _
  $region7: #{bottleneck_forward.6} parent=0 // pred_check_branch
    %13 = sbr.rel (0) target = $region9
  $region8: #{bottleneck_forward.6} parent=0 // pred_region
    _
  $region9: #{bottleneck_forward.6} parent=0 // pred_fallthru
    _
  %p15 = scmp.eq.s32.totalorder 0, 0
  // Predicated region
  $region10: #{bottleneck_forward.6} parent=0 // pred_check
    %p16 = pneg %p15
  $region11: #{bottleneck_forward.6} parent=0 // pred_check_branch
    %18 = sbr.rel (%p16) target = $region13
  $region12: #{bottleneck_forward.6} parent=0 // pred_region
    %19 = vst [vmem:[#allocation2] sm:$0xff] 0.0
    %20 = vst [vmem:[#allocation2 + $0x8] sm:$0xff] 0.0
    %21 = vst [vmem:[#allocation2 + $0x10] sm:$0xff] 0.0
    %22 = vst [vmem:[#allocation2 + $0x18] sm:$0xff] 0.0
    %23 = vst [vmem:[#allocation2 + $0x20] sm:$0xff] 0.0
    %24 = vst [vmem:[#allocation2 + $0x28] sm:$0xff] 0.0
    %25 = vst [vmem:[#allocation2 + $0x30] sm:$0xff] 0.0
    %26 = vst [vmem:[#allocation2 + $0x38] sm:$0xff] 0.0
    %27 = vst [vmem:[#allocation2 + $0x40] sm:$0xff] 0.0
    %28 = vst [vmem:[#allocation2 + $0x48] sm:$0xff] 0.0
    %29 = vst [vmem:[#allocation2 + $0x50] sm:$0xff] 0.0
    %30 = vst [vmem:[#allocation2 + $0x58] sm:$0xff] 0.0
    %31 = vst [vmem:[#allocation2 + $0x60] sm:$0xff] 0.0
    %32 = vst [vmem:[#allocation2 + $0x68] sm:$0xff] 0.0
    %33 = vst [vmem:[#allocation2 + $0x70] sm:$0xff] 0.0
    %34 = vst [vmem:[#allocation2 + $0x78] sm:$0xff] 0.0
    %35 = vst [vmem:[#allocation2 + $0x80] sm:$0xff] 0.0
    %36 = vst [vmem:[#allocation2 + $0x88] sm:$0xff] 0.0
    %37 = vst [vmem:[#allocation2 + $0x90] sm:$0xff] 0.0
    %38 = vst [vmem:[#allocation2 + $0x98] sm:$0xff] 0.0
    %39 = vst [vmem:[#allocation2 + $0xa0] sm:$0xff] 0.0
    %40 = vst [vmem:[#allocation2 + $0xa8] sm:$0xff] 0.0
    %41 = vst [vmem:[#allocation2 + $0xb0] sm:$0xff] 0.0
    %42 = vst [vmem:[#allocation2 + $0xb8] sm:$0xff] 0.0
    %43 = vst [vmem:[#allocation2 + $0xc0] sm:$0xff] 0.0
    %44 = vst [vmem:[#allocation2 + $0xc8] sm:$0xff] 0.0
    %45 = vst [vmem:[#allocation2 + $0xd0] sm:$0xff] 0.0
    %46 = vst [vmem:[#allocation2 + $0xd8] sm:$0xff] 0.0
    %47 = vst [vmem:[#allocation2 + $0xe0] sm:$0xff] 0.0
    %48 = vst [vmem:[#allocation2 + $0xe8] sm:$0xff] 0.0
    %49 = vst [vmem:[#allocation2 + $0xf0] sm:$0xff] 0.0
    %50 = vst [vmem:[#allocation2 + $0xf8] sm:$0xff] 0.0
    %51 = vst [vmem:[#allocation2 + $0x100] sm:$0xff] 0.0
    %52 = vst [vmem:[#allocation2 + $0x108] sm:$0xff] 0.0
    %53 = vst [vmem:[#allocation2 + $0x110] sm:$0xff] 0.0
    %54 = vst [vmem:[#allocation2 + $0x118] sm:$0xff] 0.0
    %55 = vst [vmem:[#allocation2 + $0x120] sm:$0xff] 0.0
    %56 = vst [vmem:[#allocation2 + $0x128] sm:$0xff] 0.0
    %57 = vst [vmem:[#allocation2 + $0x130] sm:$0xff] 0.0
    %58 = vst [vmem:[#allocation2 + $0x138] sm:$0xff] 0.0
    %59 = vst [vmem:[#allocation2 + $0x140] sm:$0xff] 0.0
    %60 = vst [vmem:[#allocation2 + $0x148] sm:$0xff] 0.0
    %61 = vst [vmem:[#allocation2 + $0x150] sm:$0xff] 0.0
    %62 = vst [vmem:[#allocation2 + $0x158] sm:$0xff] 0.0
    %63 = vst [vmem:[#allocation2 + $0x160] sm:$0xff] 0.0
    %64 = vst [vmem:[#allocation2 + $0x168] sm:$0xff] 0.0
    %65 = vst [vmem:[#allocation2 + $0x170] sm:$0xff] 0.0
    %66 = vst [vmem:[#allocation2 + $0x178] sm:$0xff] 0.0
    %67 = vst [vmem:[#allocation2 + $0x180] sm:$0xff] 0.0
    %68 = vst [vmem:[#allocation2 + $0x188] sm:$0xff] 0.0
    %69 = vst [vmem:[#allocation2 + $0x190] sm:$0xff] 0.0
    %70 = vst [vmem:[#allocation2 + $0x198] sm:$0xff] 0.0
    %71 = vst [vmem:[#allocation2 + $0x1a0] sm:$0xff] 0.0
    %72 = vst [vmem:[#allocation2 + $0x1a8] sm:$0xff] 0.0
    %73 = vst [vmem:[#allocation2 + $0x1b0] sm:$0xff] 0.0
    %74 = vst [vmem:[#allocation2 + $0x1b8] sm:$0xff] 0.0
    %75 = vst [vmem:[#allocation2 + $0x1c0] sm:$0xff] 0.0
    %76 = vst [vmem:[#allocation2 + $0x1c8] sm:$0xff] 0.0
    %77 = vst [vmem:[#allocation2 + $0x1d0] sm:$0xff] 0.0
    %78 = vst [vmem:[#allocation2 + $0x1d8] sm:$0xff] 0.0
    %79 = vst [vmem:[#allocation2 + $0x1e0] sm:$0xff] 0.0
    %80 = vst [vmem:[#allocation2 + $0x1e8] sm:$0xff] 0.0
    %81 = vst [vmem:[#allocation2 + $0x1f0] sm:$0xff] 0.0
    %82 = vst [vmem:[#allocation2 + $0x1f8] sm:$0xff] 0.0
  $region13: #{bottleneck_forward.6} parent=0 // pred_fallthru
    _
  %p83 = scmp.eq.s32.totalorder 0, 0
  %p84 = pnand %p83, %p15
  %p85 = pneg %p84
  // Predicated region
  $region14: #{bottleneck_forward.6} parent=0 // pred_check
    _
  $region15: #{bottleneck_forward.6} parent=0 // pred_check_branch
    %87 = sbr.rel (%p84) target = $region17
  $region16: #{bottleneck_forward.6} parent=0 // pred_region
    %88 = vst [vmem:[%s3] sm:$0x1] 0.0
    %89 = vst [vmem:[%s4] sm:$0x1] 0.0
  $region17: #{bottleneck_forward.6} parent=0 // pred_fallthru
    _
  %v90 = vld [vmem:[#allocation2] sm:$0xff]
  %v91 = vld [vmem:[#allocation2 + $0x8] sm:$0xff]
  %v92 = vld [vmem:[#allocation2 + $0x10] sm:$0xff]
  %v93 = vld [vmem:[#allocation2 + $0x18] sm:$0xff]
  %v94 = vld [vmem:[#allocation2 + $0x20] sm:$0xff]
  %v95 = vld [vmem:[#allocation2 + $0x28] sm:$0xff]
  %v96 = vld [vmem:[#allocation2 + $0x30] sm:$0xff]
  %v97 = vld [vmem:[#allocation2 + $0x38] sm:$0xff]
  %v98 = vld [vmem:[#allocation2 + $0x40] sm:$0xff]
  %v99 = vld [vmem:[#allocation2 + $0x48] sm:$0xff]
  %v100 = vld [vmem:[#allocation2 + $0x50] sm:$0xff]
  %v101 = vld [vmem:[#allocation2 + $0x58] sm:$0xff]
  %v102 = vld [vmem:[#allocation2 + $0x60] sm:$0xff]
  %v103 = vld [vmem:[#allocation2 + $0x68] sm:$0xff]
  %v104 = vld [vmem:[#allocation2 + $0x70] sm:$0xff]
  %v105 = vld [vmem:[#allocation2 + $0x78] sm:$0xff]
  %v106 = vld [vmem:[#allocation2 + $0x80] sm:$0xff]
  %v107 = vld [vmem:[#allocation2 + $0x88] sm:$0xff]
  %v108 = vld [vmem:[#allocation2 + $0x90] sm:$0xff]
  %v109 = vld [vmem:[#allocation2 + $0x98] sm:$0xff]
  %v110 = vld [vmem:[#allocation2 + $0xa0] sm:$0xff]
  %v111 = vld [vmem:[#allocation2 + $0xa8] sm:$0xff]
  %v112 = vld [vmem:[#allocation2 + $0xb0] sm:$0xff]
  %v113 = vld [vmem:[#allocation2 + $0xb8] sm:$0xff]
  %v114 = vld [vmem:[#allocation2 + $0xc0] sm:$0xff]
  %v115 = vld [vmem:[#allocation2 + $0xc8] sm:$0xff]
  %v116 = vld [vmem:[#allocation2 + $0xd0] sm:$0xff]
  %v117 = vld [vmem:[#allocation2 + $0xd8] sm:$0xff]
  %v118 = vld [vmem:[#allocation2 + $0xe0] sm:$0xff]
  %v119 = vld [vmem:[#allocation2 + $0xe8] sm:$0xff]
  %v120 = vld [vmem:[#allocation2 + $0xf0] sm:$0xff]
  %v121 = vld [vmem:[#allocation2 + $0xf8] sm:$0xff]
  %v122 = vld [vmem:[#allocation2 + $0x100] sm:$0xff]
  %v123 = vld [vmem:[#allocation2 + $0x108] sm:$0xff]
  %v124 = vld [vmem:[#allocation2 + $0x110] sm:$0xff]
  %v125 = vld [vmem:[#allocation2 + $0x118] sm:$0xff]
  %v126 = vld [vmem:[#allocation2 + $0x120] sm:$0xff]
  %v127 = vld [vmem:[#allocation2 + $0x128] sm:$0xff]
  %v128 = vld [vmem:[#allocation2 + $0x130] sm:$0xff]
  %v129 = vld [vmem:[#allocation2 + $0x138] sm:$0xff]
  %v130 = vld [vmem:[#allocation2 + $0x140] sm:$0xff]
  %v131 = vld [vmem:[#allocation2 + $0x148] sm:$0xff]
  %v132 = vld [vmem:[#allocation2 + $0x150] sm:$0xff]
  %v133 = vld [vmem:[#allocation2 + $0x158] sm:$0xff]
  %v134 = vld [vmem:[#allocation2 + $0x160] sm:$0xff]
  %v135 = vld [vmem:[#allocation2 + $0x168] sm:$0xff]
  %v136 = vld [vmem:[#allocation2 + $0x170] sm:$0xff]
  %v137 = vld [vmem:[#allocation2 + $0x178] sm:$0xff]
  %v138 = vld [vmem:[#allocation2 + $0x180] sm:$0xff]
  %v139 = vld [vmem:[#allocation2 + $0x188] sm:$0xff]
  %v140 = vld [vmem:[#allocation2 + $0x190] sm:$0xff]
  %v141 = vld [vmem:[#allocation2 + $0x198] sm:$0xff]
  %v142 = vld [vmem:[#allocation2 + $0x1a0] sm:$0xff]
  %v143 = vld [vmem:[#allocation2 + $0x1a8] sm:$0xff]
  %v144 = vld [vmem:[#allocation2 + $0x1b0] sm:$0xff]
  %v145 = vld [vmem:[#allocation2 + $0x1b8] sm:$0xff]
  %v146 = vld [vmem:[#allocation2 + $0x1c0] sm:$0xff]
  %v147 = vld [vmem:[#allocation2 + $0x1c8] sm:$0xff]
  %v148 = vld [vmem:[#allocation2 + $0x1d0] sm:$0xff]
  %v149 = vld [vmem:[#allocation2 + $0x1d8] sm:$0xff]
  %v150 = vld [vmem:[#allocation2 + $0x1e0] sm:$0xff]
  %v151 = vld [vmem:[#allocation2 + $0x1e8] sm:$0xff]
  %v152 = vld [vmem:[#allocation2 + $0x1f0] sm:$0xff]
  %v153 = vld [vmem:[#allocation2 + $0x1f8] sm:$0xff]
  %v154 = vld [vmem:[%s0] sm:$0xf]
  %v155 = vld [vmem:[%s0 + $0x4] sm:$0xf]
  %v156 = vld [vmem:[%s0 + $0x8] sm:$0xf]
  %v157 = vld [vmem:[%s0 + $0xc] sm:$0xf]
  %v158 = vld [vmem:[%s0 + $0x10] sm:$0xf]
  %v159 = vld [vmem:[%s0 + $0x14] sm:$0xf]
  %v160 = vld [vmem:[%s0 + $0x18] sm:$0xf]
  %v161 = vld [vmem:[%s0 + $0x1c] sm:$0xf]
  %v162 = vld [vmem:[%s0 + $0x20] sm:$0xf]
  %v163 = vld [vmem:[%s0 + $0x24] sm:$0xf]
  %v164 = vld [vmem:[%s0 + $0x28] sm:$0xf]
  %v165 = vld [vmem:[%s0 + $0x2c] sm:$0xf]
  %v166 = vld [vmem:[%s0 + $0x30] sm:$0xf]
  %v167 = vld [vmem:[%s0 + $0x34] sm:$0xf]
  %v168 = vld [vmem:[%s0 + $0x38] sm:$0xf]
  %v169 = vld [vmem:[%s0 + $0x3c] sm:$0xf]
  %v170 = vld [vmem:[%s0 + $0x40] sm:$0xf]
  %v171 = vld [vmem:[%s0 + $0x44] sm:$0xf]
  %v172 = vld [vmem:[%s0 + $0x48] sm:$0xf]
  %v173 = vld [vmem:[%s0 + $0x4c] sm:$0xf]
  %v174 = vld [vmem:[%s0 + $0x50] sm:$0xf]
  %v175 = vld [vmem:[%s0 + $0x54] sm:$0xf]
  %v176 = vld [vmem:[%s0 + $0x58] sm:$0xf]
  %v177 = vld [vmem:[%s0 + $0x5c] sm:$0xf]
  %v178 = vld [vmem:[%s0 + $0x60] sm:$0xf]
  %v179 = vld [vmem:[%s0 + $0x64] sm:$0xf]
  %v180 = vld [vmem:[%s0 + $0x68] sm:$0xf]
  %v181 = vld [vmem:[%s0 + $0x6c] sm:$0xf]
  %v182 = vld [vmem:[%s0 + $0x70] sm:$0xf]
  %v183 = vld [vmem:[%s0 + $0x74] sm:$0xf]
  %v184 = vld [vmem:[%s0 + $0x78] sm:$0xf]
  %v185 = vld [vmem:[%s0 + $0x7c] sm:$0xf]
  %v186 = vld [vmem:[%s0 + $0x80] sm:$0xf]
  %v187 = vld [vmem:[%s0 + $0x84] sm:$0xf]
  %v188 = vld [vmem:[%s0 + $0x88] sm:$0xf]
  %v189 = vld [vmem:[%s0 + $0x8c] sm:$0xf]
  %v190 = vld [vmem:[%s0 + $0x90] sm:$0xf]
  %v191 = vld [vmem:[%s0 + $0x94] sm:$0xf]
  %v192 = vld [vmem:[%s0 + $0x98] sm:$0xf]
  %v193 = vld [vmem:[%s0 + $0x9c] sm:$0xf]
  %v194 = vld [vmem:[%s0 + $0xa0] sm:$0xf]
  %v195 = vld [vmem:[%s0 + $0xa4] sm:$0xf]
  %v196 = vld [vmem:[%s0 + $0xa8] sm:$0xf]
  %v197 = vld [vmem:[%s0 + $0xac] sm:$0xf]
  %v198 = vld [vmem:[%s0 + $0xb0] sm:$0xf]
  %v199 = vld [vmem:[%s0 + $0xb4] sm:$0xf]
  %v200 = vld [vmem:[%s0 + $0xb8] sm:$0xf]
  %v201 = vld [vmem:[%s0 + $0xbc] sm:$0xf]
  %v202 = vld [vmem:[%s0 + $0xc0] sm:$0xf]
  %v203 = vld [vmem:[%s0 + $0xc4] sm:$0xf]
  %v204 = vld [vmem:[%s0 + $0xc8] sm:$0xf]
  %v205 = vld [vmem:[%s0 + $0xcc] sm:$0xf]
  %v206 = vld [vmem:[%s0 + $0xd0] sm:$0xf]
  %v207 = vld [vmem:[%s0 + $0xd4] sm:$0xf]
  %v208 = vld [vmem:[%s0 + $0xd8] sm:$0xf]
  %v209 = vld [vmem:[%s0 + $0xdc] sm:$0xf]
  %v210 = vld [vmem:[%s0 + $0xe0] sm:$0xf]
  %v211 = vld [vmem:[%s0 + $0xe4] sm:$0xf]
  %v212 = vld [vmem:[%s0 + $0xe8] sm:$0xf]
  %v213 = vld [vmem:[%s0 + $0xec] sm:$0xf]
  %v214 = vld [vmem:[%s0 + $0xf0] sm:$0xf]
  %v215 = vld [vmem:[%s0 + $0xf4] sm:$0xf]
  %v216 = vld [vmem:[%s0 + $0xf8] sm:$0xf]
  %v217 = vld [vmem:[%s0 + $0xfc] sm:$0xf]
  %v218 = vld [vmem:[%s1] sm:$0xf]
  %v219 = vld [vmem:[%s1 + $0x4] sm:$0xf]
  %v220 = vld [vmem:[%s1 + $0x8] sm:$0xf]
  %v221 = vld [vmem:[%s1 + $0xc] sm:$0xf]
  %v222 = vld [vmem:[%s1 + $0x10] sm:$0xf]
  %v223 = vld [vmem:[%s1 + $0x14] sm:$0xf]
  %v224 = vld [vmem:[%s1 + $0x18] sm:$0xf]
  %v225 = vld [vmem:[%s1 + $0x1c] sm:$0xf]
  %v226 = vld [vmem:[%s1 + $0x20] sm:$0xf]
  %v227 = vld [vmem:[%s1 + $0x24] sm:$0xf]
  %v228 = vld [vmem:[%s1 + $0x28] sm:$0xf]
  %v229 = vld [vmem:[%s1 + $0x2c] sm:$0xf]
  %v230 = vld [vmem:[%s1 + $0x30] sm:$0xf]
  %v231 = vld [vmem:[%s1 + $0x34] sm:$0xf]
  %v232 = vld [vmem:[%s1 + $0x38] sm:$0xf]
  %v233 = vld [vmem:[%s1 + $0x3c] sm:$0xf]
  %v298 = vunpack.c.l.b16 %v154
  %v299 = vunpack.c.l.b16 %v155
  %v300 = vunpack.c.l.b16 %v156
  %v301 = vunpack.c.l.b16 %v157
  %v302 = vunpack.c.l.b16 %v158
  %v303 = vunpack.c.l.b16 %v159
  %v304 = vunpack.c.l.b16 %v160
  %v305 = vunpack.c.l.b16 %v161
  %v306 = vunpack.c.l.b16 %v162
  %v307 = vunpack.c.l.b16 %v163
  %v308 = vunpack.c.l.b16 %v164
  %v309 = vunpack.c.l.b16 %v165
  %v310 = vunpack.c.l.b16 %v166
  %v311 = vunpack.c.l.b16 %v167
  %v312 = vunpack.c.l.b16 %v168
  %v313 = vunpack.c.l.b16 %v169
  %v314 = vunpack.c.l.b16 %v170
  %v315 = vunpack.c.l.b16 %v171
  %v316 = vunpack.c.l.b16 %v172
  %v317 = vunpack.c.l.b16 %v173
  %v318 = vunpack.c.l.b16 %v174
  %v319 = vunpack.c.l.b16 %v175
  %v320 = vunpack.c.l.b16 %v176
  %v321 = vunpack.c.l.b16 %v177
  %v322 = vunpack.c.l.b16 %v178
  %v323 = vunpack.c.l.b16 %v179
  %v324 = vunpack.c.l.b16 %v180
  %v325 = vunpack.c.l.b16 %v181
  %v326 = vunpack.c.l.b16 %v182
  %v327 = vunpack.c.l.b16 %v183
  %v328 = vunpack.c.l.b16 %v184
  %v329 = vunpack.c.l.b16 %v185
  %v330 = vunpack.c.l.b16 %v186
  %v331 = vunpack.c.l.b16 %v187
  %v332 = vunpack.c.l.b16 %v188
  %v333 = vunpack.c.l.b16 %v189
  %v334 = vunpack.c.l.b16 %v190
  %v335 = vunpack.c.l.b16 %v191
  %v336 = vunpack.c.l.b16 %v192
  %v337 = vunpack.c.l.b16 %v193
  %v338 = vunpack.c.l.b16 %v194
  %v339 = vunpack.c.l.b16 %v195
  %v340 = vunpack.c.l.b16 %v196
  %v341 = vunpack.c.l.b16 %v197
  %v342 = vunpack.c.l.b16 %v198
  %v343 = vunpack.c.l.b16 %v199
  %v344 = vunpack.c.l.b16 %v200
  %v345 = vunpack.c.l.b16 %v201
  %v346 = vunpack.c.l.b16 %v202
  %v347 = vunpack.c.l.b16 %v203
  %v348 = vunpack.c.l.b16 %v204
  %v349 = vunpack.c.l.b16 %v205
  %v350 = vunpack.c.l.b16 %v206
  %v351 = vunpack.c.l.b16 %v207
  %v352 = vunpack.c.l.b16 %v208
  %v353 = vunpack.c.l.b16 %v209
  %v354 = vunpack.c.l.b16 %v210
  %v355 = vunpack.c.l.b16 %v211
  %v356 = vunpack.c.l.b16 %v212
  %v357 = vunpack.c.l.b16 %v213
  %v358 = vunpack.c.l.b16 %v214
  %v359 = vunpack.c.l.b16 %v215
  %v360 = vunpack.c.l.b16 %v216
  %v361 = vunpack.c.l.b16 %v217
  %v362 = vpack.c.b16 %v299, %v298
  %v363 = vpack.c.b16 %v301, %v300
  %v364 = vpack.c.b16 %v303, %v302
  %v365 = vpack.c.b16 %v305, %v304
  %v366 = vpack.c.b16 %v307, %v306
  %v367 = vpack.c.b16 %v309, %v308
  %v368 = vpack.c.b16 %v311, %v310
  %v369 = vpack.c.b16 %v313, %v312
  %v370 = vpack.c.b16 %v315, %v314
  %v371 = vpack.c.b16 %v317, %v316
  %v372 = vpack.c.b16 %v319, %v318
  %v373 = vpack.c.b16 %v321, %v320
  %v374 = vpack.c.b16 %v323, %v322
  %v375 = vpack.c.b16 %v325, %v324
  %v376 = vpack.c.b16 %v327, %v326
  %v377 = vpack.c.b16 %v329, %v328
  %v378 = vpack.c.b16 %v331, %v330
  %v379 = vpack.c.b16 %v333, %v332
  %v380 = vpack.c.b16 %v335, %v334
  %v381 = vpack.c.b16 %v337, %v336
  %v382 = vpack.c.b16 %v339, %v338
  %v383 = vpack.c.b16 %v341, %v340
  %v384 = vpack.c.b16 %v343, %v342
  %v385 = vpack.c.b16 %v345, %v344
  %v386 = vpack.c.b16 %v347, %v346
  %v387 = vpack.c.b16 %v349, %v348
  %v388 = vpack.c.b16 %v351, %v350
  %v389 = vpack.c.b16 %v353, %v352
  %v390 = vpack.c.b16 %v355, %v354
  %v391 = vpack.c.b16 %v357, %v356
  %v392 = vpack.c.b16 %v359, %v358
  %v393 = vpack.c.b16 %v361, %v360
  %v442 = vunpack.c.l.b16 %v218
  %v443 = vunpack.c.l.b16 %v219
  %v444 = vunpack.c.l.b16 %v220
  %v445 = vunpack.c.l.b16 %v221
  %v446 = vunpack.c.l.b16 %v222
  %v447 = vunpack.c.l.b16 %v223
  %v448 = vunpack.c.l.b16 %v224
  %v449 = vunpack.c.l.b16 %v225
  %v450 = vunpack.c.l.b16 %v226
  %v451 = vunpack.c.l.b16 %v227
  %v452 = vunpack.c.l.b16 %v228
  %v453 = vunpack.c.l.b16 %v229
  %v454 = vunpack.c.l.b16 %v230
  %v455 = vunpack.c.l.b16 %v231
  %v456 = vunpack.c.l.b16 %v232
  %v457 = vunpack.c.l.b16 %v233
  %v458 = vpack.c.b16 %v443, %v442
  %v459 = vpack.c.b16 %v445, %v444
  %v460 = vpack.c.b16 %v447, %v446
  %v461 = vpack.c.b16 %v449, %v448
  %v462 = vpack.c.b16 %v451, %v450
  %v463 = vpack.c.b16 %v453, %v452
  %v464 = vpack.c.b16 %v455, %v454
  %v465 = vpack.c.b16 %v457, %v456
  %474 = vmatprep.subr.bf16.mxu0 0
  %475 = vmatpush1.bf16.msra.mxu0 %v458
  %476 = vmatprep.subr.bf16.mxu0 0
  %477 = vmatpush1.bf16.msra.mxu0 %v459
  %478 = vmatprep.subr.bf16.mxu0 0
  %479 = vmatpush1.bf16.msra.mxu0 %v460
  %480 = vmatprep.subr.bf16.mxu0 0
  %481 = vmatpush1.bf16.msra.mxu0 %v461
  %482 = vmatprep.subr.bf16.mxu0 0
  %483 = vmatpush1.bf16.msra.mxu0 %v462
  %484 = vmatprep.subr.bf16.mxu0 0
  %485 = vmatpush1.bf16.msra.mxu0 %v463
  %486 = vmatprep.subr.bf16.mxu0 0
  %487 = vmatpush1.bf16.msra.mxu0 %v464
  %488 = vmatprep.subr.bf16.mxu0 0
  %489 = vmatpush1.bf16.msra.mxu0 %v465
  %490 = vmatprep.subr.bf16.mxu0 0
  %491 = vmatpush1.bf16.msra.mxu0 0
  %492 = vmatprep.subr.bf16.mxu0 0
  %493 = vmatpush1.bf16.msra.mxu0 0
  %494 = vmatprep.subr.bf16.mxu0 0
  %495 = vmatpush1.bf16.msra.mxu0 0
  %496 = vmatprep.subr.bf16.mxu0 0
  %497 = vmatpush1.bf16.msra.mxu0 0
  %498 = vmatprep.subr.bf16.mxu0 0
  %499 = vmatpush1.bf16.msra.mxu0 0
  %500 = vmatprep.subr.bf16.mxu0 0
  %501 = vmatpush1.bf16.msra.mxu0 0
  %502 = vmatprep.subr.bf16.mxu0 0
  %503 = vmatpush1.bf16.msra.mxu0 0
  %504 = vmatprep.subr.bf16.mxu0 0
  %505 = vmatpush1.bf16.msra.mxu0 0
  %506 = vmatprep.mubr.bf16.mxu0 0
  %507 = vmatmul.mubr.bf16.gmra.mrb[0].mxu0 %v362
  %v508 = vpop.f32.mrb[0].mxu0
  %v509 = vadd.f32 0.0, %v508
  %v510 = vpop.f32.mrb[0].mxu0
  %v511 = vpop.f32.mrb[0].mxu0
  %v512 = vadd.f32 0.0, %v511
  %v513 = vpop.f32.mrb[0].mxu0
  %514 = vmatprep.mubr.bf16.mxu0 0
  %515 = vmatmul.mubr.bf16.gmra.mrb[0].mxu0 %v363
  %v516 = vpop.f32.mrb[0].mxu0
  %v517 = vadd.f32 0.0, %v516
  %v518 = vpop.f32.mrb[0].mxu0
  %v519 = vpop.f32.mrb[0].mxu0
  %v520 = vadd.f32 0.0, %v519
  %v521 = vpop.f32.mrb[0].mxu0
  %522 = vmatprep.mubr.bf16.mxu0 0
  %523 = vmatmul.mubr.bf16.gmra.mrb[0].mxu0 %v364
  %v524 = vpop.f32.mrb[0].mxu0
  %v525 = vadd.f32 0.0, %v524
  %v526 = vpop.f32.mrb[0].mxu0
  %v527 = vpop.f32.mrb[0].mxu0
  %v528 = vadd.f32 0.0, %v527
  %v529 = vpop.f32.mrb[0].mxu0
  %530 = vmatprep.mubr.bf16.mxu0 0
  %531 = vmatmul.mubr.bf16.gmra.mrb[0].mxu0 %v365
  %v532 = vpop.f32.mrb[0].mxu0
  %v533 = vadd.f32 0.0, %v532
  %v534 = vpop.f32.mrb[0].mxu0
  %v535 = vpop.f32.mrb[0].mxu0
  %v536 = vadd.f32 0.0, %v535
  %v537 = vpop.f32.mrb[0].mxu0
  %538 = vmatprep.mubr.bf16.mxu0 0
  %539 = vmatmul.mubr.bf16.gmra.mrb[0].mxu0 %v366
  %v540 = vpop.f32.mrb[0].mxu0
  %v541 = vadd.f32 0.0, %v540
  %v542 = vpop.f32.mrb[0].mxu0
  %v543 = vpop.f32.mrb[0].mxu0
  %v544 = vadd.f32 0.0, %v543
  %v545 = vpop.f32.mrb[0].mxu0
  %546 = vmatprep.mubr.bf16.mxu0 0
  %547 = vmatmul.mubr.bf16.gmra.mrb[0].mxu0 %v367
  %v548 = vpop.f32.mrb[0].mxu0
  %v549 = vadd.f32 0.0, %v548
  %v550 = vpop.f32.mrb[0].mxu0
  %v551 = vpop.f32.mrb[0].mxu0
  %v552 = vadd.f32 0.0, %v551
  %v553 = vpop.f32.mrb[0].mxu0
  %554 = vmatprep.mubr.bf16.mxu0 0
  %555 = vmatmul.mubr.bf16.gmra.mrb[0].mxu0 %v368
  %v556 = vpop.f32.mrb[0].mxu0
  %v557 = vadd.f32 0.0, %v556
  %v558 = vpop.f32.mrb[0].mxu0
  %v559 = vpop.f32.mrb[0].mxu0
  %v560 = vadd.f32 0.0, %v559
  %v561 = vpop.f32.mrb[0].mxu0
  %562 = vmatprep.mubr.bf16.mxu0 0
  %563 = vmatmul.mubr.bf16.gmra.mrb[0].mxu0 %v369
  %v564 = vpop.f32.mrb[0].mxu0
  %v565 = vadd.f32 0.0, %v564
  %v566 = vpop.f32.mrb[0].mxu0
  %v567 = vpop.f32.mrb[0].mxu0
  %v568 = vadd.f32 0.0, %v567
  %v569 = vpop.f32.mrb[0].mxu0
  %570 = vmatprep.mubr.bf16.mxu0 0
  %571 = vmatmul.mubr.bf16.gmra.mrb[0].mxu0 %v370
  %v572 = vpop.f32.mrb[0].mxu0
  %v573 = vadd.f32 0.0, %v572
  %v574 = vpop.f32.mrb[0].mxu0
  %v575 = vpop.f32.mrb[0].mxu0
  %v576 = vadd.f32 0.0, %v575
  %v577 = vpop.f32.mrb[0].mxu0
  %578 = vmatprep.mubr.bf16.mxu0 0
  %579 = vmatmul.mubr.bf16.gmra.mrb[0].mxu0 %v371
  %v580 = vpop.f32.mrb[0].mxu0
  %v581 = vadd.f32 0.0, %v580
  %v582 = vpop.f32.mrb[0].mxu0
  %v583 = vpop.f32.mrb[0].mxu0
  %v584 = vadd.f32 0.0, %v583
  %v585 = vpop.f32.mrb[0].mxu0
  %586 = vmatprep.mubr.bf16.mxu0 0
  %587 = vmatmul.mubr.bf16.gmra.mrb[0].mxu0 %v372
  %v588 = vpop.f32.mrb[0].mxu0
  %v589 = vadd.f32 0.0, %v588
  %v590 = vpop.f32.mrb[0].mxu0
  %v591 = vpop.f32.mrb[0].mxu0
  %v592 = vadd.f32 0.0, %v591
  %v593 = vpop.f32.mrb[0].mxu0
  %594 = vmatprep.mubr.bf16.mxu0 0
  %595 = vmatmul.mubr.bf16.gmra.mrb[0].mxu0 %v373
  %v596 = vpop.f32.mrb[0].mxu0
  %v597 = vadd.f32 0.0, %v596
  %v598 = vpop.f32.mrb[0].mxu0
  %v599 = vpop.f32.mrb[0].mxu0
  %v600 = vadd.f32 0.0, %v599
  %v601 = vpop.f32.mrb[0].mxu0
  %602 = vmatprep.mubr.bf16.mxu0 0
  %603 = vmatmul.mubr.bf16.gmra.mrb[0].mxu0 %v374
  %v604 = vpop.f32.mrb[0].mxu0
  %v605 = vadd.f32 0.0, %v604
  %v606 = vpop.f32.mrb[0].mxu0
  %v607 = vpop.f32.mrb[0].mxu0
  %v608 = vadd.f32 0.0, %v607
  %v609 = vpop.f32.mrb[0].mxu0
  %610 = vmatprep.mubr.bf16.mxu0 0
  %611 = vmatmul.mubr.bf16.gmra.mrb[0].mxu0 %v375
  %v612 = vpop.f32.mrb[0].mxu0
  %v613 = vadd.f32 0.0, %v612
  %v614 = vpop.f32.mrb[0].mxu0
  %v615 = vpop.f32.mrb[0].mxu0
  %v616 = vadd.f32 0.0, %v615
  %v617 = vpop.f32.mrb[0].mxu0
  %618 = vmatprep.mubr.bf16.mxu0 0
  %619 = vmatmul.mubr.bf16.gmra.mrb[0].mxu0 %v376
  %v620 = vpop.f32.mrb[0].mxu0
  %v621 = vadd.f32 0.0, %v620
  %v622 = vpop.f32.mrb[0].mxu0
  %v623 = vpop.f32.mrb[0].mxu0
  %v624 = vadd.f32 0.0, %v623
  %v625 = vpop.f32.mrb[0].mxu0
  %626 = vmatprep.mubr.bf16.mxu0 0
  %627 = vmatmul.mubr.bf16.gmra.mrb[0].mxu0 %v377
  %v628 = vpop.f32.mrb[0].mxu0
  %v629 = vadd.f32 0.0, %v628
  %v630 = vpop.f32.mrb[0].mxu0
  %v631 = vpop.f32.mrb[0].mxu0
  %v632 = vadd.f32 0.0, %v631
  %v633 = vpop.f32.mrb[0].mxu0
  %634 = vmatprep.mubr.bf16.mxu0 0
  %635 = vmatmul.mubr.bf16.gmra.mrb[0].mxu0 %v378
  %v636 = vpop.f32.mrb[0].mxu0
  %v637 = vadd.f32 0.0, %v636
  %v638 = vpop.f32.mrb[0].mxu0
  %v639 = vpop.f32.mrb[0].mxu0
  %v640 = vadd.f32 0.0, %v639
  %v641 = vpop.f32.mrb[0].mxu0
  %642 = vmatprep.mubr.bf16.mxu0 0
  %643 = vmatmul.mubr.bf16.gmra.mrb[0].mxu0 %v379
  %v644 = vpop.f32.mrb[0].mxu0
  %v645 = vadd.f32 0.0, %v644
  %v646 = vpop.f32.mrb[0].mxu0
  %v647 = vpop.f32.mrb[0].mxu0
  %v648 = vadd.f32 0.0, %v647
  %v649 = vpop.f32.mrb[0].mxu0
  %650 = vmatprep.mubr.bf16.mxu0 0
  %651 = vmatmul.mubr.bf16.gmra.mrb[0].mxu0 %v380
  %v652 = vpop.f32.mrb[0].mxu0
  %v653 = vadd.f32 0.0, %v652
  %v654 = vpop.f32.mrb[0].mxu0
  %v655 = vpop.f32.mrb[0].mxu0
  %v656 = vadd.f32 0.0, %v655
  %v657 = vpop.f32.mrb[0].mxu0
  %658 = vmatprep.mubr.bf16.mxu0 0
  %659 = vmatmul.mubr.bf16.gmra.mrb[0].mxu0 %v381
  %v660 = vpop.f32.mrb[0].mxu0
  %v661 = vadd.f32 0.0, %v660
  %v662 = vpop.f32.mrb[0].mxu0
  %v663 = vpop.f32.mrb[0].mxu0
  %v664 = vadd.f32 0.0, %v663
  %v665 = vpop.f32.mrb[0].mxu0
  %666 = vmatprep.mubr.bf16.mxu0 0
  %667 = vmatmul.mubr.bf16.gmra.mrb[0].mxu0 %v382
  %v668 = vpop.f32.mrb[0].mxu0
  %v669 = vadd.f32 0.0, %v668
  %v670 = vpop.f32.mrb[0].mxu0
  %v671 = vpop.f32.mrb[0].mxu0
  %v672 = vadd.f32 0.0, %v671
  %v673 = vpop.f32.mrb[0].mxu0
  %674 = vmatprep.mubr.bf16.mxu0 0
  %675 = vmatmul.mubr.bf16.gmra.mrb[0].mxu0 %v383
  %v676 = vpop.f32.mrb[0].mxu0
  %v677 = vadd.f32 0.0, %v676
  %v678 = vpop.f32.mrb[0].mxu0
  %v679 = vpop.f32.mrb[0].mxu0
  %v680 = vadd.f32 0.0, %v679
  %v681 = vpop.f32.mrb[0].mxu0
  %682 = vmatprep.mubr.bf16.mxu0 0
  %683 = vmatmul.mubr.bf16.gmra.mrb[0].mxu0 %v384
  %v684 = vpop.f32.mrb[0].mxu0
  %v685 = vadd.f32 0.0, %v684
  %v686 = vpop.f32.mrb[0].mxu0
  %v687 = vpop.f32.mrb[0].mxu0
  %v688 = vadd.f32 0.0, %v687
  %v689 = vpop.f32.mrb[0].mxu0
  %690 = vmatprep.mubr.bf16.mxu0 0
  %691 = vmatmul.mubr.bf16.gmra.mrb[0].mxu0 %v385
  %v692 = vpop.f32.mrb[0].mxu0
  %v693 = vadd.f32 0.0, %v692
  %v694 = vpop.f32.mrb[0].mxu0
  %v695 = vpop.f32.mrb[0].mxu0
  %v696 = vadd.f32 0.0, %v695
  %v697 = vpop.f32.mrb[0].mxu0
  %698 = vmatprep.mubr.bf16.mxu0 0
  %699 = vmatmul.mubr.bf16.gmra.mrb[0].mxu0 %v386
  %v700 = vpop.f32.mrb[0].mxu0
  %v701 = vadd.f32 0.0, %v700
  %v702 = vpop.f32.mrb[0].mxu0
  %v703 = vpop.f32.mrb[0].mxu0
  %v704 = vadd.f32 0.0, %v703
  %v705 = vpop.f32.mrb[0].mxu0
  %706 = vmatprep.mubr.bf16.mxu0 0
  %707 = vmatmul.mubr.bf16.gmra.mrb[0].mxu0 %v387
  %v708 = vpop.f32.mrb[0].mxu0
  %v709 = vadd.f32 0.0, %v708
  %v710 = vpop.f32.mrb[0].mxu0
  %v711 = vpop.f32.mrb[0].mxu0
  %v712 = vadd.f32 0.0, %v711
  %v713 = vpop.f32.mrb[0].mxu0
  %714 = vmatprep.mubr.bf16.mxu0 0
  %715 = vmatmul.mubr.bf16.gmra.mrb[0].mxu0 %v388
  %v716 = vpop.f32.mrb[0].mxu0
  %v717 = vadd.f32 0.0, %v716
  %v718 = vpop.f32.mrb[0].mxu0
  %v719 = vpop.f32.mrb[0].mxu0
  %v720 = vadd.f32 0.0, %v719
  %v721 = vpop.f32.mrb[0].mxu0
  %722 = vmatprep.mubr.bf16.mxu0 0
  %723 = vmatmul.mubr.bf16.gmra.mrb[0].mxu0 %v389
  %v724 = vpop.f32.mrb[0].mxu0
  %v725 = vadd.f32 0.0, %v724
  %v726 = vpop.f32.mrb[0].mxu0
  %v727 = vpop.f32.mrb[0].mxu0
  %v728 = vadd.f32 0.0, %v727
  %v729 = vpop.f32.mrb[0].mxu0
  %730 = vmatprep.mubr.bf16.mxu0 0
  %731 = vmatmul.mubr.bf16.gmra.mrb[0].mxu0 %v390
  %v732 = vpop.f32.mrb[0].mxu0
  %v733 = vadd.f32 0.0, %v732
  %v734 = vpop.f32.mrb[0].mxu0
  %v735 = vpop.f32.mrb[0].mxu0
  %v736 = vadd.f32 0.0, %v735
  %v737 = vpop.f32.mrb[0].mxu0
  %738 = vmatprep.mubr.bf16.mxu0 0
  %739 = vmatmul.mubr.bf16.gmra.mrb[0].mxu0 %v391
  %v740 = vpop.f32.mrb[0].mxu0
  %v741 = vadd.f32 0.0, %v740
  %v742 = vpop.f32.mrb[0].mxu0
  %v743 = vpop.f32.mrb[0].mxu0
  %v744 = vadd.f32 0.0, %v743
  %v745 = vpop.f32.mrb[0].mxu0
  %746 = vmatprep.mubr.bf16.mxu0 0
  %747 = vmatmul.mubr.bf16.gmra.mrb[0].mxu0 %v392
  %v748 = vpop.f32.mrb[0].mxu0
  %v749 = vadd.f32 0.0, %v748
  %v750 = vpop.f32.mrb[0].mxu0
  %v751 = vpop.f32.mrb[0].mxu0
  %v752 = vadd.f32 0.0, %v751
  %v753 = vpop.f32.mrb[0].mxu0
  %754 = vmatprep.mubr.bf16.mxu0 0
  %755 = vmatmul.mubr.bf16.gmra.mrb[0].mxu0 %v393
  %v756 = vpop.f32.mrb[0].mxu0
  %v757 = vadd.f32 0.0, %v756
  %v758 = vpop.f32.mrb[0].mxu0
  %v759 = vpop.f32.mrb[0].mxu0
  %v760 = vadd.f32 0.0, %v759
  %v761 = vpop.f32.mrb[0].mxu0
  %762 = vdwg.mxu0
  %v763 = vadd.f32 %v90, %v509
  %v764 = vadd.f32 %v91, %v512
  %v765 = vadd.f32 %v92, %v517
  %v766 = vadd.f32 %v93, %v520
  %v767 = vadd.f32 %v94, %v525
  %v768 = vadd.f32 %v95, %v528
  %v769 = vadd.f32 %v96, %v533
  %v770 = vadd.f32 %v97, %v536
  %v771 = vadd.f32 %v98, %v541
  %v772 = vadd.f32 %v99, %v544
  %v773 = vadd.f32 %v100, %v549
  %v774 = vadd.f32 %v101, %v552
  %v775 = vadd.f32 %v102, %v557
  %v776 = vadd.f32 %v103, %v560
  %v777 = vadd.f32 %v104, %v565
  %v778 = vadd.f32 %v105, %v568
  %v779 = vadd.f32 %v106, %v573
  %v780 = vadd.f32 %v107, %v576
  %v781 = vadd.f32 %v108, %v581
  %v782 = vadd.f32 %v109, %v584
  %v783 = vadd.f32 %v110, %v589
  %v784 = vadd.f32 %v111, %v592
  %v785 = vadd.f32 %v112, %v597
  %v786 = vadd.f32 %v113, %v600
  %v787 = vadd.f32 %v114, %v605
  %v788 = vadd.f32 %v115, %v608
  %v789 = vadd.f32 %v116, %v613
  %v790 = vadd.f32 %v117, %v616
  %v791 = vadd.f32 %v118, %v621
  %v792 = vadd.f32 %v119, %v624
  %v793 = vadd.f32 %v120, %v629
  %v794 = vadd.f32 %v121, %v632
  %v795 = vadd.f32 %v122, %v637
  %v796 = vadd.f32 %v123, %v640
  %v797 = vadd.f32 %v124, %v645
  %v798 = vadd.f32 %v125, %v648
  %v799 = vadd.f32 %v126, %v653
  %v800 = vadd.f32 %v127, %v656
  %v801 = vadd.f32 %v128, %v661
  %v802 = vadd.f32 %v129, %v664
  %v803 = vadd.f32 %v130, %v669
  %v804 = vadd.f32 %v131, %v672
  %v805 = vadd.f32 %v132, %v677
  %v806 = vadd.f32 %v133, %v680
  %v807 = vadd.f32 %v134, %v685
  %v808 = vadd.f32 %v135, %v688
  %v809 = vadd.f32 %v136, %v693
  %v810 = vadd.f32 %v137, %v696
  %v811 = vadd.f32 %v138, %v701
  %v812 = vadd.f32 %v139, %v704
  %v813 = vadd.f32 %v140, %v709
  %v814 = vadd.f32 %v141, %v712
  %v815 = vadd.f32 %v142, %v717
  %v816 = vadd.f32 %v143, %v720
  %v817 = vadd.f32 %v144, %v725
  %v818 = vadd.f32 %v145, %v728
  %v819 = vadd.f32 %v146, %v733
  %v820 = vadd.f32 %v147, %v736
  %v821 = vadd.f32 %v148, %v741
  %v822 = vadd.f32 %v149, %v744
  %v823 = vadd.f32 %v150, %v749
  %v824 = vadd.f32 %v151, %v752
  %v825 = vadd.f32 %v152, %v757
  %v826 = vadd.f32 %v153, %v760
  %827 = vst [vmem:[#allocation2] sm:$0xff] %v763
  %828 = vst [vmem:[#allocation2 + $0x8] sm:$0xff] %v764
  %829 = vst [vmem:[#allocation2 + $0x10] sm:$0xff] %v765
  %830 = vst [vmem:[#allocation2 + $0x18] sm:$0xff] %v766
  %831 = vst [vmem:[#allocation2 + $0x20] sm:$0xff] %v767
  %832 = vst [vmem:[#allocation2 + $0x28] sm:$0xff] %v768
  %833 = vst [vmem:[#allocation2 + $0x30] sm:$0xff] %v769
  %834 = vst [vmem:[#allocation2 + $0x38] sm:$0xff] %v770
  %835 = vst [vmem:[#allocation2 + $0x40] sm:$0xff] %v771
  %836 = vst [vmem:[#allocation2 + $0x48] sm:$0xff] %v772
  %837 = vst [vmem:[#allocation2 + $0x50] sm:$0xff] %v773
  %838 = vst [vmem:[#allocation2 + $0x58] sm:$0xff] %v774
  %839 = vst [vmem:[#allocation2 + $0x60] sm:$0xff] %v775
  %840 = vst [vmem:[#allocation2 + $0x68] sm:$0xff] %v776
  %841 = vst [vmem:[#allocation2 + $0x70] sm:$0xff] %v777
  %842 = vst [vmem:[#allocation2 + $0x78] sm:$0xff] %v778
  %843 = vst [vmem:[#allocation2 + $0x80] sm:$0xff] %v779
  %844 = vst [vmem:[#allocation2 + $0x88] sm:$0xff] %v780
  %845 = vst [vmem:[#allocation2 + $0x90] sm:$0xff] %v781
  %846 = vst [vmem:[#allocation2 + $0x98] sm:$0xff] %v782
  %847 = vst [vmem:[#allocation2 + $0xa0] sm:$0xff] %v783
  %848 = vst [vmem:[#allocation2 + $0xa8] sm:$0xff] %v784
  %849 = vst [vmem:[#allocation2 + $0xb0] sm:$0xff] %v785
  %850 = vst [vmem:[#allocation2 + $0xb8] sm:$0xff] %v786
  %851 = vst [vmem:[#allocation2 + $0xc0] sm:$0xff] %v787
  %852 = vst [vmem:[#allocation2 + $0xc8] sm:$0xff] %v788
  %853 = vst [vmem:[#allocation2 + $0xd0] sm:$0xff] %v789
  %854 = vst [vmem:[#allocation2 + $0xd8] sm:$0xff] %v790
  %855 = vst [vmem:[#allocation2 + $0xe0] sm:$0xff] %v791
  %856 = vst [vmem:[#allocation2 + $0xe8] sm:$0xff] %v792
  %857 = vst [vmem:[#allocation2 + $0xf0] sm:$0xff] %v793
  %858 = vst [vmem:[#allocation2 + $0xf8] sm:$0xff] %v794
  %859 = vst [vmem:[#allocation2 + $0x100] sm:$0xff] %v795
  %860 = vst [vmem:[#allocation2 + $0x108] sm:$0xff] %v796
  %861 = vst [vmem:[#allocation2 + $0x110] sm:$0xff] %v797
  %862 = vst [vmem:[#allocation2 + $0x118] sm:$0xff] %v798
  %863 = vst [vmem:[#allocation2 + $0x120] sm:$0xff] %v799
  %864 = vst [vmem:[#allocation2 + $0x128] sm:$0xff] %v800
  %865 = vst [vmem:[#allocation2 + $0x130] sm:$0xff] %v801
  %866 = vst [vmem:[#allocation2 + $0x138] sm:$0xff] %v802
  %867 = vst [vmem:[#allocation2 + $0x140] sm:$0xff] %v803
  %868 = vst [vmem:[#allocation2 + $0x148] sm:$0xff] %v804
  %869 = vst [vmem:[#allocation2 + $0x150] sm:$0xff] %v805
  %870 = vst [vmem:[#allocation2 + $0x158] sm:$0xff] %v806
  %871 = vst [vmem:[#allocation2 + $0x160] sm:$0xff] %v807
  %872 = vst [vmem:[#allocation2 + $0x168] sm:$0xff] %v808
  %873 = vst [vmem:[#allocation2 + $0x170] sm:$0xff] %v809
  %874 = vst [vmem:[#allocation2 + $0x178] sm:$0xff] %v810
  %875 = vst [vmem:[#allocation2 + $0x180] sm:$0xff] %v811
  %876 = vst [vmem:[#allocation2 + $0x188] sm:$0xff] %v812
  %877 = vst [vmem:[#allocation2 + $0x190] sm:$0xff] %v813
  %878 = vst [vmem:[#allocation2 + $0x198] sm:$0xff] %v814
  %879 = vst [vmem:[#allocation2 + $0x1a0] sm:$0xff] %v815
  %880 = vst [vmem:[#allocation2 + $0x1a8] sm:$0xff] %v816
  %881 = vst [vmem:[#allocation2 + $0x1b0] sm:$0xff] %v817
  %882 = vst [vmem:[#allocation2 + $0x1b8] sm:$0xff] %v818
  %883 = vst [vmem:[#allocation2 + $0x1c0] sm:$0xff] %v819
  %884 = vst [vmem:[#allocation2 + $0x1c8] sm:$0xff] %v820
  %885 = vst [vmem:[#allocation2 + $0x1d0] sm:$0xff] %v821
  %886 = vst [vmem:[#allocation2 + $0x1d8] sm:$0xff] %v822
  %887 = vst [vmem:[#allocation2 + $0x1e0] sm:$0xff] %v823
  %888 = vst [vmem:[#allocation2 + $0x1e8] sm:$0xff] %v824
  %889 = vst [vmem:[#allocation2 + $0x1f0] sm:$0xff] %v825
  %890 = vst [vmem:[#allocation2 + $0x1f8] sm:$0xff] %v826
  // Predicated region
  $region18: #{bottleneck_forward.6} parent=0 // pred_check
    %p891 = pneg %p15
  $region19: #{bottleneck_forward.6} parent=0 // pred_check_branch
    %893 = sbr.rel (%p891) target = $region21
  $region20: #{bottleneck_forward.6} parent=0 // pred_region
    %v894 = vld [vmem:[#allocation2] sm:$0xff]
    %v895 = vld [vmem:[#allocation2 + $0x8] sm:$0xff]
    %v896 = vld [vmem:[#allocation2 + $0x10] sm:$0xff]
    %v897 = vld [vmem:[#allocation2 + $0x18] sm:$0xff]
    %v898 = vld [vmem:[#allocation2 + $0x20] sm:$0xff]
    %v899 = vld [vmem:[#allocation2 + $0x28] sm:$0xff]
    %v900 = vld [vmem:[#allocation2 + $0x30] sm:$0xff]
    %v901 = vld [vmem:[#allocation2 + $0x38] sm:$0xff]
    %v902 = vld [vmem:[#allocation2 + $0x40] sm:$0xff]
    %v903 = vld [vmem:[#allocation2 + $0x48] sm:$0xff]
    %v904 = vld [vmem:[#allocation2 + $0x50] sm:$0xff]
    %v905 = vld [vmem:[#allocation2 + $0x58] sm:$0xff]
    %v906 = vld [vmem:[#allocation2 + $0x60] sm:$0xff]
    %v907 = vld [vmem:[#allocation2 + $0x68] sm:$0xff]
    %v908 = vld [vmem:[#allocation2 + $0x70] sm:$0xff]
    %v909 = vld [vmem:[#allocation2 + $0x78] sm:$0xff]
    %v910 = vld [vmem:[#allocation2 + $0x80] sm:$0xff]
    %v911 = vld [vmem:[#allocation2 + $0x88] sm:$0xff]
    %v912 = vld [vmem:[#allocation2 + $0x90] sm:$0xff]
    %v913 = vld [vmem:[#allocation2 + $0x98] sm:$0xff]
    %v914 = vld [vmem:[#allocation2 + $0xa0] sm:$0xff]
    %v915 = vld [vmem:[#allocation2 + $0xa8] sm:$0xff]
    %v916 = vld [vmem:[#allocation2 + $0xb0] sm:$0xff]
    %v917 = vld [vmem:[#allocation2 + $0xb8] sm:$0xff]
    %v918 = vld [vmem:[#allocation2 + $0xc0] sm:$0xff]
    %v919 = vld [vmem:[#allocation2 + $0xc8] sm:$0xff]
    %v920 = vld [vmem:[#allocation2 + $0xd0] sm:$0xff]
    %v921 = vld [vmem:[#allocation2 + $0xd8] sm:$0xff]
    %v922 = vld [vmem:[#allocation2 + $0xe0] sm:$0xff]
    %v923 = vld [vmem:[#allocation2 + $0xe8] sm:$0xff]
    %v924 = vld [vmem:[#allocation2 + $0xf0] sm:$0xff]
    %v925 = vld [vmem:[#allocation2 + $0xf8] sm:$0xff]
    %v926 = vld [vmem:[#allocation2 + $0x100] sm:$0xff]
    %v927 = vld [vmem:[#allocation2 + $0x108] sm:$0xff]
    %v928 = vld [vmem:[#allocation2 + $0x110] sm:$0xff]
    %v929 = vld [vmem:[#allocation2 + $0x118] sm:$0xff]
    %v930 = vld [vmem:[#allocation2 + $0x120] sm:$0xff]
    %v931 = vld [vmem:[#allocation2 + $0x128] sm:$0xff]
    %v932 = vld [vmem:[#allocation2 + $0x130] sm:$0xff]
    %v933 = vld [vmem:[#allocation2 + $0x138] sm:$0xff]
    %v934 = vld [vmem:[#allocation2 + $0x140] sm:$0xff]
    %v935 = vld [vmem:[#allocation2 + $0x148] sm:$0xff]
    %v936 = vld [vmem:[#allocation2 + $0x150] sm:$0xff]
    %v937 = vld [vmem:[#allocation2 + $0x158] sm:$0xff]
    %v938 = vld [vmem:[#allocation2 + $0x160] sm:$0xff]
    %v939 = vld [vmem:[#allocation2 + $0x168] sm:$0xff]
    %v940 = vld [vmem:[#allocation2 + $0x170] sm:$0xff]
    %v941 = vld [vmem:[#allocation2 + $0x178] sm:$0xff]
    %v942 = vld [vmem:[#allocation2 + $0x180] sm:$0xff]
    %v943 = vld [vmem:[#allocation2 + $0x188] sm:$0xff]
    %v944 = vld [vmem:[#allocation2 + $0x190] sm:$0xff]
    %v945 = vld [vmem:[#allocation2 + $0x198] sm:$0xff]
    %v946 = vld [vmem:[#allocation2 + $0x1a0] sm:$0xff]
    %v947 = vld [vmem:[#allocation2 + $0x1a8] sm:$0xff]
    %v948 = vld [vmem:[#allocation2 + $0x1b0] sm:$0xff]
    %v949 = vld [vmem:[#allocation2 + $0x1b8] sm:$0xff]
    %v950 = vld [vmem:[#allocation2 + $0x1c0] sm:$0xff]
    %v951 = vld [vmem:[#allocation2 + $0x1c8] sm:$0xff]
    %v952 = vld [vmem:[#allocation2 + $0x1d0] sm:$0xff]
    %v953 = vld [vmem:[#allocation2 + $0x1d8] sm:$0xff]
    %v954 = vld [vmem:[#allocation2 + $0x1e0] sm:$0xff]
    %v955 = vld [vmem:[#allocation2 + $0x1e8] sm:$0xff]
    %v956 = vld [vmem:[#allocation2 + $0x1f0] sm:$0xff]
    %v957 = vld [vmem:[#allocation2 + $0x1f8] sm:$0xff]
    %958 = vst [vmem:[%s2] sm:$0xff] %v894
    %959 = vst [vmem:[%s2 + $0x8] sm:$0xff] %v895
    %960 = vst [vmem:[%s2 + $0x10] sm:$0xff] %v896
    %961 = vst [vmem:[%s2 + $0x18] sm:$0xff] %v897
    %962 = vst [vmem:[%s2 + $0x20] sm:$0xff] %v898
    %963 = vst [vmem:[%s2 + $0x28] sm:$0xff] %v899
    %964 = vst [vmem:[%s2 + $0x30] sm:$0xff] %v900
    %965 = vst [vmem:[%s2 + $0x38] sm:$0xff] %v901
    %966 = vst [vmem:[%s2 + $0x40] sm:$0xff] %v902
    %967 = vst [vmem:[%s2 + $0x48] sm:$0xff] %v903
    %968 = vst [vmem:[%s2 + $0x50] sm:$0xff] %v904
    %969 = vst [vmem:[%s2 + $0x58] sm:$0xff] %v905
    %970 = vst [vmem:[%s2 + $0x60] sm:$0xff] %v906
    %971 = vst [vmem:[%s2 + $0x68] sm:$0xff] %v907
    %972 = vst [vmem:[%s2 + $0x70] sm:$0xff] %v908
    %973 = vst [vmem:[%s2 + $0x78] sm:$0xff] %v909
    %974 = vst [vmem:[%s2 + $0x80] sm:$0xff] %v910
    %975 = vst [vmem:[%s2 + $0x88] sm:$0xff] %v911
    %976 = vst [vmem:[%s2 + $0x90] sm:$0xff] %v912
    %977 = vst [vmem:[%s2 + $0x98] sm:$0xff] %v913
    %978 = vst [vmem:[%s2 + $0xa0] sm:$0xff] %v914
    %979 = vst [vmem:[%s2 + $0xa8] sm:$0xff] %v915
    %980 = vst [vmem:[%s2 + $0xb0] sm:$0xff] %v916
    %981 = vst [vmem:[%s2 + $0xb8] sm:$0xff] %v917
    %982 = vst [vmem:[%s2 + $0xc0] sm:$0xff] %v918
    %983 = vst [vmem:[%s2 + $0xc8] sm:$0xff] %v919
    %984 = vst [vmem:[%s2 + $0xd0] sm:$0xff] %v920
    %985 = vst [vmem:[%s2 + $0xd8] sm:$0xff] %v921
    %986 = vst [vmem:[%s2 + $0xe0] sm:$0xff] %v922
    %987 = vst [vmem:[%s2 + $0xe8] sm:$0xff] %v923
    %988 = vst [vmem:[%s2 + $0xf0] sm:$0xff] %v924
    %989 = vst [vmem:[%s2 + $0xf8] sm:$0xff] %v925
    %990 = vst [vmem:[%s2 + $0x100] sm:$0xff] %v926
    %991 = vst [vmem:[%s2 + $0x108] sm:$0xff] %v927
    %992 = vst [vmem:[%s2 + $0x110] sm:$0xff] %v928
    %993 = vst [vmem:[%s2 + $0x118] sm:$0xff] %v929
    %994 = vst [vmem:[%s2 + $0x120] sm:$0xff] %v930
    %995 = vst [vmem:[%s2 + $0x128] sm:$0xff] %v931
    %996 = vst [vmem:[%s2 + $0x130] sm:$0xff] %v932
    %997 = vst [vmem:[%s2 + $0x138] sm:$0xff] %v933
    %998 = vst [vmem:[%s2 + $0x140] sm:$0xff] %v934
    %999 = vst [vmem:[%s2 + $0x148] sm:$0xff] %v935
    %1000 = vst [vmem:[%s2 + $0x150] sm:$0xff] %v936
    %1001 = vst [vmem:[%s2 + $0x158] sm:$0xff] %v937
    %1002 = vst [vmem:[%s2 + $0x160] sm:$0xff] %v938
    %1003 = vst [vmem:[%s2 + $0x168] sm:$0xff] %v939
    %1004 = vst [vmem:[%s2 + $0x170] sm:$0xff] %v940
    %1005 = vst [vmem:[%s2 + $0x178] sm:$0xff] %v941
    %1006 = vst [vmem:[%s2 + $0x180] sm:$0xff] %v942
    %1007 = vst [vmem:[%s2 + $0x188] sm:$0xff] %v943
    %1008 = vst [vmem:[%s2 + $0x190] sm:$0xff] %v944
    %1009 = vst [vmem:[%s2 + $0x198] sm:$0xff] %v945
    %1010 = vst [vmem:[%s2 + $0x1a0] sm:$0xff] %v946
    %1011 = vst [vmem:[%s2 + $0x1a8] sm:$0xff] %v947
    %1012 = vst [vmem:[%s2 + $0x1b0] sm:$0xff] %v948
    %1013 = vst [vmem:[%s2 + $0x1b8] sm:$0xff] %v949
    %1014 = vst [vmem:[%s2 + $0x1c0] sm:$0xff] %v950
    %1015 = vst [vmem:[%s2 + $0x1c8] sm:$0xff] %v951
    %1016 = vst [vmem:[%s2 + $0x1d0] sm:$0xff] %v952
    %1017 = vst [vmem:[%s2 + $0x1d8] sm:$0xff] %v953
    %1018 = vst [vmem:[%s2 + $0x1e0] sm:$0xff] %v954
    %1019 = vst [vmem:[%s2 + $0x1e8] sm:$0xff] %v955
    %1020 = vst [vmem:[%s2 + $0x1f0] sm:$0xff] %v956
    %1021 = vst [vmem:[%s2 + $0x1f8] sm:$0xff] %v957
    %v1022 = vld [vmem:[%s3] sm:$0x1]
    %v1023 = vadd.f32 %v894, %v895
    %v1024 = vadd.f32 %v1023, %v896
    %v1025 = vadd.f32 %v1024, %v897
    %v1026 = vadd.f32 %v1025, %v898
    %v1027 = vadd.f32 %v1026, %v899
    %v1028 = vadd.f32 %v1027, %v900
    %v1029 = vadd.f32 %v1028, %v901
    %v1030 = vadd.f32 %v1029, %v902
    %v1031 = vadd.f32 %v1030, %v903
    %v1032 = vadd.f32 %v1031, %v904
    %v1033 = vadd.f32 %v1032, %v905
    %v1034 = vadd.f32 %v1033, %v906
    %v1035 = vadd.f32 %v1034, %v907
    %v1036 = vadd.f32 %v1035, %v908
    %v1037 = vadd.f32 %v1036, %v909
    %v1038 = vadd.f32 %v1037, %v910
    %v1039 = vadd.f32 %v1038, %v911
    %v1040 = vadd.f32 %v1039, %v912
    %v1041 = vadd.f32 %v1040, %v913
    %v1042 = vadd.f32 %v1041, %v914
    %v1043 = vadd.f32 %v1042, %v915
    %v1044 = vadd.f32 %v1043, %v916
    %v1045 = vadd.f32 %v1044, %v917
    %v1046 = vadd.f32 %v1045, %v918
    %v1047 = vadd.f32 %v1046, %v919
    %v1048 = vadd.f32 %v1047, %v920
    %v1049 = vadd.f32 %v1048, %v921
    %v1050 = vadd.f32 %v1049, %v922
    %v1051 = vadd.f32 %v1050, %v923
    %v1052 = vadd.f32 %v1051, %v924
    %v1053 = vadd.f32 %v1052, %v925
    %v1054 = vadd.f32 %v1053, %v926
    %v1055 = vadd.f32 %v1054, %v927
    %v1056 = vadd.f32 %v1055, %v928
    %v1057 = vadd.f32 %v1056, %v929
    %v1058 = vadd.f32 %v1057, %v930
    %v1059 = vadd.f32 %v1058, %v931
    %v1060 = vadd.f32 %v1059, %v932
    %v1061 = vadd.f32 %v1060, %v933
    %v1062 = vadd.f32 %v1061, %v934
    %v1063 = vadd.f32 %v1062, %v935
    %v1064 = vadd.f32 %v1063, %v936
    %v1065 = vadd.f32 %v1064, %v937
    %v1066 = vadd.f32 %v1065, %v938
    %v1067 = vadd.f32 %v1066, %v939
    %v1068 = vadd.f32 %v1067, %v940
    %v1069 = vadd.f32 %v1068, %v941
    %v1070 = vadd.f32 %v1069, %v942
    %v1071 = vadd.f32 %v1070, %v943
    %v1072 = vadd.f32 %v1071, %v944
    %v1073 = vadd.f32 %v1072, %v945
    %v1074 = vadd.f32 %v1073, %v946
    %v1075 = vadd.f32 %v1074, %v947
    %v1076 = vadd.f32 %v1075, %v948
    %v1077 = vadd.f32 %v1076, %v949
    %v1078 = vadd.f32 %v1077, %v950
    %v1079 = vadd.f32 %v1078, %v951
    %v1080 = vadd.f32 %v1079, %v952
    %v1081 = vadd.f32 %v1080, %v953
    %v1082 = vadd.f32 %v1081, %v954
    %v1083 = vadd.f32 %v1082, %v955
    %v1084 = vadd.f32 %v1083, %v956
    %v1085 = vadd.f32 %v1084, %v957
    %v1086 = vrot.slane %v1085, 4
    %v1087 = vadd.f32 %v1085, %v1086
    %v1088 = vrot.slane %v1087, 2
    %v1089 = vadd.f32 %v1087, %v1088
    %v1090 = vrot.slane %v1089, 1
    %v1091 = vadd.f32 %v1089, %v1090
    %v1092 = vadd.f32 %v1022, %v1091
    %1093 = vst [vmem:[%s3] sm:$0x1] %v1092
    %v1094 = vld [vmem:[%s4] sm:$0x1]
    %v1095 = vmul.f32 %v894, %v894
    %v1096 = vmul.f32 %v895, %v895
    %v1097 = vmul.f32 %v896, %v896
    %v1098 = vmul.f32 %v897, %v897
    %v1099 = vmul.f32 %v898, %v898
    %v1100 = vmul.f32 %v899, %v899
    %v1101 = vmul.f32 %v900, %v900
    %v1102 = vmul.f32 %v901, %v901
    %v1103 = vmul.f32 %v902, %v902
    %v1104 = vmul.f32 %v903, %v903
    %v1105 = vmul.f32 %v904, %v904
    %v1106 = vmul.f32 %v905, %v905
    %v1107 = vmul.f32 %v906, %v906
    %v1108 = vmul.f32 %v907, %v907
    %v1109 = vmul.f32 %v908, %v908
    %v1110 = vmul.f32 %v909, %v909
    %v1111 = vmul.f32 %v910, %v910
    %v1112 = vmul.f32 %v911, %v911
    %v1113 = vmul.f32 %v912, %v912
    %v1114 = vmul.f32 %v913, %v913
    %v1115 = vmul.f32 %v914, %v914
    %v1116 = vmul.f32 %v915, %v915
    %v1117 = vmul.f32 %v916, %v916
    %v1118 = vmul.f32 %v917, %v917
    %v1119 = vmul.f32 %v918, %v918
    %v1120 = vmul.f32 %v919, %v919
    %v1121 = vmul.f32 %v920, %v920
    %v1122 = vmul.f32 %v921, %v921
    %v1123 = vmul.f32 %v922, %v922
    %v1124 = vmul.f32 %v923, %v923
    %v1125 = vmul.f32 %v924, %v924
    %v1126 = vmul.f32 %v925, %v925
    %v1127 = vmul.f32 %v926, %v926
    %v1128 = vmul.f32 %v927, %v927
    %v1129 = vmul.f32 %v928, %v928
    %v1130 = vmul.f32 %v929, %v929
    %v1131 = vmul.f32 %v930, %v930
    %v1132 = vmul.f32 %v931, %v931
    %v1133 = vmul.f32 %v932, %v932
    %v1134 = vmul.f32 %v933, %v933
    %v1135 = vmul.f32 %v934, %v934
    %v1136 = vmul.f32 %v935, %v935
    %v1137 = vmul.f32 %v936, %v936
    %v1138 = vmul.f32 %v937, %v937
    %v1139 = vmul.f32 %v938, %v938
    %v1140 = vmul.f32 %v939, %v939
    %v1141 = vmul.f32 %v940, %v940
    %v1142 = vmul.f32 %v941, %v941
    %v1143 = vmul.f32 %v942, %v942
    %v1144 = vmul.f32 %v943, %v943
    %v1145 = vmul.f32 %v944, %v944
    %v1146 = vmul.f32 %v945, %v945
    %v1147 = vmul.f32 %v946, %v946
    %v1148 = vmul.f32 %v947, %v947
    %v1149 = vmul.f32 %v948, %v948
    %v1150 = vmul.f32 %v949, %v949
    %v1151 = vmul.f32 %v950, %v950
    %v1152 = vmul.f32 %v951, %v951
    %v1153 = vmul.f32 %v952, %v952
    %v1154 = vmul.f32 %v953, %v953
    %v1155 = vmul.f32 %v954, %v954
    %v1156 = vmul.f32 %v955, %v955
    %v1157 = vmul.f32 %v956, %v956
    %v1158 = vmul.f32 %v957, %v957
    %v1159 = vadd.f32 %v1095, %v1096
    %v1160 = vadd.f32 %v1159, %v1097
    %v1161 = vadd.f32 %v1160, %v1098
    %v1162 = vadd.f32 %v1161, %v1099
    %v1163 = vadd.f32 %v1162, %v1100
    %v1164 = vadd.f32 %v1163, %v1101
    %v1165 = vadd.f32 %v1164, %v1102
    %v1166 = vadd.f32 %v1165, %v1103
    %v1167 = vadd.f32 %v1166, %v1104
    %v1168 = vadd.f32 %v1167, %v1105
    %v1169 = vadd.f32 %v1168, %v1106
    %v1170 = vadd.f32 %v1169, %v1107
    %v1171 = vadd.f32 %v1170, %v1108
    %v1172 = vadd.f32 %v1171, %v1109
    %v1173 = vadd.f32 %v1172, %v1110
    %v1174 = vadd.f32 %v1173, %v1111
    %v1175 = vadd.f32 %v1174, %v1112
    %v1176 = vadd.f32 %v1175, %v1113
    %v1177 = vadd.f32 %v1176, %v1114
    %v1178 = vadd.f32 %v1177, %v1115
    %v1179 = vadd.f32 %v1178, %v1116
    %v1180 = vadd.f32 %v1179, %v1117
    %v1181 = vadd.f32 %v1180, %v1118
    %v1182 = vadd.f32 %v1181, %v1119
    %v1183 = vadd.f32 %v1182, %v1120
    %v1184 = vadd.f32 %v1183, %v1121
    %v1185 = vadd.f32 %v1184, %v1122
    %v1186 = vadd.f32 %v1185, %v1123
    %v1187 = vadd.f32 %v1186, %v1124
    %v1188 = vadd.f32 %v1187, %v1125
    %v1189 = vadd.f32 %v1188, %v1126
    %v1190 = vadd.f32 %v1189, %v1127
    %v1191 = vadd.f32 %v1190, %v1128
    %v1192 = vadd.f32 %v1191, %v1129
    %v1193 = vadd.f32 %v1192, %v1130
    %v1194 = vadd.f32 %v1193, %v1131
    %v1195 = vadd.f32 %v1194, %v1132
    %v1196 = vadd.f32 %v1195, %v1133
    %v1197 = vadd.f32 %v1196, %v1134
    %v1198 = vadd.f32 %v1197, %v1135
    %v1199 = vadd.f32 %v1198, %v1136
    %v1200 = vadd.f32 %v1199, %v1137
    %v1201 = vadd.f32 %v1200, %v1138
    %v1202 = vadd.f32 %v1201, %v1139
    %v1203 = vadd.f32 %v1202, %v1140
    %v1204 = vadd.f32 %v1203, %v1141
    %v1205 = vadd.f32 %v1204, %v1142
    %v1206 = vadd.f32 %v1205, %v1143
    %v1207 = vadd.f32 %v1206, %v1144
    %v1208 = vadd.f32 %v1207, %v1145
    %v1209 = vadd.f32 %v1208, %v1146
    %v1210 = vadd.f32 %v1209, %v1147
    %v1211 = vadd.f32 %v1210, %v1148
    %v1212 = vadd.f32 %v1211, %v1149
    %v1213 = vadd.f32 %v1212, %v1150
    %v1214 = vadd.f32 %v1213, %v1151
    %v1215 = vadd.f32 %v1214, %v1152
    %v1216 = vadd.f32 %v1215, %v1153
    %v1217 = vadd.f32 %v1216, %v1154
    %v1218 = vadd.f32 %v1217, %v1155
    %v1219 = vadd.f32 %v1218, %v1156
    %v1220 = vadd.f32 %v1219, %v1157
    %v1221 = vadd.f32 %v1220, %v1158
    %v1222 = vrot.slane %v1221, 4
    %v1223 = vadd.f32 %v1221, %v1222
    %v1224 = vrot.slane %v1223, 2
    %v1225 = vadd.f32 %v1223, %v1224
    %v1226 = vrot.slane %v1225, 1
    %v1227 = vadd.f32 %v1225, %v1226
    %v1228 = vadd.f32 %v1094, %v1227
    %1229 = vst [vmem:[%s4] sm:$0x1] %v1228
  $region21: #{bottleneck_forward.6} parent=0 // pred_fallthru
    _
  // Predicated region
  $region22: #{bottleneck_forward.6} parent=0 // pred_check
    _
  $region23: #{bottleneck_forward.6} parent=0 // pred_check_branch
    %1231 = sbr.rel (0) target = $region25
  $region24: #{bottleneck_forward.6} parent=0 // pred_region
    _
  $region25: #{bottleneck_forward.6} parent=0 // pred_fallthru
    _
  // Predicated region
  $region26: #{bottleneck_forward.6} parent=0 // pred_check
    _
  $region27: #{bottleneck_forward.6} parent=0 // pred_check_branch
    %1233 = sbr.rel (0) target = $region29
  $region28: #{bottleneck_forward.6} parent=0 // pred_region
    _
  $region29: #{bottleneck_forward.6} parent=0 // pred_fallthru
    _
  // Predicated region
  $region30: #{bottleneck_forward.6} parent=0 // pred_check
    _
  $region31: #{bottleneck_forward.6} parent=0 // pred_check_branch
    %1235 = sbr.rel (0) target = $region33
  $region32: #{bottleneck_forward.6} parent=0 // pred_region
    _
  $region33: #{bottleneck_forward.6} parent=0 // pred_fallthru
    _
  // Predicated region
  $region34: #{bottleneck_forward.6} parent=0 // pred_check
    _
  $region35: #{bottleneck_forward.6} parent=0 // pred_check_branch
    %1237 = sbr.rel (0) target = $region37
  $region36: #{bottleneck_forward.6} parent=0 // pred_region
    _
  $region37: #{bottleneck_forward.6} parent=0 // pred_fallthru
    _
  // Predicated region
  $region38: #{bottleneck_forward.6} parent=0 // pred_check
    _
  $region39: #{bottleneck_forward.6} parent=0 // pred_check_branch
    %1239 = sbr.rel (0) target = $region41
  $region40: #{bottleneck_forward.6} parent=0 // pred_region
    _
  $region41: #{bottleneck_forward.6} parent=0 // pred_fallthru
    _
  // Predicated region
  $region42: #{bottleneck_forward.6} parent=0 // pred_check
    _
  $region43: #{bottleneck_forward.6} parent=0 // pred_check_branch
    %1241 = sbr.rel (0) target = $region45
  $region44: #{bottleneck_forward.6} parent=0 // pred_region
    _
  $region45: #{bottleneck_forward.6} parent=0 // pred_fallthru
    _

// kernel: bottleneck_forward.7
$region0: #{bottleneck_forward.7}
  #allocation0 [shape = 'u32[]', space=smem, size = 0x4, offset = 0x4, fixed_abs, tag = 'smem constant byte address 0x4 - core index']
  #allocation1 [shape = 'u32[144,128]{1,0:T(1,128)}', space=vmem, size = 0x12000, scoped, tag = 'internal scratch']
  %s0 = inlined_call_operand.vmem [shape: f32[512,128], index: 0, kind: input, shape index: {}]
  %s1 = inlined_call_operand.vmem [shape: f32[1,128], index: 1, kind: input, shape index: {}]
  %s2 = inlined_call_operand.vmem [shape: f32[1,128], index: 2, kind: input, shape index: {}]
  %s3 = inlined_call_operand.vmem [shape: bf16[512,128], index: 3, kind: output, shape index: {}]
  %s4 = sld [smem:[#allocation0]]
  $region22: #{bottleneck_forward.7} parent=0
    _
  %s6 = ssub.s32 1, %s4
  %s7 = scalar_select 0, %s6, %s4
  // Predicated region
  $region2: #{bottleneck_forward.7} parent=0 // pred_check
    _
  $region3: #{bottleneck_forward.7} parent=0 // pred_check_branch
    %9 = sbr.rel (0) target = $region5
  $region4: #{bottleneck_forward.7} parent=0 // pred_region
    _
  $region5: #{bottleneck_forward.7} parent=0 // pred_fallthru
    _
  // Predicated region
  $region6: #{bottleneck_forward.7} parent=0 // pred_check
    _
  $region7: #{bottleneck_forward.7} parent=0 // pred_check_branch
    %11 = sbr.rel (0) target = $region9
  $region8: #{bottleneck_forward.7} parent=0 // pred_region
    _
  $region9: #{bottleneck_forward.7} parent=0 // pred_fallthru
    _
  // Predicated region
  $region10: #{bottleneck_forward.7} parent=0 // pred_check
    _
  $region11: #{bottleneck_forward.7} parent=0 // pred_check_branch
    %13 = sbr.rel (0) target = $region13
  $region12: #{bottleneck_forward.7} parent=0 // pred_region
    _
  $region13: #{bottleneck_forward.7} parent=0 // pred_fallthru
    _
  %v14 = vld [vmem:[%s0] sm:$0xff]
  %v15 = vld [vmem:[%s0 + $0x8] sm:$0xff]
  %v16 = vld [vmem:[%s0 + $0x10] sm:$0xff]
  %v17 = vld [vmem:[%s0 + $0x18] sm:$0xff]
  %v18 = vld [vmem:[%s0 + $0x20] sm:$0xff]
  %v19 = vld [vmem:[%s0 + $0x28] sm:$0xff]
  %v20 = vld [vmem:[%s0 + $0x30] sm:$0xff]
  %v21 = vld [vmem:[%s0 + $0x38] sm:$0xff]
  %v22 = vld [vmem:[%s0 + $0x40] sm:$0xff]
  %v23 = vld [vmem:[%s0 + $0x48] sm:$0xff]
  %v24 = vld [vmem:[%s0 + $0x50] sm:$0xff]
  %v25 = vld [vmem:[%s0 + $0x58] sm:$0xff]
  %v26 = vld [vmem:[%s0 + $0x60] sm:$0xff]
  %v27 = vld [vmem:[%s0 + $0x68] sm:$0xff]
  %v28 = vld [vmem:[%s0 + $0x70] sm:$0xff]
  %v29 = vld [vmem:[%s0 + $0x78] sm:$0xff]
  %v30 = vld [vmem:[%s0 + $0x80] sm:$0xff]
  %v31 = vld [vmem:[%s0 + $0x88] sm:$0xff]
  %v32 = vld [vmem:[%s0 + $0x90] sm:$0xff]
  %v33 = vld [vmem:[%s0 + $0x98] sm:$0xff]
  %v34 = vld [vmem:[%s0 + $0xa0] sm:$0xff]
  %v35 = vld [vmem:[%s0 + $0xa8] sm:$0xff]
  %v36 = vld [vmem:[%s0 + $0xb0] sm:$0xff]
  %v37 = vld [vmem:[%s0 + $0xb8] sm:$0xff]
  %v38 = vld [vmem:[%s0 + $0xc0] sm:$0xff]
  %v39 = vld [vmem:[%s0 + $0xc8] sm:$0xff]
  %v40 = vld [vmem:[%s0 + $0xd0] sm:$0xff]
  %v41 = vld [vmem:[%s0 + $0xd8] sm:$0xff]
  %v42 = vld [vmem:[%s0 + $0xe0] sm:$0xff]
  %v43 = vld [vmem:[%s0 + $0xe8] sm:$0xff]
  %v44 = vld [vmem:[%s0 + $0xf0] sm:$0xff]
  %v45 = vld [vmem:[%s0 + $0xf8] sm:$0xff]
  %v46 = vld [vmem:[%s0 + $0x100] sm:$0xff]
  %v47 = vld [vmem:[%s0 + $0x108] sm:$0xff]
  %v48 = vld [vmem:[%s0 + $0x110] sm:$0xff]
  %v49 = vld [vmem:[%s0 + $0x118] sm:$0xff]
  %v50 = vld [vmem:[%s0 + $0x120] sm:$0xff]
  %v51 = vld [vmem:[%s0 + $0x128] sm:$0xff]
  %v52 = vld [vmem:[%s0 + $0x130] sm:$0xff]
  %v53 = vld [vmem:[%s0 + $0x138] sm:$0xff]
  %v54 = vld [vmem:[%s0 + $0x140] sm:$0xff]
  %v55 = vld [vmem:[%s0 + $0x148] sm:$0xff]
  %v56 = vld [vmem:[%s0 + $0x150] sm:$0xff]
  %v57 = vld [vmem:[%s0 + $0x158] sm:$0xff]
  %v58 = vld [vmem:[%s0 + $0x160] sm:$0xff]
  %v59 = vld [vmem:[%s0 + $0x168] sm:$0xff]
  %v60 = vld [vmem:[%s0 + $0x170] sm:$0xff]
  %v61 = vld [vmem:[%s0 + $0x178] sm:$0xff]
  %v62 = vld [vmem:[%s0 + $0x180] sm:$0xff]
  %v63 = vld [vmem:[%s0 + $0x188] sm:$0xff]
  %v64 = vld [vmem:[%s0 + $0x190] sm:$0xff]
  %v65 = vld [vmem:[%s0 + $0x198] sm:$0xff]
  %v66 = vld [vmem:[%s0 + $0x1a0] sm:$0xff]
  %v67 = vld [vmem:[%s0 + $0x1a8] sm:$0xff]
  %v68 = vld [vmem:[%s0 + $0x1b0] sm:$0xff]
  %v69 = vld [vmem:[%s0 + $0x1b8] sm:$0xff]
  %v70 = vld [vmem:[%s0 + $0x1c0] sm:$0xff]
  %v71 = vld [vmem:[%s0 + $0x1c8] sm:$0xff]
  %v72 = vld [vmem:[%s0 + $0x1d0] sm:$0xff]
  %v73 = vld [vmem:[%s0 + $0x1d8] sm:$0xff]
  %v74 = vld [vmem:[%s0 + $0x1e0] sm:$0xff]
  %v75 = vld [vmem:[%s0 + $0x1e8] sm:$0xff]
  %v76 = vld [vmem:[%s0 + $0x1f0] sm:$0xff]
  %v77 = vld [vmem:[%s0 + $0x1f8] sm:$0xff]
  %v78 = vld [vmem:[%s1] sm:$0x1]
  %v80 = vlaneseq
  %v81 = vshrl.u32 %v80, 7
  %v82 = vsub.s32 0, %v81
  %v83 = vrot.slane %v78, %v82
  %v85 = vmul.f32 %v14, %v83
  %v86 = vmul.f32 %v15, %v83
  %v87 = vmul.f32 %v16, %v83
  %v88 = vmul.f32 %v17, %v83
  %v89 = vmul.f32 %v18, %v83
  %v90 = vmul.f32 %v19, %v83
  %v91 = vmul.f32 %v20, %v83
  %v92 = vmul.f32 %v21, %v83
  %v93 = vmul.f32 %v22, %v83
  %v94 = vmul.f32 %v23, %v83
  %v95 = vmul.f32 %v24, %v83
  %v96 = vmul.f32 %v25, %v83
  %v97 = vmul.f32 %v26, %v83
  %v98 = vmul.f32 %v27, %v83
  %v99 = vmul.f32 %v28, %v83
  %v100 = vmul.f32 %v29, %v83
  %v101 = vmul.f32 %v30, %v83
  %v102 = vmul.f32 %v31, %v83
  %v103 = vmul.f32 %v32, %v83
  %v104 = vmul.f32 %v33, %v83
  %v105 = vmul.f32 %v34, %v83
  %v106 = vmul.f32 %v35, %v83
  %v107 = vmul.f32 %v36, %v83
  %v108 = vmul.f32 %v37, %v83
  %v109 = vmul.f32 %v38, %v83
  %v110 = vmul.f32 %v39, %v83
  %v111 = vmul.f32 %v40, %v83
  %v112 = vmul.f32 %v41, %v83
  %v113 = vmul.f32 %v42, %v83
  %v114 = vmul.f32 %v43, %v83
  %v115 = vmul.f32 %v44, %v83
  %v116 = vmul.f32 %v45, %v83
  %v117 = vmul.f32 %v46, %v83
  %v118 = vmul.f32 %v47, %v83
  %v119 = vmul.f32 %v48, %v83
  %v120 = vmul.f32 %v49, %v83
  %v121 = vmul.f32 %v50, %v83
  %v122 = vmul.f32 %v51, %v83
  %v123 = vmul.f32 %v52, %v83
  %v124 = vmul.f32 %v53, %v83
  %v125 = vmul.f32 %v54, %v83
  %v126 = vmul.f32 %v55, %v83
  %v127 = vmul.f32 %v56, %v83
  %v128 = vmul.f32 %v57, %v83
  %v129 = vmul.f32 %v58, %v83
  %v130 = vmul.f32 %v59, %v83
  %v131 = vmul.f32 %v60, %v83
  %v132 = vmul.f32 %v61, %v83
  %v133 = vmul.f32 %v62, %v83
  %v134 = vmul.f32 %v63, %v83
  %v135 = vmul.f32 %v64, %v83
  %v136 = vmul.f32 %v65, %v83
  %v137 = vmul.f32 %v66, %v83
  %v138 = vmul.f32 %v67, %v83
  %v139 = vmul.f32 %v68, %v83
  %v140 = vmul.f32 %v69, %v83
  %v141 = vmul.f32 %v70, %v83
  %v142 = vmul.f32 %v71, %v83
  %v143 = vmul.f32 %v72, %v83
  %v144 = vmul.f32 %v73, %v83
  %v145 = vmul.f32 %v74, %v83
  %v146 = vmul.f32 %v75, %v83
  %v147 = vmul.f32 %v76, %v83
  %v148 = vmul.f32 %v77, %v83
  %v149 = vld [vmem:[%s2] sm:$0x1]
  %v151 = vlaneseq
  %v152 = vshrl.u32 %v151, 7
  %v153 = vsub.s32 0, %v152
  %v154 = vrot.slane %v149, %v153
  %v156 = vadd.f32 %v85, %v154
  %v157 = vadd.f32 %v86, %v154
  %v158 = vadd.f32 %v87, %v154
  %v159 = vadd.f32 %v88, %v154
  %v160 = vadd.f32 %v89, %v154
  %v161 = vadd.f32 %v90, %v154
  %v162 = vadd.f32 %v91, %v154
  %v163 = vadd.f32 %v92, %v154
  %v164 = vadd.f32 %v93, %v154
  %v165 = vadd.f32 %v94, %v154
  %v166 = vadd.f32 %v95, %v154
  %v167 = vadd.f32 %v96, %v154
  %v168 = vadd.f32 %v97, %v154
  %v169 = vadd.f32 %v98, %v154
  %v170 = vadd.f32 %v99, %v154
  %v171 = vadd.f32 %v100, %v154
  %v172 = vadd.f32 %v101, %v154
  %v173 = vadd.f32 %v102, %v154
  %v174 = vadd.f32 %v103, %v154
  %v175 = vadd.f32 %v104, %v154
  %v176 = vadd.f32 %v105, %v154
  %v177 = vadd.f32 %v106, %v154
  %v178 = vadd.f32 %v107, %v154
  %v179 = vadd.f32 %v108, %v154
  %v180 = vadd.f32 %v109, %v154
  %v181 = vadd.f32 %v110, %v154
  %v182 = vadd.f32 %v111, %v154
  %v183 = vadd.f32 %v112, %v154
  %v184 = vadd.f32 %v113, %v154
  %v185 = vadd.f32 %v114, %v154
  %v186 = vadd.f32 %v115, %v154
  %v187 = vadd.f32 %v116, %v154
  %v188 = vadd.f32 %v117, %v154
  %v189 = vadd.f32 %v118, %v154
  %v190 = vadd.f32 %v119, %v154
  %v191 = vadd.f32 %v120, %v154
  %v192 = vadd.f32 %v121, %v154
  %v193 = vadd.f32 %v122, %v154
  %v194 = vadd.f32 %v123, %v154
  %v195 = vadd.f32 %v124, %v154
  %v196 = vadd.f32 %v125, %v154
  %v197 = vadd.f32 %v126, %v154
  %v198 = vadd.f32 %v127, %v154
  %v199 = vadd.f32 %v128, %v154
  %v200 = vadd.f32 %v129, %v154
  %v201 = vadd.f32 %v130, %v154
  %v202 = vadd.f32 %v131, %v154
  %v203 = vadd.f32 %v132, %v154
  %v204 = vadd.f32 %v133, %v154
  %v205 = vadd.f32 %v134, %v154
  %v206 = vadd.f32 %v135, %v154
  %v207 = vadd.f32 %v136, %v154
  %v208 = vadd.f32 %v137, %v154
  %v209 = vadd.f32 %v138, %v154
  %v210 = vadd.f32 %v139, %v154
  %v211 = vadd.f32 %v140, %v154
  %v212 = vadd.f32 %v141, %v154
  %v213 = vadd.f32 %v142, %v154
  %v214 = vadd.f32 %v143, %v154
  %v215 = vadd.f32 %v144, %v154
  %v216 = vadd.f32 %v145, %v154
  %v217 = vadd.f32 %v146, %v154
  %v218 = vadd.f32 %v147, %v154
  %v219 = vadd.f32 %v148, %v154
  %v220 = vmax.f32 %v156, 0.0
  %v221 = vmax.f32 %v157, 0.0
  %v222 = vmax.f32 %v158, 0.0
  %v223 = vmax.f32 %v159, 0.0
  %v224 = vmax.f32 %v160, 0.0
  %v225 = vmax.f32 %v161, 0.0
  %v226 = vmax.f32 %v162, 0.0
  %v227 = vmax.f32 %v163, 0.0
  %v228 = vmax.f32 %v164, 0.0
  %v229 = vmax.f32 %v165, 0.0
  %v230 = vmax.f32 %v166, 0.0
  %v231 = vmax.f32 %v167, 0.0
  %v232 = vmax.f32 %v168, 0.0
  %v233 = vmax.f32 %v169, 0.0
  %v234 = vmax.f32 %v170, 0.0
  %v235 = vmax.f32 %v171, 0.0
  %v236 = vmax.f32 %v172, 0.0
  %v237 = vmax.f32 %v173, 0.0
  %v238 = vmax.f32 %v174, 0.0
  %v239 = vmax.f32 %v175, 0.0
  %v240 = vmax.f32 %v176, 0.0
  %v241 = vmax.f32 %v177, 0.0
  %v242 = vmax.f32 %v178, 0.0
  %v243 = vmax.f32 %v179, 0.0
  %v244 = vmax.f32 %v180, 0.0
  %v245 = vmax.f32 %v181, 0.0
  %v246 = vmax.f32 %v182, 0.0
  %v247 = vmax.f32 %v183, 0.0
  %v248 = vmax.f32 %v184, 0.0
  %v249 = vmax.f32 %v185, 0.0
  %v250 = vmax.f32 %v186, 0.0
  %v251 = vmax.f32 %v187, 0.0
  %v252 = vmax.f32 %v188, 0.0
  %v253 = vmax.f32 %v189, 0.0
  %v254 = vmax.f32 %v190, 0.0
  %v255 = vmax.f32 %v191, 0.0
  %v256 = vmax.f32 %v192, 0.0
  %v257 = vmax.f32 %v193, 0.0
  %v258 = vmax.f32 %v194, 0.0
  %v259 = vmax.f32 %v195, 0.0
  %v260 = vmax.f32 %v196, 0.0
  %v261 = vmax.f32 %v197, 0.0
  %v262 = vmax.f32 %v198, 0.0
  %v263 = vmax.f32 %v199, 0.0
  %v264 = vmax.f32 %v200, 0.0
  %v265 = vmax.f32 %v201, 0.0
  %v266 = vmax.f32 %v202, 0.0
  %v267 = vmax.f32 %v203, 0.0
  %v268 = vmax.f32 %v204, 0.0
  %v269 = vmax.f32 %v205, 0.0
  %v270 = vmax.f32 %v206, 0.0
  %v271 = vmax.f32 %v207, 0.0
  %v272 = vmax.f32 %v208, 0.0
  %v273 = vmax.f32 %v209, 0.0
  %v274 = vmax.f32 %v210, 0.0
  %v275 = vmax.f32 %v211, 0.0
  %v276 = vmax.f32 %v212, 0.0
  %v277 = vmax.f32 %v213, 0.0
  %v278 = vmax.f32 %v214, 0.0
  %v279 = vmax.f32 %v215, 0.0
  %v280 = vmax.f32 %v216, 0.0
  %v281 = vmax.f32 %v217, 0.0
  %v282 = vmax.f32 %v218, 0.0
  %v283 = vmax.f32 %v219, 0.0
  %v284 = vpack.c.bf16 %v221, %v220
  %v285 = vpack.c.bf16 %v223, %v222
  %v286 = vpack.c.bf16 %v225, %v224
  %v287 = vpack.c.bf16 %v227, %v226
  %v288 = vpack.c.bf16 %v229, %v228
  %v289 = vpack.c.bf16 %v231, %v230
  %v290 = vpack.c.bf16 %v233, %v232
  %v291 = vpack.c.bf16 %v235, %v234
  %v292 = vpack.c.bf16 %v237, %v236
  %v293 = vpack.c.bf16 %v239, %v238
  %v294 = vpack.c.bf16 %v241, %v240
  %v295 = vpack.c.bf16 %v243, %v242
  %v296 = vpack.c.bf16 %v245, %v244
  %v297 = vpack.c.bf16 %v247, %v246
  %v298 = vpack.c.bf16 %v249, %v248
  %v299 = vpack.c.bf16 %v251, %v250
  %v300 = vpack.c.bf16 %v253, %v252
  %v301 = vpack.c.bf16 %v255, %v254
  %v302 = vpack.c.bf16 %v257, %v256
  %v303 = vpack.c.bf16 %v259, %v258
  %v304 = vpack.c.bf16 %v261, %v260
  %v305 = vpack.c.bf16 %v263, %v262
  %v306 = vpack.c.bf16 %v265, %v264
  %v307 = vpack.c.bf16 %v267, %v266
  %v308 = vpack.c.bf16 %v269, %v268
  %v309 = vpack.c.bf16 %v271, %v270
  %v310 = vpack.c.bf16 %v273, %v272
  %v311 = vpack.c.bf16 %v275, %v274
  %v312 = vpack.c.bf16 %v277, %v276
  %v313 = vpack.c.bf16 %v279, %v278
  %v314 = vpack.c.bf16 %v281, %v280
  %v315 = vpack.c.bf16 %v283, %v282
  %v348 = vunpack.c.l.b16 %v284
  %v349 = vunpack.c.h.b16 %v284
  %v350 = vunpack.c.l.b16 %v285
  %v351 = vunpack.c.h.b16 %v285
  %v352 = vunpack.c.l.b16 %v286
  %v353 = vunpack.c.h.b16 %v286
  %v354 = vunpack.c.l.b16 %v287
  %v355 = vunpack.c.h.b16 %v287
  %v356 = vunpack.c.l.b16 %v288
  %v357 = vunpack.c.h.b16 %v288
  %v358 = vunpack.c.l.b16 %v289
  %v359 = vunpack.c.h.b16 %v289
  %v360 = vunpack.c.l.b16 %v290
  %v361 = vunpack.c.h.b16 %v290
  %v362 = vunpack.c.l.b16 %v291
  %v363 = vunpack.c.h.b16 %v291
  %v364 = vunpack.c.l.b16 %v292
  %v365 = vunpack.c.h.b16 %v292
  %v366 = vunpack.c.l.b16 %v293
  %v367 = vunpack.c.h.b16 %v293
  %v368 = vunpack.c.l.b16 %v294
  %v369 = vunpack.c.h.b16 %v294
  %v370 = vunpack.c.l.b16 %v295
  %v371 = vunpack.c.h.b16 %v295
  %v372 = vunpack.c.l.b16 %v296
  %v373 = vunpack.c.h.b16 %v296
  %v374 = vunpack.c.l.b16 %v297
  %v375 = vunpack.c.h.b16 %v297
  %v376 = vunpack.c.l.b16 %v298
  %v377 = vunpack.c.h.b16 %v298
  %v378 = vunpack.c.l.b16 %v299
  %v379 = vunpack.c.h.b16 %v299
  %v380 = vunpack.c.l.b16 %v300
  %v381 = vunpack.c.h.b16 %v300
  %v382 = vunpack.c.l.b16 %v301
  %v383 = vunpack.c.h.b16 %v301
  %v384 = vunpack.c.l.b16 %v302
  %v385 = vunpack.c.h.b16 %v302
  %v386 = vunpack.c.l.b16 %v303
  %v387 = vunpack.c.h.b16 %v303
  %v388 = vunpack.c.l.b16 %v304
  %v389 = vunpack.c.h.b16 %v304
  %v390 = vunpack.c.l.b16 %v305
  %v391 = vunpack.c.h.b16 %v305
  %v392 = vunpack.c.l.b16 %v306
  %v393 = vunpack.c.h.b16 %v306
  %v394 = vunpack.c.l.b16 %v307
  %v395 = vunpack.c.h.b16 %v307
  %v396 = vunpack.c.l.b16 %v308
  %v397 = vunpack.c.h.b16 %v308
  %v398 = vunpack.c.l.b16 %v309
  %v399 = vunpack.c.h.b16 %v309
  %v400 = vunpack.c.l.b16 %v310
  %v401 = vunpack.c.h.b16 %v310
  %v402 = vunpack.c.l.b16 %v311
  %v403 = vunpack.c.h.b16 %v311
  %v404 = vunpack.c.l.b16 %v312
  %v405 = vunpack.c.h.b16 %v312
  %v406 = vunpack.c.l.b16 %v313
  %v407 = vunpack.c.h.b16 %v313
  %v408 = vunpack.c.l.b16 %v314
  %v409 = vunpack.c.h.b16 %v314
  %v410 = vunpack.c.l.b16 %v315
  %v411 = vunpack.c.h.b16 %v315
  %v412 = vpack.c.b16 %v348, %v348
  %v413 = vpack.c.b16 %v349, %v349
  %v414 = vpack.c.b16 %v350, %v350
  %v415 = vpack.c.b16 %v351, %v351
  %v416 = vpack.c.b16 %v352, %v352
  %v417 = vpack.c.b16 %v353, %v353
  %v418 = vpack.c.b16 %v354, %v354
  %v419 = vpack.c.b16 %v355, %v355
  %v420 = vpack.c.b16 %v356, %v356
  %v421 = vpack.c.b16 %v357, %v357
  %v422 = vpack.c.b16 %v358, %v358
  %v423 = vpack.c.b16 %v359, %v359
  %v424 = vpack.c.b16 %v360, %v360
  %v425 = vpack.c.b16 %v361, %v361
  %v426 = vpack.c.b16 %v362, %v362
  %v427 = vpack.c.b16 %v363, %v363
  %v428 = vpack.c.b16 %v364, %v364
  %v429 = vpack.c.b16 %v365, %v365
  %v430 = vpack.c.b16 %v366, %v366
  %v431 = vpack.c.b16 %v367, %v367
  %v432 = vpack.c.b16 %v368, %v368
  %v433 = vpack.c.b16 %v369, %v369
  %v434 = vpack.c.b16 %v370, %v370
  %v435 = vpack.c.b16 %v371, %v371
  %v436 = vpack.c.b16 %v372, %v372
  %v437 = vpack.c.b16 %v373, %v373
  %v438 = vpack.c.b16 %v374, %v374
  %v439 = vpack.c.b16 %v375, %v375
  %v440 = vpack.c.b16 %v376, %v376
  %v441 = vpack.c.b16 %v377, %v377
  %v442 = vpack.c.b16 %v378, %v378
  %v443 = vpack.c.b16 %v379, %v379
  %v444 = vpack.c.b16 %v380, %v380
  %v445 = vpack.c.b16 %v381, %v381
  %v446 = vpack.c.b16 %v382, %v382
  %v447 = vpack.c.b16 %v383, %v383
  %v448 = vpack.c.b16 %v384, %v384
  %v449 = vpack.c.b16 %v385, %v385
  %v450 = vpack.c.b16 %v386, %v386
  %v451 = vpack.c.b16 %v387, %v387
  %v452 = vpack.c.b16 %v388, %v388
  %v453 = vpack.c.b16 %v389, %v389
  %v454 = vpack.c.b16 %v390, %v390
  %v455 = vpack.c.b16 %v391, %v391
  %v456 = vpack.c.b16 %v392, %v392
  %v457 = vpack.c.b16 %v393, %v393
  %v458 = vpack.c.b16 %v394, %v394
  %v459 = vpack.c.b16 %v395, %v395
  %v460 = vpack.c.b16 %v396, %v396
  %v461 = vpack.c.b16 %v397, %v397
  %v462 = vpack.c.b16 %v398, %v398
  %v463 = vpack.c.b16 %v399, %v399
  %v464 = vpack.c.b16 %v400, %v400
  %v465 = vpack.c.b16 %v401, %v401
  %v466 = vpack.c.b16 %v402, %v402
  %v467 = vpack.c.b16 %v403, %v403
  %v468 = vpack.c.b16 %v404, %v404
  %v469 = vpack.c.b16 %v405, %v405
  %v470 = vpack.c.b16 %v406, %v406
  %v471 = vpack.c.b16 %v407, %v407
  %v472 = vpack.c.b16 %v408, %v408
  %v473 = vpack.c.b16 %v409, %v409
  %v474 = vpack.c.b16 %v410, %v410
  %v475 = vpack.c.b16 %v411, %v411
  %540 = vst [vmem:[%s3] sm:$0xf] %v412
  %541 = vst [vmem:[%s3 + $0x4] sm:$0xf] %v413
  %542 = vst [vmem:[%s3 + $0x8] sm:$0xf] %v414
  %543 = vst [vmem:[%s3 + $0xc] sm:$0xf] %v415
  %544 = vst [vmem:[%s3 + $0x10] sm:$0xf] %v416
  %545 = vst [vmem:[%s3 + $0x14] sm:$0xf] %v417
  %546 = vst [vmem:[%s3 + $0x18] sm:$0xf] %v418
  %547 = vst [vmem:[%s3 + $0x1c] sm:$0xf] %v419
  %548 = vst [vmem:[%s3 + $0x20] sm:$0xf] %v420
  %549 = vst [vmem:[%s3 + $0x24] sm:$0xf] %v421
  %550 = vst [vmem:[%s3 + $0x28] sm:$0xf] %v422
  %551 = vst [vmem:[%s3 + $0x2c] sm:$0xf] %v423
  %552 = vst [vmem:[%s3 + $0x30] sm:$0xf] %v424
  %553 = vst [vmem:[%s3 + $0x34] sm:$0xf] %v425
  %554 = vst [vmem:[%s3 + $0x38] sm:$0xf] %v426
  %555 = vst [vmem:[%s3 + $0x3c] sm:$0xf] %v427
  %556 = vst [vmem:[%s3 + $0x40] sm:$0xf] %v428
  %557 = vst [vmem:[%s3 + $0x44] sm:$0xf] %v429
  %558 = vst [vmem:[%s3 + $0x48] sm:$0xf] %v430
  %559 = vst [vmem:[%s3 + $0x4c] sm:$0xf] %v431
  %560 = vst [vmem:[%s3 + $0x50] sm:$0xf] %v432
  %561 = vst [vmem:[%s3 + $0x54] sm:$0xf] %v433
  %562 = vst [vmem:[%s3 + $0x58] sm:$0xf] %v434
  %563 = vst [vmem:[%s3 + $0x5c] sm:$0xf] %v435
  %564 = vst [vmem:[%s3 + $0x60] sm:$0xf] %v436
  %565 = vst [vmem:[%s3 + $0x64] sm:$0xf] %v437
  %566 = vst [vmem:[%s3 + $0x68] sm:$0xf] %v438
  %567 = vst [vmem:[%s3 + $0x6c] sm:$0xf] %v439
  %568 = vst [vmem:[%s3 + $0x70] sm:$0xf] %v440
  %569 = vst [vmem:[%s3 + $0x74] sm:$0xf] %v441
  %570 = vst [vmem:[%s3 + $0x78] sm:$0xf] %v442
  %571 = vst [vmem:[%s3 + $0x7c] sm:$0xf] %v443
  %572 = vst [vmem:[%s3 + $0x80] sm:$0xf] %v444
  %573 = vst [vmem:[%s3 + $0x84] sm:$0xf] %v445
  %574 = vst [vmem:[%s3 + $0x88] sm:$0xf] %v446
  %575 = vst [vmem:[%s3 + $0x8c] sm:$0xf] %v447
  %576 = vst [vmem:[%s3 + $0x90] sm:$0xf] %v448
  %577 = vst [vmem:[%s3 + $0x94] sm:$0xf] %v449
  %578 = vst [vmem:[%s3 + $0x98] sm:$0xf] %v450
  %579 = vst [vmem:[%s3 + $0x9c] sm:$0xf] %v451
  %580 = vst [vmem:[%s3 + $0xa0] sm:$0xf] %v452
  %581 = vst [vmem:[%s3 + $0xa4] sm:$0xf] %v453
  %582 = vst [vmem:[%s3 + $0xa8] sm:$0xf] %v454
  %583 = vst [vmem:[%s3 + $0xac] sm:$0xf] %v455
  %584 = vst [vmem:[%s3 + $0xb0] sm:$0xf] %v456
  %585 = vst [vmem:[%s3 + $0xb4] sm:$0xf] %v457
  %586 = vst [vmem:[%s3 + $0xb8] sm:$0xf] %v458
  %587 = vst [vmem:[%s3 + $0xbc] sm:$0xf] %v459
  %588 = vst [vmem:[%s3 + $0xc0] sm:$0xf] %v460
  %589 = vst [vmem:[%s3 + $0xc4] sm:$0xf] %v461
  %590 = vst [vmem:[%s3 + $0xc8] sm:$0xf] %v462
  %591 = vst [vmem:[%s3 + $0xcc] sm:$0xf] %v463
  %592 = vst [vmem:[%s3 + $0xd0] sm:$0xf] %v464
  %593 = vst [vmem:[%s3 + $0xd4] sm:$0xf] %v465
  %594 = vst [vmem:[%s3 + $0xd8] sm:$0xf] %v466
  %595 = vst [vmem:[%s3 + $0xdc] sm:$0xf] %v467
  %596 = vst [vmem:[%s3 + $0xe0] sm:$0xf] %v468
  %597 = vst [vmem:[%s3 + $0xe4] sm:$0xf] %v469
  %598 = vst [vmem:[%s3 + $0xe8] sm:$0xf] %v470
  %599 = vst [vmem:[%s3 + $0xec] sm:$0xf] %v471
  %600 = vst [vmem:[%s3 + $0xf0] sm:$0xf] %v472
  %601 = vst [vmem:[%s3 + $0xf4] sm:$0xf] %v473
  %602 = vst [vmem:[%s3 + $0xf8] sm:$0xf] %v474
  %603 = vst [vmem:[%s3 + $0xfc] sm:$0xf] %v475
  // Predicated region
  $region14: #{bottleneck_forward.7} parent=0 // pred_check
    _
  $region15: #{bottleneck_forward.7} parent=0 // pred_check_branch
    %605 = sbr.rel (0) target = $region17
  $region16: #{bottleneck_forward.7} parent=0 // pred_region
    _
  $region17: #{bottleneck_forward.7} parent=0 // pred_fallthru
    _
  // Predicated region
  $region18: #{bottleneck_forward.7} parent=0 // pred_check
    _
  $region19: #{bottleneck_forward.7} parent=0 // pred_check_branch
    %607 = sbr.rel (0) target = $region21
  $region20: #{bottleneck_forward.7} parent=0 // pred_region
    _
  $region21: #{bottleneck_forward.7} parent=0 // pred_fallthru
    _

// kernel: bottleneck_forward.11
$region0: #{bottleneck_forward.11}
  #allocation0 [shape = 'u32[]', space=smem, size = 0x4, offset = 0x4, fixed_abs, tag = 'smem constant byte address 0x4 - core index']
  #allocation1 [shape = 'u32[144,128]{1,0:T(1,128)}', space=vmem, size = 0x12000, scoped, tag = 'internal scratch']
  %s0 = inlined_call_operand.vmem [shape: f32[512,128], index: 0, kind: input, shape index: {}]
  %s1 = inlined_call_operand.vmem [shape: f32[1,128], index: 1, kind: input, shape index: {}]
  %s2 = inlined_call_operand.vmem [shape: f32[1,128], index: 2, kind: input, shape index: {}]
  %s3 = inlined_call_operand.vmem [shape: f32[512,128], index: 3, kind: input, shape index: {}]
  %s4 = inlined_call_operand.vmem [shape: f32[512,128], index: 4, kind: output, shape index: {}]
  %s5 = sld [smem:[#allocation0]]
  $region26: #{bottleneck_forward.11} parent=0
    _
  %s7 = ssub.s32 1, %s5
  %s8 = scalar_select 0, %s7, %s5
  // Predicated region
  $region2: #{bottleneck_forward.11} parent=0 // pred_check
    _
  $region3: #{bottleneck_forward.11} parent=0 // pred_check_branch
    %10 = sbr.rel (0) target = $region5
  $region4: #{bottleneck_forward.11} parent=0 // pred_region
    _
  $region5: #{bottleneck_forward.11} parent=0 // pred_fallthru
    _
  // Predicated region
  $region6: #{bottleneck_forward.11} parent=0 // pred_check
    _
  $region7: #{bottleneck_forward.11} parent=0 // pred_check_branch
    %12 = sbr.rel (0) target = $region9
  $region8: #{bottleneck_forward.11} parent=0 // pred_region
    _
  $region9: #{bottleneck_forward.11} parent=0 // pred_fallthru
    _
  // Predicated region
  $region10: #{bottleneck_forward.11} parent=0 // pred_check
    _
  $region11: #{bottleneck_forward.11} parent=0 // pred_check_branch
    %14 = sbr.rel (0) target = $region13
  $region12: #{bottleneck_forward.11} parent=0 // pred_region
    _
  $region13: #{bottleneck_forward.11} parent=0 // pred_fallthru
    _
  // Predicated region
  $region14: #{bottleneck_forward.11} parent=0 // pred_check
    _
  $region15: #{bottleneck_forward.11} parent=0 // pred_check_branch
    %16 = sbr.rel (0) target = $region17
  $region16: #{bottleneck_forward.11} parent=0 // pred_region
    _
  $region17: #{bottleneck_forward.11} parent=0 // pred_fallthru
    _
  %v17 = vld [vmem:[%s0] sm:$0xff]
  %v18 = vld [vmem:[%s0 + $0x8] sm:$0xff]
  %v19 = vld [vmem:[%s0 + $0x10] sm:$0xff]
  %v20 = vld [vmem:[%s0 + $0x18] sm:$0xff]
  %v21 = vld [vmem:[%s0 + $0x20] sm:$0xff]
  %v22 = vld [vmem:[%s0 + $0x28] sm:$0xff]
  %v23 = vld [vmem:[%s0 + $0x30] sm:$0xff]
  %v24 = vld [vmem:[%s0 + $0x38] sm:$0xff]
  %v25 = vld [vmem:[%s0 + $0x40] sm:$0xff]
  %v26 = vld [vmem:[%s0 + $0x48] sm:$0xff]
  %v27 = vld [vmem:[%s0 + $0x50] sm:$0xff]
  %v28 = vld [vmem:[%s0 + $0x58] sm:$0xff]
  %v29 = vld [vmem:[%s0 + $0x60] sm:$0xff]
  %v30 = vld [vmem:[%s0 + $0x68] sm:$0xff]
  %v31 = vld [vmem:[%s0 + $0x70] sm:$0xff]
  %v32 = vld [vmem:[%s0 + $0x78] sm:$0xff]
  %v33 = vld [vmem:[%s0 + $0x80] sm:$0xff]
  %v34 = vld [vmem:[%s0 + $0x88] sm:$0xff]
  %v35 = vld [vmem:[%s0 + $0x90] sm:$0xff]
  %v36 = vld [vmem:[%s0 + $0x98] sm:$0xff]
  %v37 = vld [vmem:[%s0 + $0xa0] sm:$0xff]
  %v38 = vld [vmem:[%s0 + $0xa8] sm:$0xff]
  %v39 = vld [vmem:[%s0 + $0xb0] sm:$0xff]
  %v40 = vld [vmem:[%s0 + $0xb8] sm:$0xff]
  %v41 = vld [vmem:[%s0 + $0xc0] sm:$0xff]
  %v42 = vld [vmem:[%s0 + $0xc8] sm:$0xff]
  %v43 = vld [vmem:[%s0 + $0xd0] sm:$0xff]
  %v44 = vld [vmem:[%s0 + $0xd8] sm:$0xff]
  %v45 = vld [vmem:[%s0 + $0xe0] sm:$0xff]
  %v46 = vld [vmem:[%s0 + $0xe8] sm:$0xff]
  %v47 = vld [vmem:[%s0 + $0xf0] sm:$0xff]
  %v48 = vld [vmem:[%s0 + $0xf8] sm:$0xff]
  %v49 = vld [vmem:[%s0 + $0x100] sm:$0xff]
  %v50 = vld [vmem:[%s0 + $0x108] sm:$0xff]
  %v51 = vld [vmem:[%s0 + $0x110] sm:$0xff]
  %v52 = vld [vmem:[%s0 + $0x118] sm:$0xff]
  %v53 = vld [vmem:[%s0 + $0x120] sm:$0xff]
  %v54 = vld [vmem:[%s0 + $0x128] sm:$0xff]
  %v55 = vld [vmem:[%s0 + $0x130] sm:$0xff]
  %v56 = vld [vmem:[%s0 + $0x138] sm:$0xff]
  %v57 = vld [vmem:[%s0 + $0x140] sm:$0xff]
  %v58 = vld [vmem:[%s0 + $0x148] sm:$0xff]
  %v59 = vld [vmem:[%s0 + $0x150] sm:$0xff]
  %v60 = vld [vmem:[%s0 + $0x158] sm:$0xff]
  %v61 = vld [vmem:[%s0 + $0x160] sm:$0xff]
  %v62 = vld [vmem:[%s0 + $0x168] sm:$0xff]
  %v63 = vld [vmem:[%s0 + $0x170] sm:$0xff]
  %v64 = vld [vmem:[%s0 + $0x178] sm:$0xff]
  %v65 = vld [vmem:[%s0 + $0x180] sm:$0xff]
  %v66 = vld [vmem:[%s0 + $0x188] sm:$0xff]
  %v67 = vld [vmem:[%s0 + $0x190] sm:$0xff]
  %v68 = vld [vmem:[%s0 + $0x198] sm:$0xff]
  %v69 = vld [vmem:[%s0 + $0x1a0] sm:$0xff]
  %v70 = vld [vmem:[%s0 + $0x1a8] sm:$0xff]
  %v71 = vld [vmem:[%s0 + $0x1b0] sm:$0xff]
  %v72 = vld [vmem:[%s0 + $0x1b8] sm:$0xff]
  %v73 = vld [vmem:[%s0 + $0x1c0] sm:$0xff]
  %v74 = vld [vmem:[%s0 + $0x1c8] sm:$0xff]
  %v75 = vld [vmem:[%s0 + $0x1d0] sm:$0xff]
  %v76 = vld [vmem:[%s0 + $0x1d8] sm:$0xff]
  %v77 = vld [vmem:[%s0 + $0x1e0] sm:$0xff]
  %v78 = vld [vmem:[%s0 + $0x1e8] sm:$0xff]
  %v79 = vld [vmem:[%s0 + $0x1f0] sm:$0xff]
  %v80 = vld [vmem:[%s0 + $0x1f8] sm:$0xff]
  %v81 = vld [vmem:[%s1] sm:$0x1]
  %v83 = vlaneseq
  %v84 = vshrl.u32 %v83, 7
  %v85 = vsub.s32 0, %v84
  %v86 = vrot.slane %v81, %v85
  %v88 = vmul.f32 %v17, %v86
  %v89 = vmul.f32 %v18, %v86
  %v90 = vmul.f32 %v19, %v86
  %v91 = vmul.f32 %v20, %v86
  %v92 = vmul.f32 %v21, %v86
  %v93 = vmul.f32 %v22, %v86
  %v94 = vmul.f32 %v23, %v86
  %v95 = vmul.f32 %v24, %v86
  %v96 = vmul.f32 %v25, %v86
  %v97 = vmul.f32 %v26, %v86
  %v98 = vmul.f32 %v27, %v86
  %v99 = vmul.f32 %v28, %v86
  %v100 = vmul.f32 %v29, %v86
  %v101 = vmul.f32 %v30, %v86
  %v102 = vmul.f32 %v31, %v86
  %v103 = vmul.f32 %v32, %v86
  %v104 = vmul.f32 %v33, %v86
  %v105 = vmul.f32 %v34, %v86
  %v106 = vmul.f32 %v35, %v86
  %v107 = vmul.f32 %v36, %v86
  %v108 = vmul.f32 %v37, %v86
  %v109 = vmul.f32 %v38, %v86
  %v110 = vmul.f32 %v39, %v86
  %v111 = vmul.f32 %v40, %v86
  %v112 = vmul.f32 %v41, %v86
  %v113 = vmul.f32 %v42, %v86
  %v114 = vmul.f32 %v43, %v86
  %v115 = vmul.f32 %v44, %v86
  %v116 = vmul.f32 %v45, %v86
  %v117 = vmul.f32 %v46, %v86
  %v118 = vmul.f32 %v47, %v86
  %v119 = vmul.f32 %v48, %v86
  %v120 = vmul.f32 %v49, %v86
  %v121 = vmul.f32 %v50, %v86
  %v122 = vmul.f32 %v51, %v86
  %v123 = vmul.f32 %v52, %v86
  %v124 = vmul.f32 %v53, %v86
  %v125 = vmul.f32 %v54, %v86
  %v126 = vmul.f32 %v55, %v86
  %v127 = vmul.f32 %v56, %v86
  %v128 = vmul.f32 %v57, %v86
  %v129 = vmul.f32 %v58, %v86
  %v130 = vmul.f32 %v59, %v86
  %v131 = vmul.f32 %v60, %v86
  %v132 = vmul.f32 %v61, %v86
  %v133 = vmul.f32 %v62, %v86
  %v134 = vmul.f32 %v63, %v86
  %v135 = vmul.f32 %v64, %v86
  %v136 = vmul.f32 %v65, %v86
  %v137 = vmul.f32 %v66, %v86
  %v138 = vmul.f32 %v67, %v86
  %v139 = vmul.f32 %v68, %v86
  %v140 = vmul.f32 %v69, %v86
  %v141 = vmul.f32 %v70, %v86
  %v142 = vmul.f32 %v71, %v86
  %v143 = vmul.f32 %v72, %v86
  %v144 = vmul.f32 %v73, %v86
  %v145 = vmul.f32 %v74, %v86
  %v146 = vmul.f32 %v75, %v86
  %v147 = vmul.f32 %v76, %v86
  %v148 = vmul.f32 %v77, %v86
  %v149 = vmul.f32 %v78, %v86
  %v150 = vmul.f32 %v79, %v86
  %v151 = vmul.f32 %v80, %v86
  %v152 = vld [vmem:[%s2] sm:$0x1]
  %v154 = vlaneseq
  %v155 = vshrl.u32 %v154, 7
  %v156 = vsub.s32 0, %v155
  %v157 = vrot.slane %v152, %v156
  %v159 = vadd.f32 %v88, %v157
  %v160 = vadd.f32 %v89, %v157
  %v161 = vadd.f32 %v90, %v157
  %v162 = vadd.f32 %v91, %v157
  %v163 = vadd.f32 %v92, %v157
  %v164 = vadd.f32 %v93, %v157
  %v165 = vadd.f32 %v94, %v157
  %v166 = vadd.f32 %v95, %v157
  %v167 = vadd.f32 %v96, %v157
  %v168 = vadd.f32 %v97, %v157
  %v169 = vadd.f32 %v98, %v157
  %v170 = vadd.f32 %v99, %v157
  %v171 = vadd.f32 %v100, %v157
  %v172 = vadd.f32 %v101, %v157
  %v173 = vadd.f32 %v102, %v157
  %v174 = vadd.f32 %v103, %v157
  %v175 = vadd.f32 %v104, %v157
  %v176 = vadd.f32 %v105, %v157
  %v177 = vadd.f32 %v106, %v157
  %v178 = vadd.f32 %v107, %v157
  %v179 = vadd.f32 %v108, %v157
  %v180 = vadd.f32 %v109, %v157
  %v181 = vadd.f32 %v110, %v157
  %v182 = vadd.f32 %v111, %v157
  %v183 = vadd.f32 %v112, %v157
  %v184 = vadd.f32 %v113, %v157
  %v185 = vadd.f32 %v114, %v157
  %v186 = vadd.f32 %v115, %v157
  %v187 = vadd.f32 %v116, %v157
  %v188 = vadd.f32 %v117, %v157
  %v189 = vadd.f32 %v118, %v157
  %v190 = vadd.f32 %v119, %v157
  %v191 = vadd.f32 %v120, %v157
  %v192 = vadd.f32 %v121, %v157
  %v193 = vadd.f32 %v122, %v157
  %v194 = vadd.f32 %v123, %v157
  %v195 = vadd.f32 %v124, %v157
  %v196 = vadd.f32 %v125, %v157
  %v197 = vadd.f32 %v126, %v157
  %v198 = vadd.f32 %v127, %v157
  %v199 = vadd.f32 %v128, %v157
  %v200 = vadd.f32 %v129, %v157
  %v201 = vadd.f32 %v130, %v157
  %v202 = vadd.f32 %v131, %v157
  %v203 = vadd.f32 %v132, %v157
  %v204 = vadd.f32 %v133, %v157
  %v205 = vadd.f32 %v134, %v157
  %v206 = vadd.f32 %v135, %v157
  %v207 = vadd.f32 %v136, %v157
  %v208 = vadd.f32 %v137, %v157
  %v209 = vadd.f32 %v138, %v157
  %v210 = vadd.f32 %v139, %v157
  %v211 = vadd.f32 %v140, %v157
  %v212 = vadd.f32 %v141, %v157
  %v213 = vadd.f32 %v142, %v157
  %v214 = vadd.f32 %v143, %v157
  %v215 = vadd.f32 %v144, %v157
  %v216 = vadd.f32 %v145, %v157
  %v217 = vadd.f32 %v146, %v157
  %v218 = vadd.f32 %v147, %v157
  %v219 = vadd.f32 %v148, %v157
  %v220 = vadd.f32 %v149, %v157
  %v221 = vadd.f32 %v150, %v157
  %v222 = vadd.f32 %v151, %v157
  %v223 = vld [vmem:[%s3] sm:$0xff]
  %v224 = vld [vmem:[%s3 + $0x8] sm:$0xff]
  %v225 = vld [vmem:[%s3 + $0x10] sm:$0xff]
  %v226 = vld [vmem:[%s3 + $0x18] sm:$0xff]
  %v227 = vld [vmem:[%s3 + $0x20] sm:$0xff]
  %v228 = vld [vmem:[%s3 + $0x28] sm:$0xff]
  %v229 = vld [vmem:[%s3 + $0x30] sm:$0xff]
  %v230 = vld [vmem:[%s3 + $0x38] sm:$0xff]
  %v231 = vld [vmem:[%s3 + $0x40] sm:$0xff]
  %v232 = vld [vmem:[%s3 + $0x48] sm:$0xff]
  %v233 = vld [vmem:[%s3 + $0x50] sm:$0xff]
  %v234 = vld [vmem:[%s3 + $0x58] sm:$0xff]
  %v235 = vld [vmem:[%s3 + $0x60] sm:$0xff]
  %v236 = vld [vmem:[%s3 + $0x68] sm:$0xff]
  %v237 = vld [vmem:[%s3 + $0x70] sm:$0xff]
  %v238 = vld [vmem:[%s3 + $0x78] sm:$0xff]
  %v239 = vld [vmem:[%s3 + $0x80] sm:$0xff]
  %v240 = vld [vmem:[%s3 + $0x88] sm:$0xff]
  %v241 = vld [vmem:[%s3 + $0x90] sm:$0xff]
  %v242 = vld [vmem:[%s3 + $0x98] sm:$0xff]
  %v243 = vld [vmem:[%s3 + $0xa0] sm:$0xff]
  %v244 = vld [vmem:[%s3 + $0xa8] sm:$0xff]
  %v245 = vld [vmem:[%s3 + $0xb0] sm:$0xff]
  %v246 = vld [vmem:[%s3 + $0xb8] sm:$0xff]
  %v247 = vld [vmem:[%s3 + $0xc0] sm:$0xff]
  %v248 = vld [vmem:[%s3 + $0xc8] sm:$0xff]
  %v249 = vld [vmem:[%s3 + $0xd0] sm:$0xff]
  %v250 = vld [vmem:[%s3 + $0xd8] sm:$0xff]
  %v251 = vld [vmem:[%s3 + $0xe0] sm:$0xff]
  %v252 = vld [vmem:[%s3 + $0xe8] sm:$0xff]
  %v253 = vld [vmem:[%s3 + $0xf0] sm:$0xff]
  %v254 = vld [vmem:[%s3 + $0xf8] sm:$0xff]
  %v255 = vld [vmem:[%s3 + $0x100] sm:$0xff]
  %v256 = vld [vmem:[%s3 + $0x108] sm:$0xff]
  %v257 = vld [vmem:[%s3 + $0x110] sm:$0xff]
  %v258 = vld [vmem:[%s3 + $0x118] sm:$0xff]
  %v259 = vld [vmem:[%s3 + $0x120] sm:$0xff]
  %v260 = vld [vmem:[%s3 + $0x128] sm:$0xff]
  %v261 = vld [vmem:[%s3 + $0x130] sm:$0xff]
  %v262 = vld [vmem:[%s3 + $0x138] sm:$0xff]
  %v263 = vld [vmem:[%s3 + $0x140] sm:$0xff]
  %v264 = vld [vmem:[%s3 + $0x148] sm:$0xff]
  %v265 = vld [vmem:[%s3 + $0x150] sm:$0xff]
  %v266 = vld [vmem:[%s3 + $0x158] sm:$0xff]
  %v267 = vld [vmem:[%s3 + $0x160] sm:$0xff]
  %v268 = vld [vmem:[%s3 + $0x168] sm:$0xff]
  %v269 = vld [vmem:[%s3 + $0x170] sm:$0xff]
  %v270 = vld [vmem:[%s3 + $0x178] sm:$0xff]
  %v271 = vld [vmem:[%s3 + $0x180] sm:$0xff]
  %v272 = vld [vmem:[%s3 + $0x188] sm:$0xff]
  %v273 = vld [vmem:[%s3 + $0x190] sm:$0xff]
  %v274 = vld [vmem:[%s3 + $0x198] sm:$0xff]
  %v275 = vld [vmem:[%s3 + $0x1a0] sm:$0xff]
  %v276 = vld [vmem:[%s3 + $0x1a8] sm:$0xff]
  %v277 = vld [vmem:[%s3 + $0x1b0] sm:$0xff]
  %v278 = vld [vmem:[%s3 + $0x1b8] sm:$0xff]
  %v279 = vld [vmem:[%s3 + $0x1c0] sm:$0xff]
  %v280 = vld [vmem:[%s3 + $0x1c8] sm:$0xff]
  %v281 = vld [vmem:[%s3 + $0x1d0] sm:$0xff]
  %v282 = vld [vmem:[%s3 + $0x1d8] sm:$0xff]
  %v283 = vld [vmem:[%s3 + $0x1e0] sm:$0xff]
  %v284 = vld [vmem:[%s3 + $0x1e8] sm:$0xff]
  %v285 = vld [vmem:[%s3 + $0x1f0] sm:$0xff]
  %v286 = vld [vmem:[%s3 + $0x1f8] sm:$0xff]
  %v287 = vadd.f32 %v159, %v223
  %v288 = vadd.f32 %v160, %v224
  %v289 = vadd.f32 %v161, %v225
  %v290 = vadd.f32 %v162, %v226
  %v291 = vadd.f32 %v163, %v227
  %v292 = vadd.f32 %v164, %v228
  %v293 = vadd.f32 %v165, %v229
  %v294 = vadd.f32 %v166, %v230
  %v295 = vadd.f32 %v167, %v231
  %v296 = vadd.f32 %v168, %v232
  %v297 = vadd.f32 %v169, %v233
  %v298 = vadd.f32 %v170, %v234
  %v299 = vadd.f32 %v171, %v235
  %v300 = vadd.f32 %v172, %v236
  %v301 = vadd.f32 %v173, %v237
  %v302 = vadd.f32 %v174, %v238
  %v303 = vadd.f32 %v175, %v239
  %v304 = vadd.f32 %v176, %v240
  %v305 = vadd.f32 %v177, %v241
  %v306 = vadd.f32 %v178, %v242
  %v307 = vadd.f32 %v179, %v243
  %v308 = vadd.f32 %v180, %v244
  %v309 = vadd.f32 %v181, %v245
  %v310 = vadd.f32 %v182, %v246
  %v311 = vadd.f32 %v183, %v247
  %v312 = vadd.f32 %v184, %v248
  %v313 = vadd.f32 %v185, %v249
  %v314 = vadd.f32 %v186, %v250
  %v315 = vadd.f32 %v187, %v251
  %v316 = vadd.f32 %v188, %v252
  %v317 = vadd.f32 %v189, %v253
  %v318 = vadd.f32 %v190, %v254
  %v319 = vadd.f32 %v191, %v255
  %v320 = vadd.f32 %v192, %v256
  %v321 = vadd.f32 %v193, %v257
  %v322 = vadd.f32 %v194, %v258
  %v323 = vadd.f32 %v195, %v259
  %v324 = vadd.f32 %v196, %v260
  %v325 = vadd.f32 %v197, %v261
  %v326 = vadd.f32 %v198, %v262
  %v327 = vadd.f32 %v199, %v263
  %v328 = vadd.f32 %v200, %v264
  %v329 = vadd.f32 %v201, %v265
  %v330 = vadd.f32 %v202, %v266
  %v331 = vadd.f32 %v203, %v267
  %v332 = vadd.f32 %v204, %v268
  %v333 = vadd.f32 %v205, %v269
  %v334 = vadd.f32 %v206, %v270
  %v335 = vadd.f32 %v207, %v271
  %v336 = vadd.f32 %v208, %v272
  %v337 = vadd.f32 %v209, %v273
  %v338 = vadd.f32 %v210, %v274
  %v339 = vadd.f32 %v211, %v275
  %v340 = vadd.f32 %v212, %v276
  %v341 = vadd.f32 %v213, %v277
  %v342 = vadd.f32 %v214, %v278
  %v343 = vadd.f32 %v215, %v279
  %v344 = vadd.f32 %v216, %v280
  %v345 = vadd.f32 %v217, %v281
  %v346 = vadd.f32 %v218, %v282
  %v347 = vadd.f32 %v219, %v283
  %v348 = vadd.f32 %v220, %v284
  %v349 = vadd.f32 %v221, %v285
  %v350 = vadd.f32 %v222, %v286
  %v351 = vmax.f32 %v287, 0.0
  %v352 = vmax.f32 %v288, 0.0
  %v353 = vmax.f32 %v289, 0.0
  %v354 = vmax.f32 %v290, 0.0
  %v355 = vmax.f32 %v291, 0.0
  %v356 = vmax.f32 %v292, 0.0
  %v357 = vmax.f32 %v293, 0.0
  %v358 = vmax.f32 %v294, 0.0
  %v359 = vmax.f32 %v295, 0.0
  %v360 = vmax.f32 %v296, 0.0
  %v361 = vmax.f32 %v297, 0.0
  %v362 = vmax.f32 %v298, 0.0
  %v363 = vmax.f32 %v299, 0.0
  %v364 = vmax.f32 %v300, 0.0
  %v365 = vmax.f32 %v301, 0.0
  %v366 = vmax.f32 %v302, 0.0
  %v367 = vmax.f32 %v303, 0.0
  %v368 = vmax.f32 %v304, 0.0
  %v369 = vmax.f32 %v305, 0.0
  %v370 = vmax.f32 %v306, 0.0
  %v371 = vmax.f32 %v307, 0.0
  %v372 = vmax.f32 %v308, 0.0
  %v373 = vmax.f32 %v309, 0.0
  %v374 = vmax.f32 %v310, 0.0
  %v375 = vmax.f32 %v311, 0.0
  %v376 = vmax.f32 %v312, 0.0
  %v377 = vmax.f32 %v313, 0.0
  %v378 = vmax.f32 %v314, 0.0
  %v379 = vmax.f32 %v315, 0.0
  %v380 = vmax.f32 %v316, 0.0
  %v381 = vmax.f32 %v317, 0.0
  %v382 = vmax.f32 %v318, 0.0
  %v383 = vmax.f32 %v319, 0.0
  %v384 = vmax.f32 %v320, 0.0
  %v385 = vmax.f32 %v321, 0.0
  %v386 = vmax.f32 %v322, 0.0
  %v387 = vmax.f32 %v323, 0.0
  %v388 = vmax.f32 %v324, 0.0
  %v389 = vmax.f32 %v325, 0.0
  %v390 = vmax.f32 %v326, 0.0
  %v391 = vmax.f32 %v327, 0.0
  %v392 = vmax.f32 %v328, 0.0
  %v393 = vmax.f32 %v329, 0.0
  %v394 = vmax.f32 %v330, 0.0
  %v395 = vmax.f32 %v331, 0.0
  %v396 = vmax.f32 %v332, 0.0
  %v397 = vmax.f32 %v333, 0.0
  %v398 = vmax.f32 %v334, 0.0
  %v399 = vmax.f32 %v335, 0.0
  %v400 = vmax.f32 %v336, 0.0
  %v401 = vmax.f32 %v337, 0.0
  %v402 = vmax.f32 %v338, 0.0
  %v403 = vmax.f32 %v339, 0.0
  %v404 = vmax.f32 %v340, 0.0
  %v405 = vmax.f32 %v341, 0.0
  %v406 = vmax.f32 %v342, 0.0
  %v407 = vmax.f32 %v343, 0.0
  %v408 = vmax.f32 %v344, 0.0
  %v409 = vmax.f32 %v345, 0.0
  %v410 = vmax.f32 %v346, 0.0
  %v411 = vmax.f32 %v347, 0.0
  %v412 = vmax.f32 %v348, 0.0
  %v413 = vmax.f32 %v349, 0.0
  %v414 = vmax.f32 %v350, 0.0
  %415 = vst [vmem:[%s4] sm:$0xff] %v351
  %416 = vst [vmem:[%s4 + $0x8] sm:$0xff] %v352
  %417 = vst [vmem:[%s4 + $0x10] sm:$0xff] %v353
  %418 = vst [vmem:[%s4 + $0x18] sm:$0xff] %v354
  %419 = vst [vmem:[%s4 + $0x20] sm:$0xff] %v355
  %420 = vst [vmem:[%s4 + $0x28] sm:$0xff] %v356
  %421 = vst [vmem:[%s4 + $0x30] sm:$0xff] %v357
  %422 = vst [vmem:[%s4 + $0x38] sm:$0xff] %v358
  %423 = vst [vmem:[%s4 + $0x40] sm:$0xff] %v359
  %424 = vst [vmem:[%s4 + $0x48] sm:$0xff] %v360
  %425 = vst [vmem:[%s4 + $0x50] sm:$0xff] %v361
  %426 = vst [vmem:[%s4 + $0x58] sm:$0xff] %v362
  %427 = vst [vmem:[%s4 + $0x60] sm:$0xff] %v363
  %428 = vst [vmem:[%s4 + $0x68] sm:$0xff] %v364
  %429 = vst [vmem:[%s4 + $0x70] sm:$0xff] %v365
  %430 = vst [vmem:[%s4 + $0x78] sm:$0xff] %v366
  %431 = vst [vmem:[%s4 + $0x80] sm:$0xff] %v367
  %432 = vst [vmem:[%s4 + $0x88] sm:$0xff] %v368
  %433 = vst [vmem:[%s4 + $0x90] sm:$0xff] %v369
  %434 = vst [vmem:[%s4 + $0x98] sm:$0xff] %v370
  %435 = vst [vmem:[%s4 + $0xa0] sm:$0xff] %v371
  %436 = vst [vmem:[%s4 + $0xa8] sm:$0xff] %v372
  %437 = vst [vmem:[%s4 + $0xb0] sm:$0xff] %v373
  %438 = vst [vmem:[%s4 + $0xb8] sm:$0xff] %v374
  %439 = vst [vmem:[%s4 + $0xc0] sm:$0xff] %v375
  %440 = vst [vmem:[%s4 + $0xc8] sm:$0xff] %v376
  %441 = vst [vmem:[%s4 + $0xd0] sm:$0xff] %v377
  %442 = vst [vmem:[%s4 + $0xd8] sm:$0xff] %v378
  %443 = vst [vmem:[%s4 + $0xe0] sm:$0xff] %v379
  %444 = vst [vmem:[%s4 + $0xe8] sm:$0xff] %v380
  %445 = vst [vmem:[%s4 + $0xf0] sm:$0xff] %v381
  %446 = vst [vmem:[%s4 + $0xf8] sm:$0xff] %v382
  %447 = vst [vmem:[%s4 + $0x100] sm:$0xff] %v383
  %448 = vst [vmem:[%s4 + $0x108] sm:$0xff] %v384
  %449 = vst [vmem:[%s4 + $0x110] sm:$0xff] %v385
  %450 = vst [vmem:[%s4 + $0x118] sm:$0xff] %v386
  %451 = vst [vmem:[%s4 + $0x120] sm:$0xff] %v387
  %452 = vst [vmem:[%s4 + $0x128] sm:$0xff] %v388
  %453 = vst [vmem:[%s4 + $0x130] sm:$0xff] %v389
  %454 = vst [vmem:[%s4 + $0x138] sm:$0xff] %v390
  %455 = vst [vmem:[%s4 + $0x140] sm:$0xff] %v391
  %456 = vst [vmem:[%s4 + $0x148] sm:$0xff] %v392
  %457 = vst [vmem:[%s4 + $0x150] sm:$0xff] %v393
  %458 = vst [vmem:[%s4 + $0x158] sm:$0xff] %v394
  %459 = vst [vmem:[%s4 + $0x160] sm:$0xff] %v395
  %460 = vst [vmem:[%s4 + $0x168] sm:$0xff] %v396
  %461 = vst [vmem:[%s4 + $0x170] sm:$0xff] %v397
  %462 = vst [vmem:[%s4 + $0x178] sm:$0xff] %v398
  %463 = vst [vmem:[%s4 + $0x180] sm:$0xff] %v399
  %464 = vst [vmem:[%s4 + $0x188] sm:$0xff] %v400
  %465 = vst [vmem:[%s4 + $0x190] sm:$0xff] %v401
  %466 = vst [vmem:[%s4 + $0x198] sm:$0xff] %v402
  %467 = vst [vmem:[%s4 + $0x1a0] sm:$0xff] %v403
  %468 = vst [vmem:[%s4 + $0x1a8] sm:$0xff] %v404
  %469 = vst [vmem:[%s4 + $0x1b0] sm:$0xff] %v405
  %470 = vst [vmem:[%s4 + $0x1b8] sm:$0xff] %v406
  %471 = vst [vmem:[%s4 + $0x1c0] sm:$0xff] %v407
  %472 = vst [vmem:[%s4 + $0x1c8] sm:$0xff] %v408
  %473 = vst [vmem:[%s4 + $0x1d0] sm:$0xff] %v409
  %474 = vst [vmem:[%s4 + $0x1d8] sm:$0xff] %v410
  %475 = vst [vmem:[%s4 + $0x1e0] sm:$0xff] %v411
  %476 = vst [vmem:[%s4 + $0x1e8] sm:$0xff] %v412
  %477 = vst [vmem:[%s4 + $0x1f0] sm:$0xff] %v413
  %478 = vst [vmem:[%s4 + $0x1f8] sm:$0xff] %v414
  // Predicated region
  $region18: #{bottleneck_forward.11} parent=0 // pred_check
    _
  $region19: #{bottleneck_forward.11} parent=0 // pred_check_branch
    %480 = sbr.rel (0) target = $region21
  $region20: #{bottleneck_forward.11} parent=0 // pred_region
    _
  $region21: #{bottleneck_forward.11} parent=0 // pred_fallthru
    _
  // Predicated region
  $region22: #{bottleneck_forward.11} parent=0 // pred_check
    _
  $region23: #{bottleneck_forward.11} parent=0 // pred_check_branch
    %482 = sbr.rel (0) target = $region25
  $region24: #{bottleneck_forward.11} parent=0 // pred_region
    _
  $region25: #{bottleneck_forward.11} parent=0 // pred_fallthru
    _

// kernel: bottleneck_forward.8
$region0: #{bottleneck_forward.8}
  #allocation0 [shape = 'u32[]', space=smem, size = 0x4, offset = 0x4, fixed_abs, tag = 'smem constant byte address 0x4 - core index']
  #allocation1 [shape = 'u32[144,128]{1,0:T(1,128)}', space=vmem, size = 0x12000, scoped, tag = 'internal scratch']
  #allocation2 [shape = 'f32[512,128]{1,0:T(8,128)}', space=vmem, size = 0x40000, scoped, tag = 'scratch operand']
  %s0 = inlined_call_operand.vmem [shape: bf16[512,1152], index: 0, kind: input, shape index: {}]
  %s1 = inlined_call_operand.vmem [shape: bf16[1152,128], index: 1, kind: input, shape index: {}]
  %s2 = inlined_call_operand.vmem [shape: f32[512,128], index: 2, kind: output, shape index: {0}]
  %s3 = inlined_call_operand.vmem [shape: f32[1,128], index: 3, kind: output, shape index: {1}]
  %s4 = inlined_call_operand.vmem [shape: f32[1,128], index: 4, kind: output, shape index: {2}]
  %5 = xla_tuple %s2, %s3, %s4
  %s6 = sld [smem:[#allocation0]]
  $region110: #{bottleneck_forward.8} parent=0
    _
  %s8 = ssub.s32 1, %s6
  %s9 = scalar_select 0, %s8, %s6
  $region1: #{bottleneck_forward.8} parent=0
    #allocation3 [shape = 'u8[262144]{0}', space=vmem, size = 0x40000, scoped, tag = 'input window, operand 0']
    loop: start=0, step=1, limit=11
    $region2: #{bottleneck_forward.8} parent=1 // loop_pre_header
      _
    $region3: #{bottleneck_forward.8} parent=1 // loop_header
      %s11 = sphi 0, %s15
      %p12 = scmp.ge.s32.totalorder %s11, 11
      %s18 = sphi 0, %s37
      %s19 = sphi 0, %s33
      %s20 = sphi 0, %s29
      %s21 = sphi 0, %s18
      %s22 = sphi 0, %s19
      %s23 = sphi 0, %s20
      %s24 = sphi 0, %s21
      %s25 = sphi 0, %s22
      %s26 = sphi 0, %s23
      %s42 = sphi 0, %s44
      %s45 = sphi 0, %s42
      %s46 = sphi 0, %s45
      %s62 = sphi 0, %s46
      %s70 = sphi 0, %s72
      %s73 = sphi 0, %s70
      %s74 = sphi 0, %s73
      %s90 = sphi 0, %s74
      %s98 = sphi 0, %s100
      %s101 = sphi 0, %s98
      %s102 = sphi 0, %s101
      %s118 = sphi 0, %s102
      %s124 = sphi 0, %s126
      %s127 = sphi 0, %s124
      %s128 = sphi 0, %s127
      %s144 = sphi 0, %s128
      %s150 = sphi 0, %s152
      %s153 = sphi 0, %s150
      %s154 = sphi 0, %s153
      %s170 = sphi 0, %s154
    $region4: #{bottleneck_forward.8} parent=1 // loop_header_branch
      %14 = sbr.rel (%p12) target = $region8
    $region5: #{bottleneck_forward.8} parent=1 // loop_body
      %s16 = ssub.s32 %s11, 1
      %s17 = ssub.s32 %s11, 2
      %s27 = sadd.s32 1, %s20
      %p28 = scmp.ge.s32.totalorder %s27, 9
      %s29 = scalar_select %p28, 0, %s27
      %s30 = sadd.s32 1, %s19
      %s31 = scalar_select %p28, %s30, %s19
      %p32 = scmp.ge.s32.totalorder %s31, 1
      %s33 = scalar_select %p32, 0, %s31
      %s34 = sadd.s32 1, %s18
      %s35 = scalar_select %p32, %s34, %s18
      %p36 = scmp.ge.s32.totalorder %s35, 1
      %s37 = scalar_select %p36, 0, %s35
      %s38 = ssub.s32 %s19, %s33
      %s39 = ssub.s32 %s20, %s29
      %s40 = sor.u32 %s38, %s39
      %p41 = scmp.eq.s32.totalorder %s40, 0
      %s43 = sadd.s32 %s42, 1
      %s44 = scalar_select %p41, %s42, %s43
      %p47 = pneg %p41
      %p48 = scmp.eq.s32.totalorder %s11, 8
      %p49 = por %p47, %p48
      %p50 = scmp.ne.s32.totalorder %s42, %s45
      %p51 = scmp.eq.s32.totalorder %s11, 0
      %p52 = por %p50, %p51
      %p53 = scmp.ne.s32.totalorder %s42, %s45
      %p54 = scmp.eq.s32.totalorder %s16, 8
      %p55 = por %p53, %p54
      %p56 = scmp.ne.s32.totalorder %s45, %s46
      %p57 = scmp.eq.s32.totalorder %s16, 0
      %p58 = por %p56, %p57
      %p59 = scmp.ne.s32.totalorder %s45, %s46
      %p60 = scmp.eq.s32.totalorder %s17, 8
      %p61 = por %p59, %p60
      %p63 = scmp.ne.s32.totalorder %s46, %s62
      %p64 = scmp.eq.s32.totalorder %s17, 0
      %p65 = por %p63, %p64
      %s66 = ssub.s32 %s20, %s29
      %s67 = ssub.s32 %s18, %s37
      %s68 = sor.u32 %s66, %s67
      %p69 = scmp.eq.s32.totalorder %s68, 0
      %s71 = sadd.s32 %s70, 1
      %s72 = scalar_select %p69, %s70, %s71
      %p75 = pneg %p69
      %p76 = scmp.eq.s32.totalorder %s11, 8
      %p77 = por %p75, %p76
      %p78 = scmp.ne.s32.totalorder %s70, %s73
      %p79 = scmp.eq.s32.totalorder %s11, 0
      %p80 = por %p78, %p79
      %p81 = scmp.ne.s32.totalorder %s70, %s73
      %p82 = scmp.eq.s32.totalorder %s16, 8
      %p83 = por %p81, %p82
      %p84 = scmp.ne.s32.totalorder %s73, %s74
      %p85 = scmp.eq.s32.totalorder %s16, 0
      %p86 = por %p84, %p85
      %p87 = scmp.ne.s32.totalorder %s73, %s74
      %p88 = scmp.eq.s32.totalorder %s17, 8
      %p89 = por %p87, %p88
      %p91 = scmp.ne.s32.totalorder %s74, %s90
      %p92 = scmp.eq.s32.totalorder %s17, 0
      %p93 = por %p91, %p92
      %s94 = ssub.s32 %s19, %s33
      %s95 = ssub.s32 %s18, %s37
      %s96 = sor.u32 %s94, %s95
      %p97 = scmp.eq.s32.totalorder %s96, 0
      %s99 = sadd.s32 %s98, 1
      %s100 = scalar_select %p97, %s98, %s99
      %p103 = pneg %p97
      %p104 = scmp.eq.s32.totalorder %s11, 8
      %p105 = por %p103, %p104
      %p106 = scmp.ne.s32.totalorder %s98, %s101
      %p107 = scmp.eq.s32.totalorder %s11, 0
      %p108 = por %p106, %p107
      %p109 = scmp.ne.s32.totalorder %s98, %s101
      %p110 = scmp.eq.s32.totalorder %s16, 8
      %p111 = por %p109, %p110
      %p112 = scmp.ne.s32.totalorder %s101, %s102
      %p113 = scmp.eq.s32.totalorder %s16, 0
      %p114 = por %p112, %p113
      %p115 = scmp.ne.s32.totalorder %s101, %s102
      %p116 = scmp.eq.s32.totalorder %s17, 8
      %p117 = por %p115, %p116
      %p119 = scmp.ne.s32.totalorder %s102, %s118
      %p120 = scmp.eq.s32.totalorder %s17, 0
      %p121 = por %p119, %p120
      %s122 = ssub.s32 %s18, %s37
      %p123 = scmp.eq.s32.totalorder %s122, 0
      %s125 = sadd.s32 %s124, 1
      %s126 = scalar_select %p123, %s124, %s125
      %p129 = pneg %p123
      %p130 = scmp.eq.s32.totalorder %s11, 8
      %p131 = por %p129, %p130
      %p132 = scmp.ne.s32.totalorder %s124, %s127
      %p133 = scmp.eq.s32.totalorder %s11, 0
      %p134 = por %p132, %p133
      %p135 = scmp.ne.s32.totalorder %s124, %s127
      %p136 = scmp.eq.s32.totalorder %s16, 8
      %p137 = por %p135, %p136
      %p138 = scmp.ne.s32.totalorder %s127, %s128
      %p139 = scmp.eq.s32.totalorder %s16, 0
      %p140 = por %p138, %p139
      %p141 = scmp.ne.s32.totalorder %s127, %s128
      %p142 = scmp.eq.s32.totalorder %s17, 8
      %p143 = por %p141, %p142
      %p145 = scmp.ne.s32.totalorder %s128, %s144
      %p146 = scmp.eq.s32.totalorder %s17, 0
      %p147 = por %p145, %p146
      %s148 = ssub.s32 %s18, %s37
      %p149 = scmp.eq.s32.totalorder %s148, 0
      %s151 = sadd.s32 %s150, 1
      %s152 = scalar_select %p149, %s150, %s151
      %p155 = pneg %p149
      %p156 = scmp.eq.s32.totalorder %s11, 8
      %p157 = por %p155, %p156
      %p158 = scmp.ne.s32.totalorder %s150, %s153
      %p159 = scmp.eq.s32.totalorder %s11, 0
      %p160 = por %p158, %p159
      %p161 = scmp.ne.s32.totalorder %s150, %s153
      %p162 = scmp.eq.s32.totalorder %s16, 8
      %p163 = por %p161, %p162
      %p164 = scmp.ne.s32.totalorder %s153, %s154
      %p165 = scmp.eq.s32.totalorder %s16, 0
      %p166 = por %p164, %p165
      %p167 = scmp.ne.s32.totalorder %s153, %s154
      %p168 = scmp.eq.s32.totalorder %s17, 8
      %p169 = por %p167, %p168
      %p171 = scmp.ne.s32.totalorder %s154, %s170
      %p172 = scmp.eq.s32.totalorder %s17, 0
      %p173 = por %p171, %p172
      %p174 = scmp.le.s32.totalorder 1, %s11
      %p175 = scmp.lt.s32.totalorder %s11, 10
      %p176 = pnand %p174, %p175
      %p177 = pneg %p176
      // Predicated region
      $region9: #{bottleneck_forward.8} parent=5 // pred_check
        _
      $region10: #{bottleneck_forward.8} parent=5 // pred_check_branch
        %179 = sbr.rel (%p176) target = $region12
      $region11: #{bottleneck_forward.8} parent=5 // pred_region
        %s180 = ssub.s32 %s11, 1
      $region12: #{bottleneck_forward.8} parent=5 // pred_fallthru
        _
      %p181 = scmp.lt.s32.totalorder %s11, 9
      // Predicated region
      $region13: #{bottleneck_forward.8} parent=5 // pred_check
        %p182 = pneg %p181
      $region14: #{bottleneck_forward.8} parent=5 // pred_check_branch
        %184 = sbr.rel (%p182) target = $region16
      $region15: #{bottleneck_forward.8} parent=5 // pred_region
        // Predicated region
        $region17: #{bottleneck_forward.8} parent=15 // pred_check
          %p185 = pneg %p52
        $region18: #{bottleneck_forward.8} parent=15 // pred_check_branch
          %187 = sbr.rel (%p185) target = $region20
        $region19: #{bottleneck_forward.8} parent=15 // pred_region
          %s188 = sand.u32 %s42, 1
          %s189 = sand.u32 %s42, 1
          %s190 = smul.addr %s189, 256
          %s191 = scalar_lea.vmem [#allocation3], %s190
          %s192 = smul.u32 64, %s19
          %s193 = smul.addr %s192, 9
          %s194 = sadd.s32 %s20, %s193
          %s195 = smul.addr %s194, 4
          %s196 = scalar_lea.vmem %s0, %s195
          // Predicated region
          $region21: #{bottleneck_forward.8} parent=19 // pred_check
            _
          $region22: #{bottleneck_forward.8} parent=19 // pred_check_branch
            %198 = sbr.rel (0) target = $region24
          $region23: #{bottleneck_forward.8} parent=19 // pred_region
            // Predicated region
            $region25: #{bottleneck_forward.8} parent=23 // pred_check
              _
            $region26: #{bottleneck_forward.8} parent=23 // pred_check_branch
              %200 = sbr.rel target = $region28
            $region27: #{bottleneck_forward.8} parent=23 // pred_region
              // Predicated region
              $region40: #{bottleneck_forward.8} parent=27 // pred_check
                _
              $region41: #{bottleneck_forward.8} parent=27 // pred_check_branch
                %341 = sbr.rel (0) target = $region43
              $region42: #{bottleneck_forward.8} parent=27 // pred_region
                loop: start=0, step=1, limit=1
                $region44: #{bottleneck_forward.8} parent=42 // loop_pre_header
                  _
                $region45: #{bottleneck_forward.8} parent=42 // loop_header
                  %s343 = sphi 0, %s347
                  %p344 = scmp.ge.s32.totalorder %s343, 1
                  %s348 = sphi %s196, %s196
                  %s349 = sphi %s191, %s191
                $region46: #{bottleneck_forward.8} parent=42 // loop_header_branch
                  %346 = sbr.rel (%p344) target = $region50
                $region47: #{bottleneck_forward.8} parent=42 // loop_body
                  _
                $region48: #{bottleneck_forward.8} parent=42 // loop_footer
                  %s347 = sadd.s32 1, %s343
                $region49: #{bottleneck_forward.8} parent=42 // loop_footer_branch
                  %342 = sbr.rel target = $region45
                $region50: #{bottleneck_forward.8} parent=42 // loop_exit
                  _
                loop: start=0, step=1, limit=1
                $region51: #{bottleneck_forward.8} parent=42 // loop_pre_header
                  _
                $region52: #{bottleneck_forward.8} parent=42 // loop_header
                  %s352 = sphi 0, %s356
                  %p353 = scmp.ge.s32.totalorder %s352, 1
                  %s357 = sphi %s196, %s196
                  %s358 = sphi %s191, %s191
                $region53: #{bottleneck_forward.8} parent=42 // loop_header_branch
                  %355 = sbr.rel (%p353) target = $region57
                $region54: #{bottleneck_forward.8} parent=42 // loop_body
                  %v359 = vld [vmem:[%s357] sm:$0xf]
                  %360 = vst [vmem:[%s358] sm:$0xf] %v359
                  %v361 = vld [vmem:[%s357 + $0x24] sm:$0xf]
                  %362 = vst [vmem:[%s358 + $0x4] sm:$0xf] %v361
                  %v363 = vld [vmem:[%s357 + $0x48] sm:$0xf]
                  %364 = vst [vmem:[%s358 + $0x8] sm:$0xf] %v363
                  %v365 = vld [vmem:[%s357 + $0x6c] sm:$0xf]
                  %366 = vst [vmem:[%s358 + $0xc] sm:$0xf] %v365
                  %v367 = vld [vmem:[%s357 + $0x90] sm:$0xf]
                  %368 = vst [vmem:[%s358 + $0x10] sm:$0xf] %v367
                  %v369 = vld [vmem:[%s357 + $0xb4] sm:$0xf]
                  %370 = vst [vmem:[%s358 + $0x14] sm:$0xf] %v369
                  %v371 = vld [vmem:[%s357 + $0xd8] sm:$0xf]
                  %372 = vst [vmem:[%s358 + $0x18] sm:$0xf] %v371
                  %v373 = vld [vmem:[%s357 + $0xfc] sm:$0xf]
                  %374 = vst [vmem:[%s358 + $0x1c] sm:$0xf] %v373
                  %v375 = vld [vmem:[%s357 + $0x120] sm:$0xf]
                  %376 = vst [vmem:[%s358 + $0x20] sm:$0xf] %v375
                  %v377 = vld [vmem:[%s357 + $0x144] sm:$0xf]
                  %378 = vst [vmem:[%s358 + $0x24] sm:$0xf] %v377
                  %v379 = vld [vmem:[%s357 + $0x168] sm:$0xf]
                  %380 = vst [vmem:[%s358 + $0x28] sm:$0xf] %v379
                  %v381 = vld [vmem:[%s357 + $0x18c] sm:$0xf]
                  %382 = vst [vmem:[%s358 + $0x2c] sm:$0xf] %v381
                  %v383 = vld [vmem:[%s357 + $0x1b0] sm:$0xf]
                  %384 = vst [vmem:[%s358 + $0x30] sm:$0xf] %v383
                  %v385 = vld [vmem:[%s357 + $0x1d4] sm:$0xf]
                  %386 = vst [vmem:[%s358 + $0x34] sm:$0xf] %v385
                  %v387 = vld [vmem:[%s357 + $0x1f8] sm:$0xf]
                  %388 = vst [vmem:[%s358 + $0x38] sm:$0xf] %v387
                  %v389 = vld [vmem:[%s357 + $0x21c] sm:$0xf]
                  %390 = vst [vmem:[%s358 + $0x3c] sm:$0xf] %v389
                  %v391 = vld [vmem:[%s357 + $0x240] sm:$0xf]
                  %392 = vst [vmem:[%s358 + $0x40] sm:$0xf] %v391
                  %v393 = vld [vmem:[%s357 + $0x264] sm:$0xf]
                  %394 = vst [vmem:[%s358 + $0x44] sm:$0xf] %v393
                  %v395 = vld [vmem:[%s357 + $0x288] sm:$0xf]
                  %396 = vst [vmem:[%s358 + $0x48] sm:$0xf] %v395
                  %v397 = vld [vmem:[%s357 + $0x2ac] sm:$0xf]
                  %398 = vst [vmem:[%s358 + $0x4c] sm:$0xf] %v397
                  %v399 = vld [vmem:[%s357 + $0x2d0] sm:$0xf]
                  %400 = vst [vmem:[%s358 + $0x50] sm:$0xf] %v399
                  %v401 = vld [vmem:[%s357 + $0x2f4] sm:$0xf]
                  %402 = vst [vmem:[%s358 + $0x54] sm:$0xf] %v401
                  %v403 = vld [vmem:[%s357 + $0x318] sm:$0xf]
                  %404 = vst [vmem:[%s358 + $0x58] sm:$0xf] %v403
                  %v405 = vld [vmem:[%s357 + $0x33c] sm:$0xf]
                  %406 = vst [vmem:[%s358 + $0x5c] sm:$0xf] %v405
                  %v407 = vld [vmem:[%s357 + $0x360] sm:$0xf]
                  %408 = vst [vmem:[%s358 + $0x60] sm:$0xf] %v407
                  %v409 = vld [vmem:[%s357 + $0x384] sm:$0xf]
                  %410 = vst [vmem:[%s358 + $0x64] sm:$0xf] %v409
                  %v411 = vld [vmem:[%s357 + $0x3a8] sm:$0xf]
                  %412 = vst [vmem:[%s358 + $0x68] sm:$0xf] %v411
                  %v413 = vld [vmem:[%s357 + $0x3cc] sm:$0xf]
                  %414 = vst [vmem:[%s358 + $0x6c] sm:$0xf] %v413
                  %v415 = vld [vmem:[%s357 + $0x3f0] sm:$0xf]
                  %416 = vst [vmem:[%s358 + $0x70] sm:$0xf] %v415
                  %v417 = vld [vmem:[%s357 + $0x414] sm:$0xf]
                  %418 = vst [vmem:[%s358 + $0x74] sm:$0xf] %v417
                  %v419 = vld [vmem:[%s357 + $0x438] sm:$0xf]
                  %420 = vst [vmem:[%s358 + $0x78] sm:$0xf] %v419
                  %v421 = vld [vmem:[%s357 + $0x45c] sm:$0xf]
                  %422 = vst [vmem:[%s358 + $0x7c] sm:$0xf] %v421
                  %v423 = vld [vmem:[%s357 + $0x480] sm:$0xf]
                  %424 = vst [vmem:[%s358 + $0x80] sm:$0xf] %v423
                  %v425 = vld [vmem:[%s357 + $0x4a4] sm:$0xf]
                  %426 = vst [vmem:[%s358 + $0x84] sm:$0xf] %v425
                  %v427 = vld [vmem:[%s357 + $0x4c8] sm:$0xf]
                  %428 = vst [vmem:[%s358 + $0x88] sm:$0xf] %v427
                  %v429 = vld [vmem:[%s357 + $0x4ec] sm:$0xf]
                  %430 = vst [vmem:[%s358 + $0x8c] sm:$0xf] %v429
                  %v431 = vld [vmem:[%s357 + $0x510] sm:$0xf]
                  %432 = vst [vmem:[%s358 + $0x90] sm:$0xf] %v431
                  %v433 = vld [vmem:[%s357 + $0x534] sm:$0xf]
                  %434 = vst [vmem:[%s358 + $0x94] sm:$0xf] %v433
                  %v435 = vld [vmem:[%s357 + $0x558] sm:$0xf]
                  %436 = vst [vmem:[%s358 + $0x98] sm:$0xf] %v435
                  %v437 = vld [vmem:[%s357 + $0x57c] sm:$0xf]
                  %438 = vst [vmem:[%s358 + $0x9c] sm:$0xf] %v437
                  %v439 = vld [vmem:[%s357 + $0x5a0] sm:$0xf]
                  %440 = vst [vmem:[%s358 + $0xa0] sm:$0xf] %v439
                  %v441 = vld [vmem:[%s357 + $0x5c4] sm:$0xf]
                  %442 = vst [vmem:[%s358 + $0xa4] sm:$0xf] %v441
                  %v443 = vld [vmem:[%s357 + $0x5e8] sm:$0xf]
                  %444 = vst [vmem:[%s358 + $0xa8] sm:$0xf] %v443
                  %v445 = vld [vmem:[%s357 + $0x60c] sm:$0xf]
                  %446 = vst [vmem:[%s358 + $0xac] sm:$0xf] %v445
                  %v447 = vld [vmem:[%s357 + $0x630] sm:$0xf]
                  %448 = vst [vmem:[%s358 + $0xb0] sm:$0xf] %v447
                  %v449 = vld [vmem:[%s357 + $0x654] sm:$0xf]
                  %450 = vst [vmem:[%s358 + $0xb4] sm:$0xf] %v449
                  %v451 = vld [vmem:[%s357 + $0x678] sm:$0xf]
                  %452 = vst [vmem:[%s358 + $0xb8] sm:$0xf] %v451
                  %v453 = vld [vmem:[%s357 + $0x69c] sm:$0xf]
                  %454 = vst [vmem:[%s358 + $0xbc] sm:$0xf] %v453
                  %v455 = vld [vmem:[%s357 + $0x6c0] sm:$0xf]
                  %456 = vst [vmem:[%s358 + $0xc0] sm:$0xf] %v455
                  %v457 = vld [vmem:[%s357 + $0x6e4] sm:$0xf]
                  %458 = vst [vmem:[%s358 + $0xc4] sm:$0xf] %v457
                  %v459 = vld [vmem:[%s357 + $0x708] sm:$0xf]
                  %460 = vst [vmem:[%s358 + $0xc8] sm:$0xf] %v459
                  %v461 = vld [vmem:[%s357 + $0x72c] sm:$0xf]
                  %462 = vst [vmem:[%s358 + $0xcc] sm:$0xf] %v461
                  %v463 = vld [vmem:[%s357 + $0x750] sm:$0xf]
                  %464 = vst [vmem:[%s358 + $0xd0] sm:$0xf] %v463
                  %v465 = vld [vmem:[%s357 + $0x774] sm:$0xf]
                  %466 = vst [vmem:[%s358 + $0xd4] sm:$0xf] %v465
                  %v467 = vld [vmem:[%s357 + $0x798] sm:$0xf]
                  %468 = vst [vmem:[%s358 + $0xd8] sm:$0xf] %v467
                  %v469 = vld [vmem:[%s357 + $0x7bc] sm:$0xf]
                  %470 = vst [vmem:[%s358 + $0xdc] sm:$0xf] %v469
                  %v471 = vld [vmem:[%s357 + $0x7e0] sm:$0xf]
                  %472 = vst [vmem:[%s358 + $0xe0] sm:$0xf] %v471
                  %v473 = vld [vmem:[%s357 + $0x804] sm:$0xf]
                  %474 = vst [vmem:[%s358 + $0xe4] sm:$0xf] %v473
                  %v475 = vld [vmem:[%s357 + $0x828] sm:$0xf]
                  %476 = vst [vmem:[%s358 + $0xe8] sm:$0xf] %v475
                  %v477 = vld [vmem:[%s357 + $0x84c] sm:$0xf]
                  %478 = vst [vmem:[%s358 + $0xec] sm:$0xf] %v477
                  %v479 = vld [vmem:[%s357 + $0x870] sm:$0xf]
                  %480 = vst [vmem:[%s358 + $0xf0] sm:$0xf] %v479
                  %v481 = vld [vmem:[%s357 + $0x894] sm:$0xf]
                  %482 = vst [vmem:[%s358 + $0xf4] sm:$0xf] %v481
                  %v483 = vld [vmem:[%s357 + $0x8b8] sm:$0xf]
                  %484 = vst [vmem:[%s358 + $0xf8] sm:$0xf] %v483
                  %v485 = vld [vmem:[%s357 + $0x8dc] sm:$0xf]
                  %486 = vst [vmem:[%s358 + $0xfc] sm:$0xf] %v485
                $region55: #{bottleneck_forward.8} parent=42 // loop_footer
                  %s356 = sadd.s32 1, %s352
                $region56: #{bottleneck_forward.8} parent=42 // loop_footer_branch
                  %351 = sbr.rel target = $region52
                $region57: #{bottleneck_forward.8} parent=42 // loop_exit
                  _
              $region43: #{bottleneck_forward.8} parent=27 // pred_fallthru
                _
            $region28: #{bottleneck_forward.8} parent=23 // pred_fallthru
              _
            // Predicated region
            $region29: #{bottleneck_forward.8} parent=23 // pred_check
              _
            $region30: #{bottleneck_forward.8} parent=23 // pred_check_branch
              %202 = sbr.rel (0) target = $region32
            $region31: #{bottleneck_forward.8} parent=23 // pred_region
              loop: start=0, step=1, limit=1
              $region33: #{bottleneck_forward.8} parent=31 // loop_pre_header
                _
              $region34: #{bottleneck_forward.8} parent=31 // loop_header
                %s205 = sphi 0, %s209
                %p206 = scmp.ge.s32.totalorder %s205, 1
                %s210 = sphi %s196, %s196
                %s211 = sphi %s191, %s191
              $region35: #{bottleneck_forward.8} parent=31 // loop_header_branch
                %208 = sbr.rel (%p206) target = $region39
              $region36: #{bottleneck_forward.8} parent=31 // loop_body
                %v212 = vld [vmem:[%s210] sm:$0xf]
                %213 = vst [vmem:[%s211] sm:$0xf] %v212
                %v214 = vld [vmem:[%s210 + $0x24] sm:$0xf]
                %215 = vst [vmem:[%s211 + $0x4] sm:$0xf] %v214
                %v216 = vld [vmem:[%s210 + $0x48] sm:$0xf]
                %217 = vst [vmem:[%s211 + $0x8] sm:$0xf] %v216
                %v218 = vld [vmem:[%s210 + $0x6c] sm:$0xf]
                %219 = vst [vmem:[%s211 + $0xc] sm:$0xf] %v218
                %v220 = vld [vmem:[%s210 + $0x90] sm:$0xf]
                %221 = vst [vmem:[%s211 + $0x10] sm:$0xf] %v220
                %v222 = vld [vmem:[%s210 + $0xb4] sm:$0xf]
                %223 = vst [vmem:[%s211 + $0x14] sm:$0xf] %v222
                %v224 = vld [vmem:[%s210 + $0xd8] sm:$0xf]
                %225 = vst [vmem:[%s211 + $0x18] sm:$0xf] %v224
                %v226 = vld [vmem:[%s210 + $0xfc] sm:$0xf]
                %227 = vst [vmem:[%s211 + $0x1c] sm:$0xf] %v226
                %v228 = vld [vmem:[%s210 + $0x120] sm:$0xf]
                %229 = vst [vmem:[%s211 + $0x20] sm:$0xf] %v228
                %v230 = vld [vmem:[%s210 + $0x144] sm:$0xf]
                %231 = vst [vmem:[%s211 + $0x24] sm:$0xf] %v230
                %v232 = vld [vmem:[%s210 + $0x168] sm:$0xf]
                %233 = vst [vmem:[%s211 + $0x28] sm:$0xf] %v232
                %v234 = vld [vmem:[%s210 + $0x18c] sm:$0xf]
                %235 = vst [vmem:[%s211 + $0x2c] sm:$0xf] %v234
                %v236 = vld [vmem:[%s210 + $0x1b0] sm:$0xf]
                %237 = vst [vmem:[%s211 + $0x30] sm:$0xf] %v236
                %v238 = vld [vmem:[%s210 + $0x1d4] sm:$0xf]
                %239 = vst [vmem:[%s211 + $0x34] sm:$0xf] %v238
                %v240 = vld [vmem:[%s210 + $0x1f8] sm:$0xf]
                %241 = vst [vmem:[%s211 + $0x38] sm:$0xf] %v240
                %v242 = vld [vmem:[%s210 + $0x21c] sm:$0xf]
                %243 = vst [vmem:[%s211 + $0x3c] sm:$0xf] %v242
                %v244 = vld [vmem:[%s210 + $0x240] sm:$0xf]
                %245 = vst [vmem:[%s211 + $0x40] sm:$0xf] %v244
                %v246 = vld [vmem:[%s210 + $0x264] sm:$0xf]
                %247 = vst [vmem:[%s211 + $0x44] sm:$0xf] %v246
                %v248 = vld [vmem:[%s210 + $0x288] sm:$0xf]
                %249 = vst [vmem:[%s211 + $0x48] sm:$0xf] %v248
                %v250 = vld [vmem:[%s210 + $0x2ac] sm:$0xf]
                %251 = vst [vmem:[%s211 + $0x4c] sm:$0xf] %v250
                %v252 = vld [vmem:[%s210 + $0x2d0] sm:$0xf]
                %253 = vst [vmem:[%s211 + $0x50] sm:$0xf] %v252
                %v254 = vld [vmem:[%s210 + $0x2f4] sm:$0xf]
                %255 = vst [vmem:[%s211 + $0x54] sm:$0xf] %v254
                %v256 = vld [vmem:[%s210 + $0x318] sm:$0xf]
                %257 = vst [vmem:[%s211 + $0x58] sm:$0xf] %v256
                %v258 = vld [vmem:[%s210 + $0x33c] sm:$0xf]
                %259 = vst [vmem:[%s211 + $0x5c] sm:$0xf] %v258
                %v260 = vld [vmem:[%s210 + $0x360] sm:$0xf]
                %261 = vst [vmem:[%s211 + $0x60] sm:$0xf] %v260
                %v262 = vld [vmem:[%s210 + $0x384] sm:$0xf]
                %263 = vst [vmem:[%s211 + $0x64] sm:$0xf] %v262
                %v264 = vld [vmem:[%s210 + $0x3a8] sm:$0xf]
                %265 = vst [vmem:[%s211 + $0x68] sm:$0xf] %v264
                %v266 = vld [vmem:[%s210 + $0x3cc] sm:$0xf]
                %267 = vst [vmem:[%s211 + $0x6c] sm:$0xf] %v266
                %v268 = vld [vmem:[%s210 + $0x3f0] sm:$0xf]
                %269 = vst [vmem:[%s211 + $0x70] sm:$0xf] %v268
                %v270 = vld [vmem:[%s210 + $0x414] sm:$0xf]
                %271 = vst [vmem:[%s211 + $0x74] sm:$0xf] %v270
                %v272 = vld [vmem:[%s210 + $0x438] sm:$0xf]
                %273 = vst [vmem:[%s211 + $0x78] sm:$0xf] %v272
                %v274 = vld [vmem:[%s210 + $0x45c] sm:$0xf]
                %275 = vst [vmem:[%s211 + $0x7c] sm:$0xf] %v274
                %v276 = vld [vmem:[%s210 + $0x480] sm:$0xf]
                %277 = vst [vmem:[%s211 + $0x80] sm:$0xf] %v276
                %v278 = vld [vmem:[%s210 + $0x4a4] sm:$0xf]
                %279 = vst [vmem:[%s211 + $0x84] sm:$0xf] %v278
                %v280 = vld [vmem:[%s210 + $0x4c8] sm:$0xf]
                %281 = vst [vmem:[%s211 + $0x88] sm:$0xf] %v280
                %v282 = vld [vmem:[%s210 + $0x4ec] sm:$0xf]
                %283 = vst [vmem:[%s211 + $0x8c] sm:$0xf] %v282
                %v284 = vld [vmem:[%s210 + $0x510] sm:$0xf]
                %285 = vst [vmem:[%s211 + $0x90] sm:$0xf] %v284
                %v286 = vld [vmem:[%s210 + $0x534] sm:$0xf]
                %287 = vst [vmem:[%s211 + $0x94] sm:$0xf] %v286
                %v288 = vld [vmem:[%s210 + $0x558] sm:$0xf]
                %289 = vst [vmem:[%s211 + $0x98] sm:$0xf] %v288
                %v290 = vld [vmem:[%s210 + $0x57c] sm:$0xf]
                %291 = vst [vmem:[%s211 + $0x9c] sm:$0xf] %v290
                %v292 = vld [vmem:[%s210 + $0x5a0] sm:$0xf]
                %293 = vst [vmem:[%s211 + $0xa0] sm:$0xf] %v292
                %v294 = vld [vmem:[%s210 + $0x5c4] sm:$0xf]
                %295 = vst [vmem:[%s211 + $0xa4] sm:$0xf] %v294
                %v296 = vld [vmem:[%s210 + $0x5e8] sm:$0xf]
                %297 = vst [vmem:[%s211 + $0xa8] sm:$0xf] %v296
                %v298 = vld [vmem:[%s210 + $0x60c] sm:$0xf]
                %299 = vst [vmem:[%s211 + $0xac] sm:$0xf] %v298
                %v300 = vld [vmem:[%s210 + $0x630] sm:$0xf]
                %301 = vst [vmem:[%s211 + $0xb0] sm:$0xf] %v300
                %v302 = vld [vmem:[%s210 + $0x654] sm:$0xf]
                %303 = vst [vmem:[%s211 + $0xb4] sm:$0xf] %v302
                %v304 = vld [vmem:[%s210 + $0x678] sm:$0xf]
                %305 = vst [vmem:[%s211 + $0xb8] sm:$0xf] %v304
                %v306 = vld [vmem:[%s210 + $0x69c] sm:$0xf]
                %307 = vst [vmem:[%s211 + $0xbc] sm:$0xf] %v306
                %v308 = vld [vmem:[%s210 + $0x6c0] sm:$0xf]
                %309 = vst [vmem:[%s211 + $0xc0] sm:$0xf] %v308
                %v310 = vld [vmem:[%s210 + $0x6e4] sm:$0xf]
                %311 = vst [vmem:[%s211 + $0xc4] sm:$0xf] %v310
                %v312 = vld [vmem:[%s210 + $0x708] sm:$0xf]
                %313 = vst [vmem:[%s211 + $0xc8] sm:$0xf] %v312
                %v314 = vld [vmem:[%s210 + $0x72c] sm:$0xf]
                %315 = vst [vmem:[%s211 + $0xcc] sm:$0xf] %v314
                %v316 = vld [vmem:[%s210 + $0x750] sm:$0xf]
                %317 = vst [vmem:[%s211 + $0xd0] sm:$0xf] %v316
                %v318 = vld [vmem:[%s210 + $0x774] sm:$0xf]
                %319 = vst [vmem:[%s211 + $0xd4] sm:$0xf] %v318
                %v320 = vld [vmem:[%s210 + $0x798] sm:$0xf]
                %321 = vst [vmem:[%s211 + $0xd8] sm:$0xf] %v320
                %v322 = vld [vmem:[%s210 + $0x7bc] sm:$0xf]
                %323 = vst [vmem:[%s211 + $0xdc] sm:$0xf] %v322
                %v324 = vld [vmem:[%s210 + $0x7e0] sm:$0xf]
                %325 = vst [vmem:[%s211 + $0xe0] sm:$0xf] %v324
                %v326 = vld [vmem:[%s210 + $0x804] sm:$0xf]
                %327 = vst [vmem:[%s211 + $0xe4] sm:$0xf] %v326
                %v328 = vld [vmem:[%s210 + $0x828] sm:$0xf]
                %329 = vst [vmem:[%s211 + $0xe8] sm:$0xf] %v328
                %v330 = vld [vmem:[%s210 + $0x84c] sm:$0xf]
                %331 = vst [vmem:[%s211 + $0xec] sm:$0xf] %v330
                %v332 = vld [vmem:[%s210 + $0x870] sm:$0xf]
                %333 = vst [vmem:[%s211 + $0xf0] sm:$0xf] %v332
                %v334 = vld [vmem:[%s210 + $0x894] sm:$0xf]
                %335 = vst [vmem:[%s211 + $0xf4] sm:$0xf] %v334
                %v336 = vld [vmem:[%s210 + $0x8b8] sm:$0xf]
                %337 = vst [vmem:[%s211 + $0xf8] sm:$0xf] %v336
                %v338 = vld [vmem:[%s210 + $0x8dc] sm:$0xf]
                %339 = vst [vmem:[%s211 + $0xfc] sm:$0xf] %v338
              $region37: #{bottleneck_forward.8} parent=31 // loop_footer
                %s209 = sadd.s32 1, %s205
              $region38: #{bottleneck_forward.8} parent=31 // loop_footer_branch
                %204 = sbr.rel target = $region34
              $region39: #{bottleneck_forward.8} parent=31 // loop_exit
                _
            $region32: #{bottleneck_forward.8} parent=23 // pred_fallthru
              _
          $region24: #{bottleneck_forward.8} parent=19 // pred_fallthru
            _
          %487 = vnop
        $region20: #{bottleneck_forward.8} parent=15 // pred_fallthru
          _
        // Predicated region
        $region58: #{bottleneck_forward.8} parent=15 // pred_check
          %p488 = pneg %p80
        $region59: #{bottleneck_forward.8} parent=15 // pred_check_branch
          %490 = sbr.rel (%p488) target = $region61
        $region60: #{bottleneck_forward.8} parent=15 // pred_region
          %s491 = smul.u32 16, %s20
          %p492 = scmp.lt.s32.totalorder %s491, 143
          %s493 = scalar_select %p492, %s491, 143
          %p494 = scmp.lt.s32.totalorder %s18, 0
          %s495 = scalar_select %p494, %s18, 0
          %s496 = sadd.s32 %s495, %s493
          %s497 = smul.addr %s496, 4
          %s498 = scalar_lea.vmem %s1, %s497
          %s499 = smul.u32 16, %s20
        $region61: #{bottleneck_forward.8} parent=15 // pred_fallthru
          _
      $region16: #{bottleneck_forward.8} parent=5 // pred_fallthru
        _
      %p500 = scmp.le.s32.totalorder 1, %s11
      %p501 = scmp.lt.s32.totalorder %s11, 10
      %p502 = pnand %p500, %p501
      %p503 = pneg %p502
      // Predicated region
      $region62: #{bottleneck_forward.8} parent=5 // pred_check
        _
      $region63: #{bottleneck_forward.8} parent=5 // pred_check_branch
        %505 = sbr.rel (%p502) target = $region65
      $region64: #{bottleneck_forward.8} parent=5 // pred_region
        %s506 = ssub.s32 %s11, 1
        %s507 = sand.u32 %s45, 1
        %s508 = sand.u32 %s45, 1
        %s509 = smul.addr %s508, 256
        %s510 = scalar_lea.vmem [#allocation3], %s509
        // Predicated region
        $region66: #{bottleneck_forward.8} parent=64 // pred_check
          %p511 = pneg %p58
        $region67: #{bottleneck_forward.8} parent=64 // pred_check_branch
          %513 = sbr.rel (%p511) target = $region69
        $region68: #{bottleneck_forward.8} parent=64 // pred_region
          _
        $region69: #{bottleneck_forward.8} parent=64 // pred_fallthru
          _
        %s514 = sand.u32 %s45, 1
        %s515 = sand.u32 %s45, 1
        %s516 = smul.addr %s515, 256
        %s517 = scalar_lea.vmem [#allocation3], %s516
        %p518 = pneg %p58
        %p519 = pneg %p55
        %s520 = smul.u32 16, %s23
        %p521 = scmp.lt.s32.totalorder %s520, 143
        %s522 = scalar_select %p521, %s520, 143
        %p523 = scmp.lt.s32.totalorder %s21, 0
        %s524 = scalar_select %p523, %s21, 0
        %s525 = sadd.s32 %s524, %s522
        %s526 = smul.addr %s525, 4
        %s527 = scalar_lea.vmem %s1, %s526
        %p528 = pneg %p86
        %p529 = pneg %p83
        %p530 = pneg %p114
        %p531 = pneg %p111
        %s532 = smul.u32 64, %s22
        %p533 = scmp.lt.s32.totalorder %s532, 63
        %s534 = scalar_select %p533, %s532, 63
        %p535 = scmp.lt.s32.totalorder %s21, 0
        %s536 = scalar_select %p535, %s21, 0
        %s537 = sadd.s32 %s536, %s534
        %s538 = smul.addr %s537, 8
        %s539 = scalar_lea.vmem %s2, %s538
        %p540 = pneg %p140
        %p541 = pneg %p137
        %p542 = scmp.lt.s32.totalorder %s21, 0
        %s543 = scalar_select %p542, %s21, 0
        %s544 = scalar_lea.vmem %s3, %s543
        %p545 = pneg %p166
        %p546 = pneg %p163
        %p547 = scmp.lt.s32.totalorder %s21, 0
        %s548 = scalar_select %p547, %s21, 0
        %s549 = scalar_lea.vmem %s4, %s548
        %s550 = smul.u32 64, %s22
        %s551 = smul.u32 16, %s23
        %p552 = scmp.lt.s32.totalorder %s551, 143
        %s553 = scalar_select %p552, %s551, 143
        %p554 = scmp.lt.s32.totalorder %s21, 0
        %s555 = scalar_select %p554, %s21, 0
        %s556 = sadd.s32 %s555, %s553
        %s557 = smul.addr %s556, 4
        %s558 = scalar_lea.vmem %s1, %s557
        %s559 = smul.u32 16, %s23
        %s560 = smul.u32 64, %s22
        %p561 = scmp.lt.s32.totalorder %s560, 63
        %s562 = scalar_select %p561, %s560, 63
        %p563 = scmp.lt.s32.totalorder %s21, 0
        %s564 = scalar_select %p563, %s21, 0
        %s565 = sadd.s32 %s564, %s562
        %s566 = smul.addr %s565, 8
        %s567 = scalar_lea.vmem %s2, %s566
        %s568 = smul.u32 64, %s22
        %p569 = scmp.lt.s32.totalorder %s21, 0
        %s570 = scalar_select %p569, %s21, 0
        %s571 = scalar_lea.vmem %s3, %s570
        %p572 = scmp.lt.s32.totalorder %s21, 0
        %s573 = scalar_select %p572, %s21, 0
        %s574 = scalar_lea.vmem %s4, %s573
        %p576 = scmp.eq.s32.totalorder %s23, 0
        // Predicated region
        $region70: #{bottleneck_forward.8} parent=64 // pred_check
          %p577 = pneg %p576
        $region71: #{bottleneck_forward.8} parent=64 // pred_check_branch
          %579 = sbr.rel (%p577) target = $region73
        $region72: #{bottleneck_forward.8} parent=64 // pred_region
          %580 = vst [vmem:[#allocation2] sm:$0xff] 0.0
          %581 = vst [vmem:[#allocation2 + $0x8] sm:$0xff] 0.0
          %582 = vst [vmem:[#allocation2 + $0x10] sm:$0xff] 0.0
          %583 = vst [vmem:[#allocation2 + $0x18] sm:$0xff] 0.0
          %584 = vst [vmem:[#allocation2 + $0x20] sm:$0xff] 0.0
          %585 = vst [vmem:[#allocation2 + $0x28] sm:$0xff] 0.0
          %586 = vst [vmem:[#allocation2 + $0x30] sm:$0xff] 0.0
          %587 = vst [vmem:[#allocation2 + $0x38] sm:$0xff] 0.0
          %588 = vst [vmem:[#allocation2 + $0x40] sm:$0xff] 0.0
          %589 = vst [vmem:[#allocation2 + $0x48] sm:$0xff] 0.0
          %590 = vst [vmem:[#allocation2 + $0x50] sm:$0xff] 0.0
          %591 = vst [vmem:[#allocation2 + $0x58] sm:$0xff] 0.0
          %592 = vst [vmem:[#allocation2 + $0x60] sm:$0xff] 0.0
          %593 = vst [vmem:[#allocation2 + $0x68] sm:$0xff] 0.0
          %594 = vst [vmem:[#allocation2 + $0x70] sm:$0xff] 0.0
          %595 = vst [vmem:[#allocation2 + $0x78] sm:$0xff] 0.0
          %596 = vst [vmem:[#allocation2 + $0x80] sm:$0xff] 0.0
          %597 = vst [vmem:[#allocation2 + $0x88] sm:$0xff] 0.0
          %598 = vst [vmem:[#allocation2 + $0x90] sm:$0xff] 0.0
          %599 = vst [vmem:[#allocation2 + $0x98] sm:$0xff] 0.0
          %600 = vst [vmem:[#allocation2 + $0xa0] sm:$0xff] 0.0
          %601 = vst [vmem:[#allocation2 + $0xa8] sm:$0xff] 0.0
          %602 = vst [vmem:[#allocation2 + $0xb0] sm:$0xff] 0.0
          %603 = vst [vmem:[#allocation2 + $0xb8] sm:$0xff] 0.0
          %604 = vst [vmem:[#allocation2 + $0xc0] sm:$0xff] 0.0
          %605 = vst [vmem:[#allocation2 + $0xc8] sm:$0xff] 0.0
          %606 = vst [vmem:[#allocation2 + $0xd0] sm:$0xff] 0.0
          %607 = vst [vmem:[#allocation2 + $0xd8] sm:$0xff] 0.0
          %608 = vst [vmem:[#allocation2 + $0xe0] sm:$0xff] 0.0
          %609 = vst [vmem:[#allocation2 + $0xe8] sm:$0xff] 0.0
          %610 = vst [vmem:[#allocation2 + $0xf0] sm:$0xff] 0.0
          %611 = vst [vmem:[#allocation2 + $0xf8] sm:$0xff] 0.0
          %612 = vst [vmem:[#allocation2 + $0x100] sm:$0xff] 0.0
          %613 = vst [vmem:[#allocation2 + $0x108] sm:$0xff] 0.0
          %614 = vst [vmem:[#allocation2 + $0x110] sm:$0xff] 0.0
          %615 = vst [vmem:[#allocation2 + $0x118] sm:$0xff] 0.0
          %616 = vst [vmem:[#allocation2 + $0x120] sm:$0xff] 0.0
          %617 = vst [vmem:[#allocation2 + $0x128] sm:$0xff] 0.0
          %618 = vst [vmem:[#allocation2 + $0x130] sm:$0xff] 0.0
          %619 = vst [vmem:[#allocation2 + $0x138] sm:$0xff] 0.0
          %620 = vst [vmem:[#allocation2 + $0x140] sm:$0xff] 0.0
          %621 = vst [vmem:[#allocation2 + $0x148] sm:$0xff] 0.0
          %622 = vst [vmem:[#allocation2 + $0x150] sm:$0xff] 0.0
          %623 = vst [vmem:[#allocation2 + $0x158] sm:$0xff] 0.0
          %624 = vst [vmem:[#allocation2 + $0x160] sm:$0xff] 0.0
          %625 = vst [vmem:[#allocation2 + $0x168] sm:$0xff] 0.0
          %626 = vst [vmem:[#allocation2 + $0x170] sm:$0xff] 0.0
          %627 = vst [vmem:[#allocation2 + $0x178] sm:$0xff] 0.0
          %628 = vst [vmem:[#allocation2 + $0x180] sm:$0xff] 0.0
          %629 = vst [vmem:[#allocation2 + $0x188] sm:$0xff] 0.0
          %630 = vst [vmem:[#allocation2 + $0x190] sm:$0xff] 0.0
          %631 = vst [vmem:[#allocation2 + $0x198] sm:$0xff] 0.0
          %632 = vst [vmem:[#allocation2 + $0x1a0] sm:$0xff] 0.0
          %633 = vst [vmem:[#allocation2 + $0x1a8] sm:$0xff] 0.0
          %634 = vst [vmem:[#allocation2 + $0x1b0] sm:$0xff] 0.0
          %635 = vst [vmem:[#allocation2 + $0x1b8] sm:$0xff] 0.0
          %636 = vst [vmem:[#allocation2 + $0x1c0] sm:$0xff] 0.0
          %637 = vst [vmem:[#allocation2 + $0x1c8] sm:$0xff] 0.0
          %638 = vst [vmem:[#allocation2 + $0x1d0] sm:$0xff] 0.0
          %639 = vst [vmem:[#allocation2 + $0x1d8] sm:$0xff] 0.0
          %640 = vst [vmem:[#allocation2 + $0x1e0] sm:$0xff] 0.0
          %641 = vst [vmem:[#allocation2 + $0x1e8] sm:$0xff] 0.0
          %642 = vst [vmem:[#allocation2 + $0x1f0] sm:$0xff] 0.0
          %643 = vst [vmem:[#allocation2 + $0x1f8] sm:$0xff] 0.0
        $region73: #{bottleneck_forward.8} parent=64 // pred_fallthru
          _
        %p644 = scmp.eq.s32.totalorder %s22, 0
        %p645 = pnand %p644, %p576
        %p646 = pneg %p645
        // Predicated region
        $region74: #{bottleneck_forward.8} parent=64 // pred_check
          _
        $region75: #{bottleneck_forward.8} parent=64 // pred_check_branch
          %648 = sbr.rel (%p645) target = $region77
        $region76: #{bottleneck_forward.8} parent=64 // pred_region
          %649 = vst [vmem:[%s571] sm:$0x1] 0.0
          %650 = vst [vmem:[%s574] sm:$0x1] 0.0
        $region77: #{bottleneck_forward.8} parent=64 // pred_fallthru
          _
        %v651 = vld [vmem:[#allocation2] sm:$0xff]
        %v652 = vld [vmem:[#allocation2 + $0x8] sm:$0xff]
        %v653 = vld [vmem:[#allocation2 + $0x10] sm:$0xff]
        %v654 = vld [vmem:[#allocation2 + $0x18] sm:$0xff]
        %v655 = vld [vmem:[#allocation2 + $0x20] sm:$0xff]
        %v656 = vld [vmem:[#allocation2 + $0x28] sm:$0xff]
        %v657 = vld [vmem:[#allocation2 + $0x30] sm:$0xff]
        %v658 = vld [vmem:[#allocation2 + $0x38] sm:$0xff]
        %v659 = vld [vmem:[#allocation2 + $0x40] sm:$0xff]
        %v660 = vld [vmem:[#allocation2 + $0x48] sm:$0xff]
        %v661 = vld [vmem:[#allocation2 + $0x50] sm:$0xff]
        %v662 = vld [vmem:[#allocation2 + $0x58] sm:$0xff]
        %v663 = vld [vmem:[#allocation2 + $0x60] sm:$0xff]
        %v664 = vld [vmem:[#allocation2 + $0x68] sm:$0xff]
        %v665 = vld [vmem:[#allocation2 + $0x70] sm:$0xff]
        %v666 = vld [vmem:[#allocation2 + $0x78] sm:$0xff]
        %v667 = vld [vmem:[#allocation2 + $0x80] sm:$0xff]
        %v668 = vld [vmem:[#allocation2 + $0x88] sm:$0xff]
        %v669 = vld [vmem:[#allocation2 + $0x90] sm:$0xff]
        %v670 = vld [vmem:[#allocation2 + $0x98] sm:$0xff]
        %v671 = vld [vmem:[#allocation2 + $0xa0] sm:$0xff]
        %v672 = vld [vmem:[#allocation2 + $0xa8] sm:$0xff]
        %v673 = vld [vmem:[#allocation2 + $0xb0] sm:$0xff]
        %v674 = vld [vmem:[#allocation2 + $0xb8] sm:$0xff]
        %v675 = vld [vmem:[#allocation2 + $0xc0] sm:$0xff]
        %v676 = vld [vmem:[#allocation2 + $0xc8] sm:$0xff]
        %v677 = vld [vmem:[#allocation2 + $0xd0] sm:$0xff]
        %v678 = vld [vmem:[#allocation2 + $0xd8] sm:$0xff]
        %v679 = vld [vmem:[#allocation2 + $0xe0] sm:$0xff]
        %v680 = vld [vmem:[#allocation2 + $0xe8] sm:$0xff]
        %v681 = vld [vmem:[#allocation2 + $0xf0] sm:$0xff]
        %v682 = vld [vmem:[#allocation2 + $0xf8] sm:$0xff]
        %v683 = vld [vmem:[#allocation2 + $0x100] sm:$0xff]
        %v684 = vld [vmem:[#allocation2 + $0x108] sm:$0xff]
        %v685 = vld [vmem:[#allocation2 + $0x110] sm:$0xff]
        %v686 = vld [vmem:[#allocation2 + $0x118] sm:$0xff]
        %v687 = vld [vmem:[#allocation2 + $0x120] sm:$0xff]
        %v688 = vld [vmem:[#allocation2 + $0x128] sm:$0xff]
        %v689 = vld [vmem:[#allocation2 + $0x130] sm:$0xff]
        %v690 = vld [vmem:[#allocation2 + $0x138] sm:$0xff]
        %v691 = vld [vmem:[#allocation2 + $0x140] sm:$0xff]
        %v692 = vld [vmem:[#allocation2 + $0x148] sm:$0xff]
        %v693 = vld [vmem:[#allocation2 + $0x150] sm:$0xff]
        %v694 = vld [vmem:[#allocation2 + $0x158] sm:$0xff]
        %v695 = vld [vmem:[#allocation2 + $0x160] sm:$0xff]
        %v696 = vld [vmem:[#allocation2 + $0x168] sm:$0xff]
        %v697 = vld [vmem:[#allocation2 + $0x170] sm:$0xff]
        %v698 = vld [vmem:[#allocation2 + $0x178] sm:$0xff]
        %v699 = vld [vmem:[#allocation2 + $0x180] sm:$0xff]
        %v700 = vld [vmem:[#allocation2 + $0x188] sm:$0xff]
        %v701 = vld [vmem:[#allocation2 + $0x190] sm:$0xff]
        %v702 = vld [vmem:[#allocation2 + $0x198] sm:$0xff]
        %v703 = vld [vmem:[#allocation2 + $0x1a0] sm:$0xff]
        %v704 = vld [vmem:[#allocation2 + $0x1a8] sm:$0xff]
        %v705 = vld [vmem:[#allocation2 + $0x1b0] sm:$0xff]
        %v706 = vld [vmem:[#allocation2 + $0x1b8] sm:$0xff]
        %v707 = vld [vmem:[#allocation2 + $0x1c0] sm:$0xff]
        %v708 = vld [vmem:[#allocation2 + $0x1c8] sm:$0xff]
        %v709 = vld [vmem:[#allocation2 + $0x1d0] sm:$0xff]
        %v710 = vld [vmem:[#allocation2 + $0x1d8] sm:$0xff]
        %v711 = vld [vmem:[#allocation2 + $0x1e0] sm:$0xff]
        %v712 = vld [vmem:[#allocation2 + $0x1e8] sm:$0xff]
        %v713 = vld [vmem:[#allocation2 + $0x1f0] sm:$0xff]
        %v714 = vld [vmem:[#allocation2 + $0x1f8] sm:$0xff]
        %v715 = vld [vmem:[%s510] sm:$0xf]
        %v716 = vld [vmem:[%s510 + $0x4] sm:$0xf]
        %v717 = vld [vmem:[%s510 + $0x8] sm:$0xf]
        %v718 = vld [vmem:[%s510 + $0xc] sm:$0xf]
        %v719 = vld [vmem:[%s510 + $0x10] sm:$0xf]
        %v720 = vld [vmem:[%s510 + $0x14] sm:$0xf]
        %v721 = vld [vmem:[%s510 + $0x18] sm:$0xf]
        %v722 = vld [vmem:[%s510 + $0x1c] sm:$0xf]
        %v723 = vld [vmem:[%s510 + $0x20] sm:$0xf]
        %v724 = vld [vmem:[%s510 + $0x24] sm:$0xf]
        %v725 = vld [vmem:[%s510 + $0x28] sm:$0xf]
        %v726 = vld [vmem:[%s510 + $0x2c] sm:$0xf]
        %v727 = vld [vmem:[%s510 + $0x30] sm:$0xf]
        %v728 = vld [vmem:[%s510 + $0x34] sm:$0xf]
        %v729 = vld [vmem:[%s510 + $0x38] sm:$0xf]
        %v730 = vld [vmem:[%s510 + $0x3c] sm:$0xf]
        %v731 = vld [vmem:[%s510 + $0x40] sm:$0xf]
        %v732 = vld [vmem:[%s510 + $0x44] sm:$0xf]
        %v733 = vld [vmem:[%s510 + $0x48] sm:$0xf]
        %v734 = vld [vmem:[%s510 + $0x4c] sm:$0xf]
        %v735 = vld [vmem:[%s510 + $0x50] sm:$0xf]
        %v736 = vld [vmem:[%s510 + $0x54] sm:$0xf]
        %v737 = vld [vmem:[%s510 + $0x58] sm:$0xf]
        %v738 = vld [vmem:[%s510 + $0x5c] sm:$0xf]
        %v739 = vld [vmem:[%s510 + $0x60] sm:$0xf]
        %v740 = vld [vmem:[%s510 + $0x64] sm:$0xf]
        %v741 = vld [vmem:[%s510 + $0x68] sm:$0xf]
        %v742 = vld [vmem:[%s510 + $0x6c] sm:$0xf]
        %v743 = vld [vmem:[%s510 + $0x70] sm:$0xf]
        %v744 = vld [vmem:[%s510 + $0x74] sm:$0xf]
        %v745 = vld [vmem:[%s510 + $0x78] sm:$0xf]
        %v746 = vld [vmem:[%s510 + $0x7c] sm:$0xf]
        %v747 = vld [vmem:[%s510 + $0x80] sm:$0xf]
        %v748 = vld [vmem:[%s510 + $0x84] sm:$0xf]
        %v749 = vld [vmem:[%s510 + $0x88] sm:$0xf]
        %v750 = vld [vmem:[%s510 + $0x8c] sm:$0xf]
        %v751 = vld [vmem:[%s510 + $0x90] sm:$0xf]
        %v752 = vld [vmem:[%s510 + $0x94] sm:$0xf]
        %v753 = vld [vmem:[%s510 + $0x98] sm:$0xf]
        %v754 = vld [vmem:[%s510 + $0x9c] sm:$0xf]
        %v755 = vld [vmem:[%s510 + $0xa0] sm:$0xf]
        %v756 = vld [vmem:[%s510 + $0xa4] sm:$0xf]
        %v757 = vld [vmem:[%s510 + $0xa8] sm:$0xf]
        %v758 = vld [vmem:[%s510 + $0xac] sm:$0xf]
        %v759 = vld [vmem:[%s510 + $0xb0] sm:$0xf]
        %v760 = vld [vmem:[%s510 + $0xb4] sm:$0xf]
        %v761 = vld [vmem:[%s510 + $0xb8] sm:$0xf]
        %v762 = vld [vmem:[%s510 + $0xbc] sm:$0xf]
        %v763 = vld [vmem:[%s510 + $0xc0] sm:$0xf]
        %v764 = vld [vmem:[%s510 + $0xc4] sm:$0xf]
        %v765 = vld [vmem:[%s510 + $0xc8] sm:$0xf]
        %v766 = vld [vmem:[%s510 + $0xcc] sm:$0xf]
        %v767 = vld [vmem:[%s510 + $0xd0] sm:$0xf]
        %v768 = vld [vmem:[%s510 + $0xd4] sm:$0xf]
        %v769 = vld [vmem:[%s510 + $0xd8] sm:$0xf]
        %v770 = vld [vmem:[%s510 + $0xdc] sm:$0xf]
        %v771 = vld [vmem:[%s510 + $0xe0] sm:$0xf]
        %v772 = vld [vmem:[%s510 + $0xe4] sm:$0xf]
        %v773 = vld [vmem:[%s510 + $0xe8] sm:$0xf]
        %v774 = vld [vmem:[%s510 + $0xec] sm:$0xf]
        %v775 = vld [vmem:[%s510 + $0xf0] sm:$0xf]
        %v776 = vld [vmem:[%s510 + $0xf4] sm:$0xf]
        %v777 = vld [vmem:[%s510 + $0xf8] sm:$0xf]
        %v778 = vld [vmem:[%s510 + $0xfc] sm:$0xf]
        %v779 = vld [vmem:[%s558] sm:$0xf]
        %v780 = vld [vmem:[%s558 + $0x4] sm:$0xf]
        %v781 = vld [vmem:[%s558 + $0x8] sm:$0xf]
        %v782 = vld [vmem:[%s558 + $0xc] sm:$0xf]
        %v783 = vld [vmem:[%s558 + $0x10] sm:$0xf]
        %v784 = vld [vmem:[%s558 + $0x14] sm:$0xf]
        %v785 = vld [vmem:[%s558 + $0x18] sm:$0xf]
        %v786 = vld [vmem:[%s558 + $0x1c] sm:$0xf]
        %v787 = vld [vmem:[%s558 + $0x20] sm:$0xf]
        %v788 = vld [vmem:[%s558 + $0x24] sm:$0xf]
        %v789 = vld [vmem:[%s558 + $0x28] sm:$0xf]
        %v790 = vld [vmem:[%s558 + $0x2c] sm:$0xf]
        %v791 = vld [vmem:[%s558 + $0x30] sm:$0xf]
        %v792 = vld [vmem:[%s558 + $0x34] sm:$0xf]
        %v793 = vld [vmem:[%s558 + $0x38] sm:$0xf]
        %v794 = vld [vmem:[%s558 + $0x3c] sm:$0xf]
        %v859 = vunpack.c.l.b16 %v715
        %v860 = vunpack.c.l.b16 %v716
        %v861 = vunpack.c.l.b16 %v717
        %v862 = vunpack.c.l.b16 %v718
        %v863 = vunpack.c.l.b16 %v719
        %v864 = vunpack.c.l.b16 %v720
        %v865 = vunpack.c.l.b16 %v721
        %v866 = vunpack.c.l.b16 %v722
        %v867 = vunpack.c.l.b16 %v723
        %v868 = vunpack.c.l.b16 %v724
        %v869 = vunpack.c.l.b16 %v725
        %v870 = vunpack.c.l.b16 %v726
        %v871 = vunpack.c.l.b16 %v727
        %v872 = vunpack.c.l.b16 %v728
        %v873 = vunpack.c.l.b16 %v729
        %v874 = vunpack.c.l.b16 %v730
        %v875 = vunpack.c.l.b16 %v731
        %v876 = vunpack.c.l.b16 %v732
        %v877 = vunpack.c.l.b16 %v733
        %v878 = vunpack.c.l.b16 %v734
        %v879 = vunpack.c.l.b16 %v735
        %v880 = vunpack.c.l.b16 %v736
        %v881 = vunpack.c.l.b16 %v737
        %v882 = vunpack.c.l.b16 %v738
        %v883 = vunpack.c.l.b16 %v739
        %v884 = vunpack.c.l.b16 %v740
        %v885 = vunpack.c.l.b16 %v741
        %v886 = vunpack.c.l.b16 %v742
        %v887 = vunpack.c.l.b16 %v743
        %v888 = vunpack.c.l.b16 %v744
        %v889 = vunpack.c.l.b16 %v745
        %v890 = vunpack.c.l.b16 %v746
        %v891 = vunpack.c.l.b16 %v747
        %v892 = vunpack.c.l.b16 %v748
        %v893 = vunpack.c.l.b16 %v749
        %v894 = vunpack.c.l.b16 %v750
        %v895 = vunpack.c.l.b16 %v751
        %v896 = vunpack.c.l.b16 %v752
        %v897 = vunpack.c.l.b16 %v753
        %v898 = vunpack.c.l.b16 %v754
        %v899 = vunpack.c.l.b16 %v755
        %v900 = vunpack.c.l.b16 %v756
        %v901 = vunpack.c.l.b16 %v757
        %v902 = vunpack.c.l.b16 %v758
        %v903 = vunpack.c.l.b16 %v759
        %v904 = vunpack.c.l.b16 %v760
        %v905 = vunpack.c.l.b16 %v761
        %v906 = vunpack.c.l.b16 %v762
        %v907 = vunpack.c.l.b16 %v763
        %v908 = vunpack.c.l.b16 %v764
        %v909 = vunpack.c.l.b16 %v765
        %v910 = vunpack.c.l.b16 %v766
        %v911 = vunpack.c.l.b16 %v767
        %v912 = vunpack.c.l.b16 %v768
        %v913 = vunpack.c.l.b16 %v769
        %v914 = vunpack.c.l.b16 %v770
        %v915 = vunpack.c.l.b16 %v771
        %v916 = vunpack.c.l.b16 %v772
        %v917 = vunpack.c.l.b16 %v773
        %v918 = vunpack.c.l.b16 %v774
        %v919 = vunpack.c.l.b16 %v775
        %v920 = vunpack.c.l.b16 %v776
        %v921 = vunpack.c.l.b16 %v777
        %v922 = vunpack.c.l.b16 %v778
        %v923 = vpack.c.b16 %v860, %v859
        %v924 = vpack.c.b16 %v862, %v861
        %v925 = vpack.c.b16 %v864, %v863
        %v926 = vpack.c.b16 %v866, %v865
        %v927 = vpack.c.b16 %v868, %v867
        %v928 = vpack.c.b16 %v870, %v869
        %v929 = vpack.c.b16 %v872, %v871
        %v930 = vpack.c.b16 %v874, %v873
        %v931 = vpack.c.b16 %v876, %v875
        %v932 = vpack.c.b16 %v878, %v877
        %v933 = vpack.c.b16 %v880, %v879
        %v934 = vpack.c.b16 %v882, %v881
        %v935 = vpack.c.b16 %v884, %v883
        %v936 = vpack.c.b16 %v886, %v885
        %v937 = vpack.c.b16 %v888, %v887
        %v938 = vpack.c.b16 %v890, %v889
        %v939 = vpack.c.b16 %v892, %v891
        %v940 = vpack.c.b16 %v894, %v893
        %v941 = vpack.c.b16 %v896, %v895
        %v942 = vpack.c.b16 %v898, %v897
        %v943 = vpack.c.b16 %v900, %v899
        %v944 = vpack.c.b16 %v902, %v901
        %v945 = vpack.c.b16 %v904, %v903
        %v946 = vpack.c.b16 %v906, %v905
        %v947 = vpack.c.b16 %v908, %v907
        %v948 = vpack.c.b16 %v910, %v909
        %v949 = vpack.c.b16 %v912, %v911
        %v950 = vpack.c.b16 %v914, %v913
        %v951 = vpack.c.b16 %v916, %v915
        %v952 = vpack.c.b16 %v918, %v917
        %v953 = vpack.c.b16 %v920, %v919
        %v954 = vpack.c.b16 %v922, %v921
        %v1003 = vunpack.c.l.b16 %v779
        %v1004 = vunpack.c.l.b16 %v780
        %v1005 = vunpack.c.l.b16 %v781
        %v1006 = vunpack.c.l.b16 %v782
        %v1007 = vunpack.c.l.b16 %v783
        %v1008 = vunpack.c.l.b16 %v784
        %v1009 = vunpack.c.l.b16 %v785
        %v1010 = vunpack.c.l.b16 %v786
        %v1011 = vunpack.c.l.b16 %v787
        %v1012 = vunpack.c.l.b16 %v788
        %v1013 = vunpack.c.l.b16 %v789
        %v1014 = vunpack.c.l.b16 %v790
        %v1015 = vunpack.c.l.b16 %v791
        %v1016 = vunpack.c.l.b16 %v792
        %v1017 = vunpack.c.l.b16 %v793
        %v1018 = vunpack.c.l.b16 %v794
        %v1019 = vpack.c.b16 %v1004, %v1003
        %v1020 = vpack.c.b16 %v1006, %v1005
        %v1021 = vpack.c.b16 %v1008, %v1007
        %v1022 = vpack.c.b16 %v1010, %v1009
        %v1023 = vpack.c.b16 %v1012, %v1011
        %v1024 = vpack.c.b16 %v1014, %v1013
        %v1025 = vpack.c.b16 %v1016, %v1015
        %v1026 = vpack.c.b16 %v1018, %v1017
        %1035 = vmatprep.subr.bf16.mxu0 0
        %1036 = vmatpush1.bf16.msra.mxu0 %v1019
        %1037 = vmatprep.subr.bf16.mxu0 0
        %1038 = vmatpush1.bf16.msra.mxu0 %v1020
        %1039 = vmatprep.subr.bf16.mxu0 0
        %1040 = vmatpush1.bf16.msra.mxu0 %v1021
        %1041 = vmatprep.subr.bf16.mxu0 0
        %1042 = vmatpush1.bf16.msra.mxu0 %v1022
        %1043 = vmatprep.subr.bf16.mxu0 0
        %1044 = vmatpush1.bf16.msra.mxu0 %v1023
        %1045 = vmatprep.subr.bf16.mxu0 0
        %1046 = vmatpush1.bf16.msra.mxu0 %v1024
        %1047 = vmatprep.subr.bf16.mxu0 0
        %1048 = vmatpush1.bf16.msra.mxu0 %v1025
        %1049 = vmatprep.subr.bf16.mxu0 0
        %1050 = vmatpush1.bf16.msra.mxu0 %v1026
        %1051 = vmatprep.subr.bf16.mxu0 0
        %1052 = vmatpush1.bf16.msra.mxu0 0
        %1053 = vmatprep.subr.bf16.mxu0 0
        %1054 = vmatpush1.bf16.msra.mxu0 0
        %1055 = vmatprep.subr.bf16.mxu0 0
        %1056 = vmatpush1.bf16.msra.mxu0 0
        %1057 = vmatprep.subr.bf16.mxu0 0
        %1058 = vmatpush1.bf16.msra.mxu0 0
        %1059 = vmatprep.subr.bf16.mxu0 0
        %1060 = vmatpush1.bf16.msra.mxu0 0
        %1061 = vmatprep.subr.bf16.mxu0 0
        %1062 = vmatpush1.bf16.msra.mxu0 0
        %1063 = vmatprep.subr.bf16.mxu0 0
        %1064 = vmatpush1.bf16.msra.mxu0 0
        %1065 = vmatprep.subr.bf16.mxu0 0
        %1066 = vmatpush1.bf16.msra.mxu0 0
        %1067 = vmatprep.mubr.bf16.mxu0 0
        %1068 = vmatmul.mubr.bf16.gmra.mrb[0].mxu0 %v923
        %v1069 = vpop.f32.mrb[0].mxu0
        %v1070 = vadd.f32 0.0, %v1069
        %v1071 = vpop.f32.mrb[0].mxu0
        %v1072 = vpop.f32.mrb[0].mxu0
        %v1073 = vadd.f32 0.0, %v1072
        %v1074 = vpop.f32.mrb[0].mxu0
        %1075 = vmatprep.mubr.bf16.mxu0 0
        %1076 = vmatmul.mubr.bf16.gmra.mrb[0].mxu0 %v924
        %v1077 = vpop.f32.mrb[0].mxu0
        %v1078 = vadd.f32 0.0, %v1077
        %v1079 = vpop.f32.mrb[0].mxu0
        %v1080 = vpop.f32.mrb[0].mxu0
        %v1081 = vadd.f32 0.0, %v1080
        %v1082 = vpop.f32.mrb[0].mxu0
        %1083 = vmatprep.mubr.bf16.mxu0 0
        %1084 = vmatmul.mubr.bf16.gmra.mrb[0].mxu0 %v925
        %v1085 = vpop.f32.mrb[0].mxu0
        %v1086 = vadd.f32 0.0, %v1085
        %v1087 = vpop.f32.mrb[0].mxu0
        %v1088 = vpop.f32.mrb[0].mxu0
        %v1089 = vadd.f32 0.0, %v1088
        %v1090 = vpop.f32.mrb[0].mxu0
        %1091 = vmatprep.mubr.bf16.mxu0 0
        %1092 = vmatmul.mubr.bf16.gmra.mrb[0].mxu0 %v926
        %v1093 = vpop.f32.mrb[0].mxu0
        %v1094 = vadd.f32 0.0, %v1093
        %v1095 = vpop.f32.mrb[0].mxu0
        %v1096 = vpop.f32.mrb[0].mxu0
        %v1097 = vadd.f32 0.0, %v1096
        %v1098 = vpop.f32.mrb[0].mxu0
        %1099 = vmatprep.mubr.bf16.mxu0 0
        %1100 = vmatmul.mubr.bf16.gmra.mrb[0].mxu0 %v927
        %v1101 = vpop.f32.mrb[0].mxu0
        %v1102 = vadd.f32 0.0, %v1101
        %v1103 = vpop.f32.mrb[0].mxu0
        %v1104 = vpop.f32.mrb[0].mxu0
        %v1105 = vadd.f32 0.0, %v1104
        %v1106 = vpop.f32.mrb[0].mxu0
        %1107 = vmatprep.mubr.bf16.mxu0 0
        %1108 = vmatmul.mubr.bf16.gmra.mrb[0].mxu0 %v928
        %v1109 = vpop.f32.mrb[0].mxu0
        %v1110 = vadd.f32 0.0, %v1109
        %v1111 = vpop.f32.mrb[0].mxu0
        %v1112 = vpop.f32.mrb[0].mxu0
        %v1113 = vadd.f32 0.0, %v1112
        %v1114 = vpop.f32.mrb[0].mxu0
        %1115 = vmatprep.mubr.bf16.mxu0 0
        %1116 = vmatmul.mubr.bf16.gmra.mrb[0].mxu0 %v929
        %v1117 = vpop.f32.mrb[0].mxu0
        %v1118 = vadd.f32 0.0, %v1117
        %v1119 = vpop.f32.mrb[0].mxu0
        %v1120 = vpop.f32.mrb[0].mxu0
        %v1121 = vadd.f32 0.0, %v1120
        %v1122 = vpop.f32.mrb[0].mxu0
        %1123 = vmatprep.mubr.bf16.mxu0 0
        %1124 = vmatmul.mubr.bf16.gmra.mrb[0].mxu0 %v930
        %v1125 = vpop.f32.mrb[0].mxu0
        %v1126 = vadd.f32 0.0, %v1125
        %v1127 = vpop.f32.mrb[0].mxu0
        %v1128 = vpop.f32.mrb[0].mxu0
        %v1129 = vadd.f32 0.0, %v1128
        %v1130 = vpop.f32.mrb[0].mxu0
        %1131 = vmatprep.mubr.bf16.mxu0 0
        %1132 = vmatmul.mubr.bf16.gmra.mrb[0].mxu0 %v931
        %v1133 = vpop.f32.mrb[0].mxu0
        %v1134 = vadd.f32 0.0, %v1133
        %v1135 = vpop.f32.mrb[0].mxu0
        %v1136 = vpop.f32.mrb[0].mxu0
        %v1137 = vadd.f32 0.0, %v1136
        %v1138 = vpop.f32.mrb[0].mxu0
        %1139 = vmatprep.mubr.bf16.mxu0 0
        %1140 = vmatmul.mubr.bf16.gmra.mrb[0].mxu0 %v932
        %v1141 = vpop.f32.mrb[0].mxu0
        %v1142 = vadd.f32 0.0, %v1141
        %v1143 = vpop.f32.mrb[0].mxu0
        %v1144 = vpop.f32.mrb[0].mxu0
        %v1145 = vadd.f32 0.0, %v1144
        %v1146 = vpop.f32.mrb[0].mxu0
        %1147 = vmatprep.mubr.bf16.mxu0 0
        %1148 = vmatmul.mubr.bf16.gmra.mrb[0].mxu0 %v933
        %v1149 = vpop.f32.mrb[0].mxu0
        %v1150 = vadd.f32 0.0, %v1149
        %v1151 = vpop.f32.mrb[0].mxu0
        %v1152 = vpop.f32.mrb[0].mxu0
        %v1153 = vadd.f32 0.0, %v1152
        %v1154 = vpop.f32.mrb[0].mxu0
        %1155 = vmatprep.mubr.bf16.mxu0 0
        %1156 = vmatmul.mubr.bf16.gmra.mrb[0].mxu0 %v934
        %v1157 = vpop.f32.mrb[0].mxu0
        %v1158 = vadd.f32 0.0, %v1157
        %v1159 = vpop.f32.mrb[0].mxu0
        %v1160 = vpop.f32.mrb[0].mxu0
        %v1161 = vadd.f32 0.0, %v1160
        %v1162 = vpop.f32.mrb[0].mxu0
        %1163 = vmatprep.mubr.bf16.mxu0 0
        %1164 = vmatmul.mubr.bf16.gmra.mrb[0].mxu0 %v935
        %v1165 = vpop.f32.mrb[0].mxu0
        %v1166 = vadd.f32 0.0, %v1165
        %v1167 = vpop.f32.mrb[0].mxu0
        %v1168 = vpop.f32.mrb[0].mxu0
        %v1169 = vadd.f32 0.0, %v1168
        %v1170 = vpop.f32.mrb[0].mxu0
        %1171 = vmatprep.mubr.bf16.mxu0 0
        %1172 = vmatmul.mubr.bf16.gmra.mrb[0].mxu0 %v936
        %v1173 = vpop.f32.mrb[0].mxu0
        %v1174 = vadd.f32 0.0, %v1173
        %v1175 = vpop.f32.mrb[0].mxu0
        %v1176 = vpop.f32.mrb[0].mxu0
        %v1177 = vadd.f32 0.0, %v1176
        %v1178 = vpop.f32.mrb[0].mxu0
        %1179 = vmatprep.mubr.bf16.mxu0 0
        %1180 = vmatmul.mubr.bf16.gmra.mrb[0].mxu0 %v937
        %v1181 = vpop.f32.mrb[0].mxu0
        %v1182 = vadd.f32 0.0, %v1181
        %v1183 = vpop.f32.mrb[0].mxu0
        %v1184 = vpop.f32.mrb[0].mxu0
        %v1185 = vadd.f32 0.0, %v1184
        %v1186 = vpop.f32.mrb[0].mxu0
        %1187 = vmatprep.mubr.bf16.mxu0 0
        %1188 = vmatmul.mubr.bf16.gmra.mrb[0].mxu0 %v938
        %v1189 = vpop.f32.mrb[0].mxu0
        %v1190 = vadd.f32 0.0, %v1189
        %v1191 = vpop.f32.mrb[0].mxu0
        %v1192 = vpop.f32.mrb[0].mxu0
        %v1193 = vadd.f32 0.0, %v1192
        %v1194 = vpop.f32.mrb[0].mxu0
        %1195 = vmatprep.mubr.bf16.mxu0 0
        %1196 = vmatmul.mubr.bf16.gmra.mrb[0].mxu0 %v939
        %v1197 = vpop.f32.mrb[0].mxu0
        %v1198 = vadd.f32 0.0, %v1197
        %v1199 = vpop.f32.mrb[0].mxu0
        %v1200 = vpop.f32.mrb[0].mxu0
        %v1201 = vadd.f32 0.0, %v1200
        %v1202 = vpop.f32.mrb[0].mxu0
        %1203 = vmatprep.mubr.bf16.mxu0 0
        %1204 = vmatmul.mubr.bf16.gmra.mrb[0].mxu0 %v940
        %v1205 = vpop.f32.mrb[0].mxu0
        %v1206 = vadd.f32 0.0, %v1205
        %v1207 = vpop.f32.mrb[0].mxu0
        %v1208 = vpop.f32.mrb[0].mxu0
        %v1209 = vadd.f32 0.0, %v1208
        %v1210 = vpop.f32.mrb[0].mxu0
        %1211 = vmatprep.mubr.bf16.mxu0 0
        %1212 = vmatmul.mubr.bf16.gmra.mrb[0].mxu0 %v941
        %v1213 = vpop.f32.mrb[0].mxu0
        %v1214 = vadd.f32 0.0, %v1213
        %v1215 = vpop.f32.mrb[0].mxu0
        %v1216 = vpop.f32.mrb[0].mxu0
        %v1217 = vadd.f32 0.0, %v1216
        %v1218 = vpop.f32.mrb[0].mxu0
        %1219 = vmatprep.mubr.bf16.mxu0 0
        %1220 = vmatmul.mubr.bf16.gmra.mrb[0].mxu0 %v942
        %v1221 = vpop.f32.mrb[0].mxu0
        %v1222 = vadd.f32 0.0, %v1221
        %v1223 = vpop.f32.mrb[0].mxu0
        %v1224 = vpop.f32.mrb[0].mxu0
        %v1225 = vadd.f32 0.0, %v1224
        %v1226 = vpop.f32.mrb[0].mxu0
        %1227 = vmatprep.mubr.bf16.mxu0 0
        %1228 = vmatmul.mubr.bf16.gmra.mrb[0].mxu0 %v943
        %v1229 = vpop.f32.mrb[0].mxu0
        %v1230 = vadd.f32 0.0, %v1229
        %v1231 = vpop.f32.mrb[0].mxu0
        %v1232 = vpop.f32.mrb[0].mxu0
        %v1233 = vadd.f32 0.0, %v1232
        %v1234 = vpop.f32.mrb[0].mxu0
        %1235 = vmatprep.mubr.bf16.mxu0 0
        %1236 = vmatmul.mubr.bf16.gmra.mrb[0].mxu0 %v944
        %v1237 = vpop.f32.mrb[0].mxu0
        %v1238 = vadd.f32 0.0, %v1237
        %v1239 = vpop.f32.mrb[0].mxu0
        %v1240 = vpop.f32.mrb[0].mxu0
        %v1241 = vadd.f32 0.0, %v1240
        %v1242 = vpop.f32.mrb[0].mxu0
        %1243 = vmatprep.mubr.bf16.mxu0 0
        %1244 = vmatmul.mubr.bf16.gmra.mrb[0].mxu0 %v945
        %v1245 = vpop.f32.mrb[0].mxu0
        %v1246 = vadd.f32 0.0, %v1245
        %v1247 = vpop.f32.mrb[0].mxu0
        %v1248 = vpop.f32.mrb[0].mxu0
        %v1249 = vadd.f32 0.0, %v1248
        %v1250 = vpop.f32.mrb[0].mxu0
        %1251 = vmatprep.mubr.bf16.mxu0 0
        %1252 = vmatmul.mubr.bf16.gmra.mrb[0].mxu0 %v946
        %v1253 = vpop.f32.mrb[0].mxu0
        %v1254 = vadd.f32 0.0, %v1253
        %v1255 = vpop.f32.mrb[0].mxu0
        %v1256 = vpop.f32.mrb[0].mxu0
        %v1257 = vadd.f32 0.0, %v1256
        %v1258 = vpop.f32.mrb[0].mxu0
        %1259 = vmatprep.mubr.bf16.mxu0 0
        %1260 = vmatmul.mubr.bf16.gmra.mrb[0].mxu0 %v947
        %v1261 = vpop.f32.mrb[0].mxu0
        %v1262 = vadd.f32 0.0, %v1261
        %v1263 = vpop.f32.mrb[0].mxu0
        %v1264 = vpop.f32.mrb[0].mxu0
        %v1265 = vadd.f32 0.0, %v1264
        %v1266 = vpop.f32.mrb[0].mxu0
        %1267 = vmatprep.mubr.bf16.mxu0 0
        %1268 = vmatmul.mubr.bf16.gmra.mrb[0].mxu0 %v948
        %v1269 = vpop.f32.mrb[0].mxu0
        %v1270 = vadd.f32 0.0, %v1269
        %v1271 = vpop.f32.mrb[0].mxu0
        %v1272 = vpop.f32.mrb[0].mxu0
        %v1273 = vadd.f32 0.0, %v1272
        %v1274 = vpop.f32.mrb[0].mxu0
        %1275 = vmatprep.mubr.bf16.mxu0 0
        %1276 = vmatmul.mubr.bf16.gmra.mrb[0].mxu0 %v949
        %v1277 = vpop.f32.mrb[0].mxu0
        %v1278 = vadd.f32 0.0, %v1277
        %v1279 = vpop.f32.mrb[0].mxu0
        %v1280 = vpop.f32.mrb[0].mxu0
        %v1281 = vadd.f32 0.0, %v1280
        %v1282 = vpop.f32.mrb[0].mxu0
        %1283 = vmatprep.mubr.bf16.mxu0 0
        %1284 = vmatmul.mubr.bf16.gmra.mrb[0].mxu0 %v950
        %v1285 = vpop.f32.mrb[0].mxu0
        %v1286 = vadd.f32 0.0, %v1285
        %v1287 = vpop.f32.mrb[0].mxu0
        %v1288 = vpop.f32.mrb[0].mxu0
        %v1289 = vadd.f32 0.0, %v1288
        %v1290 = vpop.f32.mrb[0].mxu0
        %1291 = vmatprep.mubr.bf16.mxu0 0
        %1292 = vmatmul.mubr.bf16.gmra.mrb[0].mxu0 %v951
        %v1293 = vpop.f32.mrb[0].mxu0
        %v1294 = vadd.f32 0.0, %v1293
        %v1295 = vpop.f32.mrb[0].mxu0
        %v1296 = vpop.f32.mrb[0].mxu0
        %v1297 = vadd.f32 0.0, %v1296
        %v1298 = vpop.f32.mrb[0].mxu0
        %1299 = vmatprep.mubr.bf16.mxu0 0
        %1300 = vmatmul.mubr.bf16.gmra.mrb[0].mxu0 %v952
        %v1301 = vpop.f32.mrb[0].mxu0
        %v1302 = vadd.f32 0.0, %v1301
        %v1303 = vpop.f32.mrb[0].mxu0
        %v1304 = vpop.f32.mrb[0].mxu0
        %v1305 = vadd.f32 0.0, %v1304
        %v1306 = vpop.f32.mrb[0].mxu0
        %1307 = vmatprep.mubr.bf16.mxu0 0
        %1308 = vmatmul.mubr.bf16.gmra.mrb[0].mxu0 %v953
        %v1309 = vpop.f32.mrb[0].mxu0
        %v1310 = vadd.f32 0.0, %v1309
        %v1311 = vpop.f32.mrb[0].mxu0
        %v1312 = vpop.f32.mrb[0].mxu0
        %v1313 = vadd.f32 0.0, %v1312
        %v1314 = vpop.f32.mrb[0].mxu0
        %1315 = vmatprep.mubr.bf16.mxu0 0
        %1316 = vmatmul.mubr.bf16.gmra.mrb[0].mxu0 %v954
        %v1317 = vpop.f32.mrb[0].mxu0
        %v1318 = vadd.f32 0.0, %v1317
        %v1319 = vpop.f32.mrb[0].mxu0
        %v1320 = vpop.f32.mrb[0].mxu0
        %v1321 = vadd.f32 0.0, %v1320
        %v1322 = vpop.f32.mrb[0].mxu0
        %1323 = vdwg.mxu0
        %v1324 = vadd.f32 %v651, %v1070
        %v1325 = vadd.f32 %v652, %v1073
        %v1326 = vadd.f32 %v653, %v1078
        %v1327 = vadd.f32 %v654, %v1081
        %v1328 = vadd.f32 %v655, %v1086
        %v1329 = vadd.f32 %v656, %v1089
        %v1330 = vadd.f32 %v657, %v1094
        %v1331 = vadd.f32 %v658, %v1097
        %v1332 = vadd.f32 %v659, %v1102
        %v1333 = vadd.f32 %v660, %v1105
        %v1334 = vadd.f32 %v661, %v1110
        %v1335 = vadd.f32 %v662, %v1113
        %v1336 = vadd.f32 %v663, %v1118
        %v1337 = vadd.f32 %v664, %v1121
        %v1338 = vadd.f32 %v665, %v1126
        %v1339 = vadd.f32 %v666, %v1129
        %v1340 = vadd.f32 %v667, %v1134
        %v1341 = vadd.f32 %v668, %v1137
        %v1342 = vadd.f32 %v669, %v1142
        %v1343 = vadd.f32 %v670, %v1145
        %v1344 = vadd.f32 %v671, %v1150
        %v1345 = vadd.f32 %v672, %v1153
        %v1346 = vadd.f32 %v673, %v1158
        %v1347 = vadd.f32 %v674, %v1161
        %v1348 = vadd.f32 %v675, %v1166
        %v1349 = vadd.f32 %v676, %v1169
        %v1350 = vadd.f32 %v677, %v1174
        %v1351 = vadd.f32 %v678, %v1177
        %v1352 = vadd.f32 %v679, %v1182
        %v1353 = vadd.f32 %v680, %v1185
        %v1354 = vadd.f32 %v681, %v1190
        %v1355 = vadd.f32 %v682, %v1193
        %v1356 = vadd.f32 %v683, %v1198
        %v1357 = vadd.f32 %v684, %v1201
        %v1358 = vadd.f32 %v685, %v1206
        %v1359 = vadd.f32 %v686, %v1209
        %v1360 = vadd.f32 %v687, %v1214
        %v1361 = vadd.f32 %v688, %v1217
        %v1362 = vadd.f32 %v689, %v1222
        %v1363 = vadd.f32 %v690, %v1225
        %v1364 = vadd.f32 %v691, %v1230
        %v1365 = vadd.f32 %v692, %v1233
        %v1366 = vadd.f32 %v693, %v1238
        %v1367 = vadd.f32 %v694, %v1241
        %v1368 = vadd.f32 %v695, %v1246
        %v1369 = vadd.f32 %v696, %v1249
        %v1370 = vadd.f32 %v697, %v1254
        %v1371 = vadd.f32 %v698, %v1257
        %v1372 = vadd.f32 %v699, %v1262
        %v1373 = vadd.f32 %v700, %v1265
        %v1374 = vadd.f32 %v701, %v1270
        %v1375 = vadd.f32 %v702, %v1273
        %v1376 = vadd.f32 %v703, %v1278
        %v1377 = vadd.f32 %v704, %v1281
        %v1378 = vadd.f32 %v705, %v1286
        %v1379 = vadd.f32 %v706, %v1289
        %v1380 = vadd.f32 %v707, %v1294
        %v1381 = vadd.f32 %v708, %v1297
        %v1382 = vadd.f32 %v709, %v1302
        %v1383 = vadd.f32 %v710, %v1305
        %v1384 = vadd.f32 %v711, %v1310
        %v1385 = vadd.f32 %v712, %v1313
        %v1386 = vadd.f32 %v713, %v1318
        %v1387 = vadd.f32 %v714, %v1321
        %1388 = vst [vmem:[#allocation2] sm:$0xff] %v1324
        %1389 = vst [vmem:[#allocation2 + $0x8] sm:$0xff] %v1325
        %1390 = vst [vmem:[#allocation2 + $0x10] sm:$0xff] %v1326
        %1391 = vst [vmem:[#allocation2 + $0x18] sm:$0xff] %v1327
        %1392 = vst [vmem:[#allocation2 + $0x20] sm:$0xff] %v1328
        %1393 = vst [vmem:[#allocation2 + $0x28] sm:$0xff] %v1329
        %1394 = vst [vmem:[#allocation2 + $0x30] sm:$0xff] %v1330
        %1395 = vst [vmem:[#allocation2 + $0x38] sm:$0xff] %v1331
        %1396 = vst [vmem:[#allocation2 + $0x40] sm:$0xff] %v1332
        %1397 = vst [vmem:[#allocation2 + $0x48] sm:$0xff] %v1333
        %1398 = vst [vmem:[#allocation2 + $0x50] sm:$0xff] %v1334
        %1399 = vst [vmem:[#allocation2 + $0x58] sm:$0xff] %v1335
        %1400 = vst [vmem:[#allocation2 + $0x60] sm:$0xff] %v1336
        %1401 = vst [vmem:[#allocation2 + $0x68] sm:$0xff] %v1337
        %1402 = vst [vmem:[#allocation2 + $0x70] sm:$0xff] %v1338
        %1403 = vst [vmem:[#allocation2 + $0x78] sm:$0xff] %v1339
        %1404 = vst [vmem:[#allocation2 + $0x80] sm:$0xff] %v1340
        %1405 = vst [vmem:[#allocation2 + $0x88] sm:$0xff] %v1341
        %1406 = vst [vmem:[#allocation2 + $0x90] sm:$0xff] %v1342
        %1407 = vst [vmem:[#allocation2 + $0x98] sm:$0xff] %v1343
        %1408 = vst [vmem:[#allocation2 + $0xa0] sm:$0xff] %v1344
        %1409 = vst [vmem:[#allocation2 + $0xa8] sm:$0xff] %v1345
        %1410 = vst [vmem:[#allocation2 + $0xb0] sm:$0xff] %v1346
        %1411 = vst [vmem:[#allocation2 + $0xb8] sm:$0xff] %v1347
        %1412 = vst [vmem:[#allocation2 + $0xc0] sm:$0xff] %v1348
        %1413 = vst [vmem:[#allocation2 + $0xc8] sm:$0xff] %v1349
        %1414 = vst [vmem:[#allocation2 + $0xd0] sm:$0xff] %v1350
        %1415 = vst [vmem:[#allocation2 + $0xd8] sm:$0xff] %v1351
        %1416 = vst [vmem:[#allocation2 + $0xe0] sm:$0xff] %v1352
        %1417 = vst [vmem:[#allocation2 + $0xe8] sm:$0xff] %v1353
        %1418 = vst [vmem:[#allocation2 + $0xf0] sm:$0xff] %v1354
        %1419 = vst [vmem:[#allocation2 + $0xf8] sm:$0xff] %v1355
        %1420 = vst [vmem:[#allocation2 + $0x100] sm:$0xff] %v1356
        %1421 = vst [vmem:[#allocation2 + $0x108] sm:$0xff] %v1357
        %1422 = vst [vmem:[#allocation2 + $0x110] sm:$0xff] %v1358
        %1423 = vst [vmem:[#allocation2 + $0x118] sm:$0xff] %v1359
        %1424 = vst [vmem:[#allocation2 + $0x120] sm:$0xff] %v1360
        %1425 = vst [vmem:[#allocation2 + $0x128] sm:$0xff] %v1361
        %1426 = vst [vmem:[#allocation2 + $0x130] sm:$0xff] %v1362
        %1427 = vst [vmem:[#allocation2 + $0x138] sm:$0xff] %v1363
        %1428 = vst [vmem:[#allocation2 + $0x140] sm:$0xff] %v1364
        %1429 = vst [vmem:[#allocation2 + $0x148] sm:$0xff] %v1365
        %1430 = vst [vmem:[#allocation2 + $0x150] sm:$0xff] %v1366
        %1431 = vst [vmem:[#allocation2 + $0x158] sm:$0xff] %v1367
        %1432 = vst [vmem:[#allocation2 + $0x160] sm:$0xff] %v1368
        %1433 = vst [vmem:[#allocation2 + $0x168] sm:$0xff] %v1369
        %1434 = vst [vmem:[#allocation2 + $0x170] sm:$0xff] %v1370
        %1435 = vst [vmem:[#allocation2 + $0x178] sm:$0xff] %v1371
        %1436 = vst [vmem:[#allocation2 + $0x180] sm:$0xff] %v1372
        %1437 = vst [vmem:[#allocation2 + $0x188] sm:$0xff] %v1373
        %1438 = vst [vmem:[#allocation2 + $0x190] sm:$0xff] %v1374
        %1439 = vst [vmem:[#allocation2 + $0x198] sm:$0xff] %v1375
        %1440 = vst [vmem:[#allocation2 + $0x1a0] sm:$0xff] %v1376
        %1441 = vst [vmem:[#allocation2 + $0x1a8] sm:$0xff] %v1377
        %1442 = vst [vmem:[#allocation2 + $0x1b0] sm:$0xff] %v1378
        %1443 = vst [vmem:[#allocation2 + $0x1b8] sm:$0xff] %v1379
        %1444 = vst [vmem:[#allocation2 + $0x1c0] sm:$0xff] %v1380
        %1445 = vst [vmem:[#allocation2 + $0x1c8] sm:$0xff] %v1381
        %1446 = vst [vmem:[#allocation2 + $0x1d0] sm:$0xff] %v1382
        %1447 = vst [vmem:[#allocation2 + $0x1d8] sm:$0xff] %v1383
        %1448 = vst [vmem:[#allocation2 + $0x1e0] sm:$0xff] %v1384
        %1449 = vst [vmem:[#allocation2 + $0x1e8] sm:$0xff] %v1385
        %1450 = vst [vmem:[#allocation2 + $0x1f0] sm:$0xff] %v1386
        %1451 = vst [vmem:[#allocation2 + $0x1f8] sm:$0xff] %v1387
        %p1452 = scmp.eq.s32.totalorder %s23, 8
        // Predicated region
        $region78: #{bottleneck_forward.8} parent=64 // pred_check
          %p1453 = pneg %p1452
        $region79: #{bottleneck_forward.8} parent=64 // pred_check_branch
          %1455 = sbr.rel (%p1453) target = $region81
        $region80: #{bottleneck_forward.8} parent=64 // pred_region
          %v1456 = vld [vmem:[#allocation2] sm:$0xff]
          %v1457 = vld [vmem:[#allocation2 + $0x8] sm:$0xff]
          %v1458 = vld [vmem:[#allocation2 + $0x10] sm:$0xff]
          %v1459 = vld [vmem:[#allocation2 + $0x18] sm:$0xff]
          %v1460 = vld [vmem:[#allocation2 + $0x20] sm:$0xff]
          %v1461 = vld [vmem:[#allocation2 + $0x28] sm:$0xff]
          %v1462 = vld [vmem:[#allocation2 + $0x30] sm:$0xff]
          %v1463 = vld [vmem:[#allocation2 + $0x38] sm:$0xff]
          %v1464 = vld [vmem:[#allocation2 + $0x40] sm:$0xff]
          %v1465 = vld [vmem:[#allocation2 + $0x48] sm:$0xff]
          %v1466 = vld [vmem:[#allocation2 + $0x50] sm:$0xff]
          %v1467 = vld [vmem:[#allocation2 + $0x58] sm:$0xff]
          %v1468 = vld [vmem:[#allocation2 + $0x60] sm:$0xff]
          %v1469 = vld [vmem:[#allocation2 + $0x68] sm:$0xff]
          %v1470 = vld [vmem:[#allocation2 + $0x70] sm:$0xff]
          %v1471 = vld [vmem:[#allocation2 + $0x78] sm:$0xff]
          %v1472 = vld [vmem:[#allocation2 + $0x80] sm:$0xff]
          %v1473 = vld [vmem:[#allocation2 + $0x88] sm:$0xff]
          %v1474 = vld [vmem:[#allocation2 + $0x90] sm:$0xff]
          %v1475 = vld [vmem:[#allocation2 + $0x98] sm:$0xff]
          %v1476 = vld [vmem:[#allocation2 + $0xa0] sm:$0xff]
          %v1477 = vld [vmem:[#allocation2 + $0xa8] sm:$0xff]
          %v1478 = vld [vmem:[#allocation2 + $0xb0] sm:$0xff]
          %v1479 = vld [vmem:[#allocation2 + $0xb8] sm:$0xff]
          %v1480 = vld [vmem:[#allocation2 + $0xc0] sm:$0xff]
          %v1481 = vld [vmem:[#allocation2 + $0xc8] sm:$0xff]
          %v1482 = vld [vmem:[#allocation2 + $0xd0] sm:$0xff]
          %v1483 = vld [vmem:[#allocation2 + $0xd8] sm:$0xff]
          %v1484 = vld [vmem:[#allocation2 + $0xe0] sm:$0xff]
          %v1485 = vld [vmem:[#allocation2 + $0xe8] sm:$0xff]
          %v1486 = vld [vmem:[#allocation2 + $0xf0] sm:$0xff]
          %v1487 = vld [vmem:[#allocation2 + $0xf8] sm:$0xff]
          %v1488 = vld [vmem:[#allocation2 + $0x100] sm:$0xff]
          %v1489 = vld [vmem:[#allocation2 + $0x108] sm:$0xff]
          %v1490 = vld [vmem:[#allocation2 + $0x110] sm:$0xff]
          %v1491 = vld [vmem:[#allocation2 + $0x118] sm:$0xff]
          %v1492 = vld [vmem:[#allocation2 + $0x120] sm:$0xff]
          %v1493 = vld [vmem:[#allocation2 + $0x128] sm:$0xff]
          %v1494 = vld [vmem:[#allocation2 + $0x130] sm:$0xff]
          %v1495 = vld [vmem:[#allocation2 + $0x138] sm:$0xff]
          %v1496 = vld [vmem:[#allocation2 + $0x140] sm:$0xff]
          %v1497 = vld [vmem:[#allocation2 + $0x148] sm:$0xff]
          %v1498 = vld [vmem:[#allocation2 + $0x150] sm:$0xff]
          %v1499 = vld [vmem:[#allocation2 + $0x158] sm:$0xff]
          %v1500 = vld [vmem:[#allocation2 + $0x160] sm:$0xff]
          %v1501 = vld [vmem:[#allocation2 + $0x168] sm:$0xff]
          %v1502 = vld [vmem:[#allocation2 + $0x170] sm:$0xff]
          %v1503 = vld [vmem:[#allocation2 + $0x178] sm:$0xff]
          %v1504 = vld [vmem:[#allocation2 + $0x180] sm:$0xff]
          %v1505 = vld [vmem:[#allocation2 + $0x188] sm:$0xff]
          %v1506 = vld [vmem:[#allocation2 + $0x190] sm:$0xff]
          %v1507 = vld [vmem:[#allocation2 + $0x198] sm:$0xff]
          %v1508 = vld [vmem:[#allocation2 + $0x1a0] sm:$0xff]
          %v1509 = vld [vmem:[#allocation2 + $0x1a8] sm:$0xff]
          %v1510 = vld [vmem:[#allocation2 + $0x1b0] sm:$0xff]
          %v1511 = vld [vmem:[#allocation2 + $0x1b8] sm:$0xff]
          %v1512 = vld [vmem:[#allocation2 + $0x1c0] sm:$0xff]
          %v1513 = vld [vmem:[#allocation2 + $0x1c8] sm:$0xff]
          %v1514 = vld [vmem:[#allocation2 + $0x1d0] sm:$0xff]
          %v1515 = vld [vmem:[#allocation2 + $0x1d8] sm:$0xff]
          %v1516 = vld [vmem:[#allocation2 + $0x1e0] sm:$0xff]
          %v1517 = vld [vmem:[#allocation2 + $0x1e8] sm:$0xff]
          %v1518 = vld [vmem:[#allocation2 + $0x1f0] sm:$0xff]
          %v1519 = vld [vmem:[#allocation2 + $0x1f8] sm:$0xff]
          %1520 = vst [vmem:[%s567] sm:$0xff] %v1456
          %1521 = vst [vmem:[%s567 + $0x8] sm:$0xff] %v1457
          %1522 = vst [vmem:[%s567 + $0x10] sm:$0xff] %v1458
          %1523 = vst [vmem:[%s567 + $0x18] sm:$0xff] %v1459
          %1524 = vst [vmem:[%s567 + $0x20] sm:$0xff] %v1460
          %1525 = vst [vmem:[%s567 + $0x28] sm:$0xff] %v1461
          %1526 = vst [vmem:[%s567 + $0x30] sm:$0xff] %v1462
          %1527 = vst [vmem:[%s567 + $0x38] sm:$0xff] %v1463
          %1528 = vst [vmem:[%s567 + $0x40] sm:$0xff] %v1464
          %1529 = vst [vmem:[%s567 + $0x48] sm:$0xff] %v1465
          %1530 = vst [vmem:[%s567 + $0x50] sm:$0xff] %v1466
          %1531 = vst [vmem:[%s567 + $0x58] sm:$0xff] %v1467
          %1532 = vst [vmem:[%s567 + $0x60] sm:$0xff] %v1468
          %1533 = vst [vmem:[%s567 + $0x68] sm:$0xff] %v1469
          %1534 = vst [vmem:[%s567 + $0x70] sm:$0xff] %v1470
          %1535 = vst [vmem:[%s567 + $0x78] sm:$0xff] %v1471
          %1536 = vst [vmem:[%s567 + $0x80] sm:$0xff] %v1472
          %1537 = vst [vmem:[%s567 + $0x88] sm:$0xff] %v1473
          %1538 = vst [vmem:[%s567 + $0x90] sm:$0xff] %v1474
          %1539 = vst [vmem:[%s567 + $0x98] sm:$0xff] %v1475
          %1540 = vst [vmem:[%s567 + $0xa0] sm:$0xff] %v1476
          %1541 = vst [vmem:[%s567 + $0xa8] sm:$0xff] %v1477
          %1542 = vst [vmem:[%s567 + $0xb0] sm:$0xff] %v1478
          %1543 = vst [vmem:[%s567 + $0xb8] sm:$0xff] %v1479
          %1544 = vst [vmem:[%s567 + $0xc0] sm:$0xff] %v1480
          %1545 = vst [vmem:[%s567 + $0xc8] sm:$0xff] %v1481
          %1546 = vst [vmem:[%s567 + $0xd0] sm:$0xff] %v1482
          %1547 = vst [vmem:[%s567 + $0xd8] sm:$0xff] %v1483
          %1548 = vst [vmem:[%s567 + $0xe0] sm:$0xff] %v1484
          %1549 = vst [vmem:[%s567 + $0xe8] sm:$0xff] %v1485
          %1550 = vst [vmem:[%s567 + $0xf0] sm:$0xff] %v1486
          %1551 = vst [vmem:[%s567 + $0xf8] sm:$0xff] %v1487
          %1552 = vst [vmem:[%s567 + $0x100] sm:$0xff] %v1488
          %1553 = vst [vmem:[%s567 + $0x108] sm:$0xff] %v1489
          %1554 = vst [vmem:[%s567 + $0x110] sm:$0xff] %v1490
          %1555 = vst [vmem:[%s567 + $0x118] sm:$0xff] %v1491
          %1556 = vst [vmem:[%s567 + $0x120] sm:$0xff] %v1492
          %1557 = vst [vmem:[%s567 + $0x128] sm:$0xff] %v1493
          %1558 = vst [vmem:[%s567 + $0x130] sm:$0xff] %v1494
          %1559 = vst [vmem:[%s567 + $0x138] sm:$0xff] %v1495
          %1560 = vst [vmem:[%s567 + $0x140] sm:$0xff] %v1496
          %1561 = vst [vmem:[%s567 + $0x148] sm:$0xff] %v1497
          %1562 = vst [vmem:[%s567 + $0x150] sm:$0xff] %v1498
          %1563 = vst [vmem:[%s567 + $0x158] sm:$0xff] %v1499
          %1564 = vst [vmem:[%s567 + $0x160] sm:$0xff] %v1500
          %1565 = vst [vmem:[%s567 + $0x168] sm:$0xff] %v1501
          %1566 = vst [vmem:[%s567 + $0x170] sm:$0xff] %v1502
          %1567 = vst [vmem:[%s567 + $0x178] sm:$0xff] %v1503
          %1568 = vst [vmem:[%s567 + $0x180] sm:$0xff] %v1504
          %1569 = vst [vmem:[%s567 + $0x188] sm:$0xff] %v1505
          %1570 = vst [vmem:[%s567 + $0x190] sm:$0xff] %v1506
          %1571 = vst [vmem:[%s567 + $0x198] sm:$0xff] %v1507
          %1572 = vst [vmem:[%s567 + $0x1a0] sm:$0xff] %v1508
          %1573 = vst [vmem:[%s567 + $0x1a8] sm:$0xff] %v1509
          %1574 = vst [vmem:[%s567 + $0x1b0] sm:$0xff] %v1510
          %1575 = vst [vmem:[%s567 + $0x1b8] sm:$0xff] %v1511
          %1576 = vst [vmem:[%s567 + $0x1c0] sm:$0xff] %v1512
          %1577 = vst [vmem:[%s567 + $0x1c8] sm:$0xff] %v1513
          %1578 = vst [vmem:[%s567 + $0x1d0] sm:$0xff] %v1514
          %1579 = vst [vmem:[%s567 + $0x1d8] sm:$0xff] %v1515
          %1580 = vst [vmem:[%s567 + $0x1e0] sm:$0xff] %v1516
          %1581 = vst [vmem:[%s567 + $0x1e8] sm:$0xff] %v1517
          %1582 = vst [vmem:[%s567 + $0x1f0] sm:$0xff] %v1518
          %1583 = vst [vmem:[%s567 + $0x1f8] sm:$0xff] %v1519
          %v1584 = vld [vmem:[%s571] sm:$0x1]
          %v1585 = vadd.f32 %v1456, %v1457
          %v1586 = vadd.f32 %v1585, %v1458
          %v1587 = vadd.f32 %v1586, %v1459
          %v1588 = vadd.f32 %v1587, %v1460
          %v1589 = vadd.f32 %v1588, %v1461
          %v1590 = vadd.f32 %v1589, %v1462
          %v1591 = vadd.f32 %v1590, %v1463
          %v1592 = vadd.f32 %v1591, %v1464
          %v1593 = vadd.f32 %v1592, %v1465
          %v1594 = vadd.f32 %v1593, %v1466
          %v1595 = vadd.f32 %v1594, %v1467
          %v1596 = vadd.f32 %v1595, %v1468
          %v1597 = vadd.f32 %v1596, %v1469
          %v1598 = vadd.f32 %v1597, %v1470
          %v1599 = vadd.f32 %v1598, %v1471
          %v1600 = vadd.f32 %v1599, %v1472
          %v1601 = vadd.f32 %v1600, %v1473
          %v1602 = vadd.f32 %v1601, %v1474
          %v1603 = vadd.f32 %v1602, %v1475
          %v1604 = vadd.f32 %v1603, %v1476
          %v1605 = vadd.f32 %v1604, %v1477
          %v1606 = vadd.f32 %v1605, %v1478
          %v1607 = vadd.f32 %v1606, %v1479
          %v1608 = vadd.f32 %v1607, %v1480
          %v1609 = vadd.f32 %v1608, %v1481
          %v1610 = vadd.f32 %v1609, %v1482
          %v1611 = vadd.f32 %v1610, %v1483
          %v1612 = vadd.f32 %v1611, %v1484
          %v1613 = vadd.f32 %v1612, %v1485
          %v1614 = vadd.f32 %v1613, %v1486
          %v1615 = vadd.f32 %v1614, %v1487
          %v1616 = vadd.f32 %v1615, %v1488
          %v1617 = vadd.f32 %v1616, %v1489
          %v1618 = vadd.f32 %v1617, %v1490
          %v1619 = vadd.f32 %v1618, %v1491
          %v1620 = vadd.f32 %v1619, %v1492
          %v1621 = vadd.f32 %v1620, %v1493
          %v1622 = vadd.f32 %v1621, %v1494
          %v1623 = vadd.f32 %v1622, %v1495
          %v1624 = vadd.f32 %v1623, %v1496
          %v1625 = vadd.f32 %v1624, %v1497
          %v1626 = vadd.f32 %v1625, %v1498
          %v1627 = vadd.f32 %v1626, %v1499
          %v1628 = vadd.f32 %v1627, %v1500
          %v1629 = vadd.f32 %v1628, %v1501
          %v1630 = vadd.f32 %v1629, %v1502
          %v1631 = vadd.f32 %v1630, %v1503
          %v1632 = vadd.f32 %v1631, %v1504
          %v1633 = vadd.f32 %v1632, %v1505
          %v1634 = vadd.f32 %v1633, %v1506
          %v1635 = vadd.f32 %v1634, %v1507
          %v1636 = vadd.f32 %v1635, %v1508
          %v1637 = vadd.f32 %v1636, %v1509
          %v1638 = vadd.f32 %v1637, %v1510
          %v1639 = vadd.f32 %v1638, %v1511
          %v1640 = vadd.f32 %v1639, %v1512
          %v1641 = vadd.f32 %v1640, %v1513
          %v1642 = vadd.f32 %v1641, %v1514
          %v1643 = vadd.f32 %v1642, %v1515
          %v1644 = vadd.f32 %v1643, %v1516
          %v1645 = vadd.f32 %v1644, %v1517
          %v1646 = vadd.f32 %v1645, %v1518
          %v1647 = vadd.f32 %v1646, %v1519
          %v1648 = vrot.slane %v1647, 4
          %v1649 = vadd.f32 %v1647, %v1648
          %v1650 = vrot.slane %v1649, 2
          %v1651 = vadd.f32 %v1649, %v1650
          %v1652 = vrot.slane %v1651, 1
          %v1653 = vadd.f32 %v1651, %v1652
          %v1654 = vadd.f32 %v1584, %v1653
          %1655 = vst [vmem:[%s571] sm:$0x1] %v1654
          %v1656 = vld [vmem:[%s574] sm:$0x1]
          %v1657 = vmul.f32 %v1456, %v1456
          %v1658 = vmul.f32 %v1457, %v1457
          %v1659 = vmul.f32 %v1458, %v1458
          %v1660 = vmul.f32 %v1459, %v1459
          %v1661 = vmul.f32 %v1460, %v1460
          %v1662 = vmul.f32 %v1461, %v1461
          %v1663 = vmul.f32 %v1462, %v1462
          %v1664 = vmul.f32 %v1463, %v1463
          %v1665 = vmul.f32 %v1464, %v1464
          %v1666 = vmul.f32 %v1465, %v1465
          %v1667 = vmul.f32 %v1466, %v1466
          %v1668 = vmul.f32 %v1467, %v1467
          %v1669 = vmul.f32 %v1468, %v1468
          %v1670 = vmul.f32 %v1469, %v1469
          %v1671 = vmul.f32 %v1470, %v1470
          %v1672 = vmul.f32 %v1471, %v1471
          %v1673 = vmul.f32 %v1472, %v1472
          %v1674 = vmul.f32 %v1473, %v1473
          %v1675 = vmul.f32 %v1474, %v1474
          %v1676 = vmul.f32 %v1475, %v1475
          %v1677 = vmul.f32 %v1476, %v1476
          %v1678 = vmul.f32 %v1477, %v1477
          %v1679 = vmul.f32 %v1478, %v1478
          %v1680 = vmul.f32 %v1479, %v1479
          %v1681 = vmul.f32 %v1480, %v1480
          %v1682 = vmul.f32 %v1481, %v1481
          %v1683 = vmul.f32 %v1482, %v1482
          %v1684 = vmul.f32 %v1483, %v1483
          %v1685 = vmul.f32 %v1484, %v1484
          %v1686 = vmul.f32 %v1485, %v1485
          %v1687 = vmul.f32 %v1486, %v1486
          %v1688 = vmul.f32 %v1487, %v1487
          %v1689 = vmul.f32 %v1488, %v1488
          %v1690 = vmul.f32 %v1489, %v1489
          %v1691 = vmul.f32 %v1490, %v1490
          %v1692 = vmul.f32 %v1491, %v1491
          %v1693 = vmul.f32 %v1492, %v1492
          %v1694 = vmul.f32 %v1493, %v1493
          %v1695 = vmul.f32 %v1494, %v1494
          %v1696 = vmul.f32 %v1495, %v1495
          %v1697 = vmul.f32 %v1496, %v1496
          %v1698 = vmul.f32 %v1497, %v1497
          %v1699 = vmul.f32 %v1498, %v1498
          %v1700 = vmul.f32 %v1499, %v1499
          %v1701 = vmul.f32 %v1500, %v1500
          %v1702 = vmul.f32 %v1501, %v1501
          %v1703 = vmul.f32 %v1502, %v1502
          %v1704 = vmul.f32 %v1503, %v1503
          %v1705 = vmul.f32 %v1504, %v1504
          %v1706 = vmul.f32 %v1505, %v1505
          %v1707 = vmul.f32 %v1506, %v1506
          %v1708 = vmul.f32 %v1507, %v1507
          %v1709 = vmul.f32 %v1508, %v1508
          %v1710 = vmul.f32 %v1509, %v1509
          %v1711 = vmul.f32 %v1510, %v1510
          %v1712 = vmul.f32 %v1511, %v1511
          %v1713 = vmul.f32 %v1512, %v1512
          %v1714 = vmul.f32 %v1513, %v1513
          %v1715 = vmul.f32 %v1514, %v1514
          %v1716 = vmul.f32 %v1515, %v1515
          %v1717 = vmul.f32 %v1516, %v1516
          %v1718 = vmul.f32 %v1517, %v1517
          %v1719 = vmul.f32 %v1518, %v1518
          %v1720 = vmul.f32 %v1519, %v1519
          %v1721 = vadd.f32 %v1657, %v1658
          %v1722 = vadd.f32 %v1721, %v1659
          %v1723 = vadd.f32 %v1722, %v1660
          %v1724 = vadd.f32 %v1723, %v1661
          %v1725 = vadd.f32 %v1724, %v1662
          %v1726 = vadd.f32 %v1725, %v1663
          %v1727 = vadd.f32 %v1726, %v1664
          %v1728 = vadd.f32 %v1727, %v1665
          %v1729 = vadd.f32 %v1728, %v1666
          %v1730 = vadd.f32 %v1729, %v1667
          %v1731 = vadd.f32 %v1730, %v1668
          %v1732 = vadd.f32 %v1731, %v1669
          %v1733 = vadd.f32 %v1732, %v1670
          %v1734 = vadd.f32 %v1733, %v1671
          %v1735 = vadd.f32 %v1734, %v1672
          %v1736 = vadd.f32 %v1735, %v1673
          %v1737 = vadd.f32 %v1736, %v1674
          %v1738 = vadd.f32 %v1737, %v1675
          %v1739 = vadd.f32 %v1738, %v1676
          %v1740 = vadd.f32 %v1739, %v1677
          %v1741 = vadd.f32 %v1740, %v1678
          %v1742 = vadd.f32 %v1741, %v1679
          %v1743 = vadd.f32 %v1742, %v1680
          %v1744 = vadd.f32 %v1743, %v1681
          %v1745 = vadd.f32 %v1744, %v1682
          %v1746 = vadd.f32 %v1745, %v1683
          %v1747 = vadd.f32 %v1746, %v1684
          %v1748 = vadd.f32 %v1747, %v1685
          %v1749 = vadd.f32 %v1748, %v1686
          %v1750 = vadd.f32 %v1749, %v1687
          %v1751 = vadd.f32 %v1750, %v1688
          %v1752 = vadd.f32 %v1751, %v1689
          %v1753 = vadd.f32 %v1752, %v1690
          %v1754 = vadd.f32 %v1753, %v1691
          %v1755 = vadd.f32 %v1754, %v1692
          %v1756 = vadd.f32 %v1755, %v1693
          %v1757 = vadd.f32 %v1756, %v1694
          %v1758 = vadd.f32 %v1757, %v1695
          %v1759 = vadd.f32 %v1758, %v1696
          %v1760 = vadd.f32 %v1759, %v1697
          %v1761 = vadd.f32 %v1760, %v1698
          %v1762 = vadd.f32 %v1761, %v1699
          %v1763 = vadd.f32 %v1762, %v1700
          %v1764 = vadd.f32 %v1763, %v1701
          %v1765 = vadd.f32 %v1764, %v1702
          %v1766 = vadd.f32 %v1765, %v1703
          %v1767 = vadd.f32 %v1766, %v1704
          %v1768 = vadd.f32 %v1767, %v1705
          %v1769 = vadd.f32 %v1768, %v1706
          %v1770 = vadd.f32 %v1769, %v1707
          %v1771 = vadd.f32 %v1770, %v1708
          %v1772 = vadd.f32 %v1771, %v1709
          %v1773 = vadd.f32 %v1772, %v1710
          %v1774 = vadd.f32 %v1773, %v1711
          %v1775 = vadd.f32 %v1774, %v1712
          %v1776 = vadd.f32 %v1775, %v1713
          %v1777 = vadd.f32 %v1776, %v1714
          %v1778 = vadd.f32 %v1777, %v1715
          %v1779 = vadd.f32 %v1778, %v1716
          %v1780 = vadd.f32 %v1779, %v1717
          %v1781 = vadd.f32 %v1780, %v1718
          %v1782 = vadd.f32 %v1781, %v1719
          %v1783 = vadd.f32 %v1782, %v1720
          %v1784 = vrot.slane %v1783, 4
          %v1785 = vadd.f32 %v1783, %v1784
          %v1786 = vrot.slane %v1785, 2
          %v1787 = vadd.f32 %v1785, %v1786
          %v1788 = vrot.slane %v1787, 1
          %v1789 = vadd.f32 %v1787, %v1788
          %v1790 = vadd.f32 %v1656, %v1789
          %1791 = vst [vmem:[%s574] sm:$0x1] %v1790
        $region81: #{bottleneck_forward.8} parent=64 // pred_fallthru
          _
        %s1792 = smul.u32 64, %s22
        %p1793 = scmp.lt.s32.totalorder %s1792, 63
        %s1794 = scalar_select %p1793, %s1792, 63
        %p1795 = scmp.lt.s32.totalorder %s21, 0
        %s1796 = scalar_select %p1795, %s21, 0
        %s1797 = sadd.s32 %s1796, %s1794
        %s1798 = smul.addr %s1797, 8
        %s1799 = scalar_lea.vmem %s2, %s1798
        %p1800 = scmp.lt.s32.totalorder %s21, 0
        %s1801 = scalar_select %p1800, %s21, 0
        %s1802 = scalar_lea.vmem %s3, %s1801
        %p1803 = scmp.lt.s32.totalorder %s21, 0
        %s1804 = scalar_select %p1803, %s21, 0
        %s1805 = scalar_lea.vmem %s4, %s1804
        // Predicated region
        $region82: #{bottleneck_forward.8} parent=64 // pred_check
          %p1806 = pneg %p111
        $region83: #{bottleneck_forward.8} parent=64 // pred_check_branch
          %1808 = sbr.rel (%p1806) target = $region85
        $region84: #{bottleneck_forward.8} parent=64 // pred_region
          %s1809 = smul.u32 64, %s22
        $region85: #{bottleneck_forward.8} parent=64 // pred_fallthru
          _
        // Predicated region
        $region86: #{bottleneck_forward.8} parent=64 // pred_check
          %p1810 = pneg %p137
        $region87: #{bottleneck_forward.8} parent=64 // pred_check_branch
          %1812 = sbr.rel (%p1810) target = $region89
        $region88: #{bottleneck_forward.8} parent=64 // pred_region
          _
        $region89: #{bottleneck_forward.8} parent=64 // pred_fallthru
          _
        // Predicated region
        $region90: #{bottleneck_forward.8} parent=64 // pred_check
          %p1813 = pneg %p163
        $region91: #{bottleneck_forward.8} parent=64 // pred_check_branch
          %1815 = sbr.rel (%p1813) target = $region93
        $region92: #{bottleneck_forward.8} parent=64 // pred_region
          _
        $region93: #{bottleneck_forward.8} parent=64 // pred_fallthru
          _
        // Predicated region
        $region94: #{bottleneck_forward.8} parent=64 // pred_check
          %p1816 = pneg %p111
        $region95: #{bottleneck_forward.8} parent=64 // pred_check_branch
          %1818 = sbr.rel (%p1816) target = $region97
        $region96: #{bottleneck_forward.8} parent=64 // pred_region
          %s1819 = smul.u32 64, %s22
          %p1820 = scmp.lt.s32.totalorder %s1819, 63
          %s1821 = scalar_select %p1820, %s1819, 63
          %p1822 = scmp.lt.s32.totalorder %s21, 0
          %s1823 = scalar_select %p1822, %s21, 0
          %s1824 = sadd.s32 %s1823, %s1821
          %s1825 = smul.addr %s1824, 8
          %s1826 = scalar_lea.vmem %s2, %s1825
        $region97: #{bottleneck_forward.8} parent=64 // pred_fallthru
          _
        // Predicated region
        $region98: #{bottleneck_forward.8} parent=64 // pred_check
          %p1827 = pneg %p137
        $region99: #{bottleneck_forward.8} parent=64 // pred_check_branch
          %1829 = sbr.rel (%p1827) target = $region101
        $region100: #{bottleneck_forward.8} parent=64 // pred_region
          %p1830 = scmp.lt.s32.totalorder %s21, 0
          %s1831 = scalar_select %p1830, %s21, 0
          %s1832 = scalar_lea.vmem %s3, %s1831
        $region101: #{bottleneck_forward.8} parent=64 // pred_fallthru
          _
        // Predicated region
        $region102: #{bottleneck_forward.8} parent=64 // pred_check
          %p1833 = pneg %p163
        $region103: #{bottleneck_forward.8} parent=64 // pred_check_branch
          %1835 = sbr.rel (%p1833) target = $region105
        $region104: #{bottleneck_forward.8} parent=64 // pred_region
          %p1836 = scmp.lt.s32.totalorder %s21, 0
          %s1837 = scalar_select %p1836, %s21, 0
          %s1838 = scalar_lea.vmem %s4, %s1837
        $region105: #{bottleneck_forward.8} parent=64 // pred_fallthru
          _
      $region65: #{bottleneck_forward.8} parent=5 // pred_fallthru
        _
      %p1839 = scmp.le.s32.totalorder 2, %s11
      // Predicated region
      $region106: #{bottleneck_forward.8} parent=5 // pred_check
        %p1840 = pneg %p1839
      $region107: #{bottleneck_forward.8} parent=5 // pred_check_branch
        %1842 = sbr.rel (%p1840) target = $region109
      $region108: #{bottleneck_forward.8} parent=5 // pred_region
        %s1843 = ssub.s32 %s11, 2
      $region109: #{bottleneck_forward.8} parent=5 // pred_fallthru
        _
    $region6: #{bottleneck_forward.8} parent=1 // loop_footer
      %s15 = sadd.s32 1, %s11
    $region7: #{bottleneck_forward.8} parent=1 // loop_footer_branch
      %10 = sbr.rel target = $region3
    $region8: #{bottleneck_forward.8} parent=1 // loop_exit
      _

</llo_original>
